<compile_context>
chip_gen: v7x
topology: tpu7x:2x2x1
jax: 0.10.0
libtpu: 0.0.40
codegen_flags: <defaults>
</compile_context>

<pallas_src>
import functools
import math

import jax
import jax.numpy as jnp
from jax.experimental import pallas as pl
from jax.experimental.pallas import tpu as pltpu

SELU_ALPHA = 1.6732632423543772
SELU_SCALE = 1.0507009873554805
BN_EPS = 1e-3
CLAMP_MAX = 1e7


def _rup(x, m=128):
    return ((x + m - 1) // m) * m


def _pad2(a, rows, cols, dtype=jnp.float32):
    a = jnp.asarray(a, dtype)
    return jnp.pad(a, ((0, rows - a.shape[0]), (0, cols - a.shape[1])))


def _pad_row(v, cols, dtype=jnp.float32):
    v = jnp.asarray(v, dtype).reshape(1, -1)
    return jnp.pad(v, ((0, 0), (0, cols - v.shape[1])))


def vae_kernel(
    # data inputs
    xin_ref, eps_ref, b4b_ref,
    # encoder params
    w1_ref, b1_ref, g1_ref, be1_ref,
    w2_ref, b2_ref, g2_ref, be2_ref,
    wm_ref, bm_ref, wlv_ref, blv_ref,
    # decoder params
    w4_ref, b4_ref, g4_ref, be4_ref,
    w5_ref, b5_ref, g5_ref, be5_ref,
    wout_ref, bout_ref,
    # outputs
    prob_nr_ref, means_ref, var_ref,
    *, n_features, latent_dim, sparsity, inv_n,
):
    f32 = jnp.float32
    bf16 = jnp.bfloat16

    def mxu(a, w_ref):
        # bf16 operands, f32 accumulation on the MXU.
        return jnp.dot(a.astype(bf16), w_ref[...], preferred_element_type=f32)

    def bn_selu(x, gamma, beta):
        # Training-mode BatchNorm1d, one-pass stats: E[x], E[x^2].
        mean = jnp.sum(x, axis=0, keepdims=True) * inv_n
        var = jnp.sum(x * x, axis=0, keepdims=True) * inv_n - mean * mean
        var = jnp.maximum(var, 0.0)
        xn = (x - mean) * jax.lax.rsqrt(var + BN_EPS) * gamma + beta
        # SELU
        return SELU_SCALE * jnp.where(xn > 0, xn, SELU_ALPHA * (jnp.exp(xn) - 1.0))

    # ---------------- Encoder ----------------
    # xin = [x | onehot | 0-pad]; log2(x+1) leaves the one-hot block unchanged
    # (log2(0+1)=0, log2(1+1)=1) and the zero padding stays zero.
    xlog = jnp.log2(xin_ref[...] + 1.0)
    enc = mxu(xlog, w1_ref) + b1_ref[...]
    enc = bn_selu(enc, g1_ref[...], be1_ref[...])
    enc = mxu(enc, w2_ref) + b2_ref[...]
    enc = bn_selu(enc, g2_ref[...], be2_ref[...])
    enc = jnp.minimum(enc, CLAMP_MAX)

    means = mxu(enc, wm_ref) + bm_ref[...]       # (N, LATP), real cols [0, latent)
    log_vars = mxu(enc, wlv_ref) + blv_ref[...]  # padded cols are exactly 0
    var = jnp.exp(log_vars) + 1e-4               # padded cols -> ~1.0 (sliced off)
    sampling = means + jnp.sqrt(var) * eps_ref[...]

    lat_cols = jax.lax.broadcasted_iota(jnp.int32, (1, means.shape[1]), 1)
    sampling = jnp.where(lat_cols < latent_dim, sampling, -jnp.inf)
    s = sampling - jnp.max(sampling, axis=1, keepdims=True)
    es = jnp.exp(s)                              # masked cols -> exp(-inf) = 0
    z = es * pl.reciprocal(jnp.sum(es, axis=1, keepdims=True), approx=True)

    means_ref[...] = means                       # lane-dense (N, LATP) slab
    var_ref[...] = var                           # lane-dense (N, LATP) slab

    # ---------------- Decoder ----------------
    # b4b = per-sample batch-id bias (replaces the K=n_batch one-hot matmul).
    dec = mxu(z, w4_ref) + b4_ref[...] + b4b_ref[...]
    dec = bn_selu(dec, g4_ref[...], be4_ref[...])
    dec = mxu(dec, w5_ref) + b5_ref[...]
    dec = bn_selu(dec, g5_ref[...], be5_ref[...])
    dec = jnp.minimum(dec, CLAMP_MAX)

    # Fused out_fc | noise_fc: cols [0, F) = native-freq logits, col F = noise.
    logits = mxu(dec, wout_ref) + bout_ref[...]
    out_cols = jax.lax.broadcasted_iota(jnp.int32, (1, logits.shape[1]), 1)
    is_feat = out_cols < n_features

    # mysoftplus(sparsity): relu(softplus(x) - softplus(-(1 - sparsity) * 10))
    thresh = math.log1p(math.exp(-(1.0 - sparsity) * 10.0))
    sp = jnp.where(logits > 0,
                   logits + jnp.log1p(jnp.exp(-logits)),
                   jnp.log1p(jnp.exp(logits))) - thresh
    sp = jnp.where(sp <= 0.0, 0.0, sp)
    sp = jnp.where(is_feat, sp, 0.0)
    # hnormalization
    prob = sp * pl.reciprocal(jnp.sum(sp, axis=1, keepdims=True) + 1e-5, approx=True)

    # mytanh on the noise column, packed into the same lane-dense slab at col F.
    nr = 0.5 * (1.0 + jnp.tanh(logits))
    prob_nr_ref[...] = jnp.where(is_feat, prob,
                                 jnp.where(out_cols == n_features, nr, 0.0))


def prepare_params(raw, n_features, n_batch, latent_dim):
    """Zero-pads weights to 128-multiples and casts matmul weights to bf16."""
    F, NB, LAT = n_features, n_batch, latent_dim
    L1 = raw["fc1_w"].shape[1]
    L2 = raw["fc2_w"].shape[1]
    F_IN_P, L1P, L2P = _rup(F + NB), _rup(L1), _rup(L2)
    LATP, OUTP = _rup(LAT), _rup(F + 1)
    bf16 = jnp.bfloat16
    p = {
        "w1": _pad2(raw["fc1_w"], F_IN_P, L1P, bf16),
        "b1": _pad_row(raw["fc1_b"], L1P),
        "g1": _pad_row(raw["bn1_g"], L1P),
        "be1": _pad_row(raw["bn1_b"], L1P),
        "w2": _pad2(raw["fc2_w"], L1P, L2P, bf16),
        "b2": _pad_row(raw["fc2_b"], L2P),
        "g2": _pad_row(raw["bn2_g"], L2P),
        "be2": _pad_row(raw["bn2_b"], L2P),
        "wm": _pad2(raw["means_w"], L2P, LATP, bf16),
        "bm": _pad_row(raw["means_b"], LATP),
        "wlv": _pad2(raw["logvars_w"], L2P, LATP, bf16),
        "blv": _pad_row(raw["logvars_b"], LATP),
        "w4": _pad2(raw["fc4_w"][:LAT], LATP, L2P, bf16),
        "fc4_wb": _pad2(raw["fc4_w"][LAT:], NB, L2P),   # f32, gathered per sample
        "b4": _pad_row(raw["fc4_b"], L2P),
        "g4": _pad_row(raw["bn4_g"], L2P),
        "be4": _pad_row(raw["bn4_b"], L2P),
        "w5": _pad2(raw["fc5_w"], L2P, L1P, bf16),
        "b5": _pad_row(raw["fc5_b"], L1P),
        "g5": _pad_row(raw["bn5_g"], L1P),
        "be5": _pad_row(raw["bn5_b"], L1P),
        "wout": _pad2(jnp.concatenate([raw["out_w"], raw["noise_w"]], axis=1),
                      L1P, OUTP, bf16),
        "bout": _pad_row(jnp.concatenate([raw["out_b"].reshape(-1),
                                          raw["noise_b"].reshape(-1)]), OUTP),
    }
    return p


@functools.partial(jax.jit, static_argnames=("sparsity",))
def vae_forward(params, input_matrix, batch_id_onehot, eps, sparsity=0.9):
    """Full VAE forward in one Pallas kernel; returns (nr, prob, means, var, dp)."""
    n, F = input_matrix.shape
    NB = batch_id_onehot.shape[1]
    LAT = eps.shape[1]
    F_IN_P, _ = params["w1"].shape
    LATP = params["wm"].shape[1]
    OUTP = params["wout"].shape[1]

    onehot = batch_id_onehot.astype(jnp.float32)
    # cat([x, onehot], 1), zero-padded to a 128-lane multiple.
    xin = jnp.pad(jnp.concatenate([input_matrix.astype(jnp.float32), onehot], axis=1),
                  ((0, 0), (0, F_IN_P - F - NB)))
    eps_p = jnp.pad(eps.astype(jnp.float32), ((0, 0), (0, LATP - LAT)))
    # Decoder one-hot contribution as a per-sample bias (row gather of fc4's
    # batch-weight block); replaces a wasted K=n_batch MXU contraction.
    b4_batch = jnp.dot(onehot, params["fc4_wb"])

    order = ("w1", "b1", "g1", "be1", "w2", "b2", "g2", "be2",
             "wm", "bm", "wlv", "blv",
             "w4", "b4", "g4", "be4", "w5", "b5", "g5", "be5", "wout", "bout")
    inputs = (xin, eps_p, b4_batch) + tuple(params[k] for k in order)

    out_shapes = (
        jax.ShapeDtypeStruct((n, OUTP), jnp.float32),   # [prob | nr | 0]
        jax.ShapeDtypeStruct((n, LATP), jnp.float32),   # means (padded)
        jax.ShapeDtypeStruct((n, LATP), jnp.float32),   # var   (padded)
    )

    # Scoped-VMEM limit sized to the actual resident footprint (+ headroom).
    io_bytes = sum(math.prod(a.shape) * a.dtype.itemsize for a in inputs)
    io_bytes += sum(math.prod(s.shape) * 4 for s in out_shapes)
    vmem_limit = int(min(max(3 * io_bytes + (8 << 20), 32 << 20), 56 << 20))

    vmem = pl.BlockSpec(memory_space=pltpu.MemorySpace.VMEM)
    prob_nr, means_p, var_p = pl.pallas_call(
        functools.partial(vae_kernel, n_features=F, latent_dim=LAT,
                          sparsity=sparsity, inv_n=1.0 / n),
        out_shape=out_shapes,
        in_specs=[vmem] * len(inputs),
        out_specs=[vmem] * len(out_shapes),
        compiler_params=pltpu.CompilerParams(vmem_limit_bytes=vmem_limit),
    )(*inputs)

    dec_prob = prob_nr[:, :F]
    dec_nr = prob_nr[:, F:F + 1]
    means = means_p[:, :LAT]
    var = var_p[:, :LAT]
    dec_dp = None  # count_model == 'binomial'
    return dec_nr, dec_prob, means, var, dec_dp


def init_params(key, n_features, n_batch, nn_layer1, nn_layer2, latent_dim):
    """Deterministic synthetic parameters; linear weights stored as (in, out)."""
    ks = jax.random.split(key, 8)

    def lin(k, d_in, d_out):
        kw, kb = jax.random.split(k)
        bound = 1.0 / math.sqrt(d_in)
        w = jax.random.uniform(kw, (d_in, d_out), jnp.float32, -bound, bound)
        b = jax.random.uniform(kb, (d_out,), jnp.float32, -bound, bound)
        return w, b

    p = {}
    p["fc1_w"], p["fc1_b"] = lin(ks[0], n_features + n_batch, nn_layer1)
    p["bn1_g"] = jnp.ones((nn_layer1,), jnp.float32)
    p["bn1_b"] = jnp.zeros((nn_layer1,), jnp.float32)
    p["fc2_w"], p["fc2_b"] = lin(ks[1], nn_layer1, nn_layer2)
    p["bn2_g"] = jnp.ones((nn_layer2,), jnp.float32)
    p["bn2_b"] = jnp.zeros((nn_layer2,), jnp.float32)
    p["means_w"], p["means_b"] = lin(ks[2], nn_layer2, latent_dim)
    p["logvars_w"], p["logvars_b"] = lin(ks[3], nn_layer2, latent_dim)
    p["fc4_w"], p["fc4_b"] = lin(ks[4], latent_dim + n_batch, nn_layer2)
    p["bn4_g"] = jnp.ones((nn_layer2,), jnp.float32)
    p["bn4_b"] = jnp.zeros((nn_layer2,), jnp.float32)
    p["fc5_w"], p["fc5_b"] = lin(ks[5], nn_layer2, nn_layer1)
    p["bn5_g"] = jnp.ones((nn_layer1,), jnp.float32)
    p["bn5_b"] = jnp.zeros((nn_layer1,), jnp.float32)
    p["out_w"], p["out_b"] = lin(ks[6], nn_layer1, n_features)
    p["noise_w"], p["noise_b"] = lin(ks[7], nn_layer1, 1)
    return p


if __name__ == "__main__":
    # Module-default layer sizes; 128 batch rows so each matmul feeds a full MXU M tile.
    N, N_FEATURES, N_BATCH = 128, 200, 2
    NN_LAYER1, NN_LAYER2, LATENT_DIM = 150, 100, 15
    SPARSITY = 0.9

    key = jax.random.PRNGKey(0)
    k_x, k_b, k_eps, k_p = jax.random.split(key, 4)

    # UMI-count-like non-negative input matrix (N, n_features).
    input_matrix = jnp.floor(
        jax.random.uniform(k_x, (N, N_FEATURES), jnp.float32) * 10.0
    )
    batch_ids = jax.random.randint(k_b, (N,), 0, N_BATCH)
    batch_id_onehot = jax.nn.one_hot(batch_ids, N_BATCH, dtype=jnp.float32)
    # Reparametrization noise (deterministic stand-in for Normal.rsample()).
    eps = jax.random.normal(k_eps, (N, LATENT_DIM), jnp.float32)

    raw_params = init_params(k_p, N_FEATURES, N_BATCH, NN_LAYER1, NN_LAYER2, LATENT_DIM)
    params = prepare_params(raw_params, N_FEATURES, N_BATCH, LATENT_DIM)

    dec_nr, dec_prob, means, var, dec_dp = vae_forward(
        params, input_matrix, batch_id_onehot, eps, sparsity=SPARSITY
    )
    jax.block_until_ready((dec_nr, dec_prob, means, var))

    assert dec_nr.shape == (N, 1)
    assert dec_prob.shape == (N, N_FEATURES)
    assert means.shape == (N, LATENT_DIM)
    assert var.shape == (N, LATENT_DIM)
    assert dec_dp is None  # binomial count model
    assert bool(jnp.isfinite(dec_nr).all()) and bool(jnp.isfinite(dec_prob).all())
    assert bool(jnp.isfinite(means).all()) and bool(jnp.isfinite(var).all())
    print("KERNEL_OK")
</pallas_src>

<mosaic_0001>
module attributes {stable_mosaic.version = 11 : i64} {
  func.func @vae_kernel(%arg0: memref<128x256xf32, #tpu.memory_space<vmem>>, %arg1: memref<128x128xf32, #tpu.memory_space<vmem>>, %arg2: memref<128x128xf32, #tpu.memory_space<vmem>>, %arg3: memref<256x256xbf16, #tpu.memory_space<vmem>>, %arg4: memref<1x256xf32, #tpu.memory_space<vmem>>, %arg5: memref<1x256xf32, #tpu.memory_space<vmem>>, %arg6: memref<1x256xf32, #tpu.memory_space<vmem>>, %arg7: memref<256x128xbf16, #tpu.memory_space<vmem>>, %arg8: memref<1x128xf32, #tpu.memory_space<vmem>>, %arg9: memref<1x128xf32, #tpu.memory_space<vmem>>, %arg10: memref<1x128xf32, #tpu.memory_space<vmem>>, %arg11: memref<128x128xbf16, #tpu.memory_space<vmem>>, %arg12: memref<1x128xf32, #tpu.memory_space<vmem>>, %arg13: memref<128x128xbf16, #tpu.memory_space<vmem>>, %arg14: memref<1x128xf32, #tpu.memory_space<vmem>>, %arg15: memref<128x128xbf16, #tpu.memory_space<vmem>>, %arg16: memref<1x128xf32, #tpu.memory_space<vmem>>, %arg17: memref<1x128xf32, #tpu.memory_space<vmem>>, %arg18: memref<1x128xf32, #tpu.memory_space<vmem>>, %arg19: memref<128x256xbf16, #tpu.memory_space<vmem>>, %arg20: memref<1x256xf32, #tpu.memory_space<vmem>>, %arg21: memref<1x256xf32, #tpu.memory_space<vmem>>, %arg22: memref<1x256xf32, #tpu.memory_space<vmem>>, %arg23: memref<256x256xbf16, #tpu.memory_space<vmem>>, %arg24: memref<1x256xf32, #tpu.memory_space<vmem>>, %arg25: memref<128x256xf32, #tpu.memory_space<vmem>>, %arg26: memref<128x128xf32, #tpu.memory_space<vmem>>, %arg27: memref<128x128xf32, #tpu.memory_space<vmem>>) attributes {dimension_semantics = [], scalar_prefetch = 0 : i64, scratch_operands = 0 : i64, tpu.core_type = #tpu.core_type<tc>} {
    %c0 = arith.constant 0 : index
    %c0_0 = arith.constant 0 : index
    %0 = vector.load %arg0[%c0, %c0_0] : memref<128x256xf32, #tpu.memory_space<vmem>>, vector<128x256xf32>
    %cst = arith.constant 1.000000e+00 : f32
    %1 = vector.broadcast %cst : f32 to vector<128x256xf32>
    %2 = arith.addf %0, %1 : vector<128x256xf32>
    %3 = math.log %2 : vector<128x256xf32>
    %cst_1 = arith.constant 2.000000e+00 : f32
    %4 = math.log %cst_1 : f32
    %5 = vector.broadcast %4 : f32 to vector<128x256xf32>
    %6 = arith.divf %3, %5 : vector<128x256xf32>
    %7 = arith.truncf %6 : vector<128x256xf32> to vector<128x256xbf16>
    %c0_2 = arith.constant 0 : index
    %c0_3 = arith.constant 0 : index
    %8 = vector.load %arg3[%c0_2, %c0_3] : memref<256x256xbf16, #tpu.memory_space<vmem>>, vector<256x256xbf16>
    %cst_4 = arith.constant dense<0.000000e+00> : vector<128x256xf32>
    %9 = tpu.matmul %7, %8, %cst_4 {dimension_numbers = #tpu.dot_dimension_numbers<[1], [0], [0], [1], [0, 0, 1, 1], [], []>} : vector<128x256xbf16>, vector<256x256xbf16>, vector<128x256xf32> -> vector<128x256xf32>
    %c0_5 = arith.constant 0 : index
    %c0_6 = arith.constant 0 : index
    %10 = vector.load %arg4[%c0_5, %c0_6] : memref<1x256xf32, #tpu.memory_space<vmem>>, vector<1x256xf32>
    %11 = vector.broadcast %10 : vector<1x256xf32> to vector<128x256xf32>
    %12 = arith.addf %9, %11 : vector<128x256xf32>
    %c0_7 = arith.constant 0 : index
    %c0_8 = arith.constant 0 : index
    %13 = vector.load %arg5[%c0_7, %c0_8] : memref<1x256xf32, #tpu.memory_space<vmem>>, vector<1x256xf32>
    %c0_9 = arith.constant 0 : index
    %c0_10 = arith.constant 0 : index
    %14 = vector.load %arg6[%c0_9, %c0_10] : memref<1x256xf32, #tpu.memory_space<vmem>>, vector<1x256xf32>
    %cst_11 = arith.constant dense<0.000000e+00> : vector<256xf32>
    %15 = vector.multi_reduction <add>, %12, %cst_11 [0] : vector<128x256xf32> to vector<256xf32>
    %16 = vector.shape_cast %15 : vector<256xf32> to vector<1x256xf32>
    %cst_12 = arith.constant 7.812500e-03 : f32
    %17 = vector.broadcast %cst_12 : f32 to vector<1x256xf32>
    %18 = arith.mulf %16, %17 : vector<1x256xf32>
    %19 = arith.mulf %12, %12 : vector<128x256xf32>
    %cst_13 = arith.constant dense<0.000000e+00> : vector<256xf32>
    %20 = vector.multi_reduction <add>, %19, %cst_13 [0] : vector<128x256xf32> to vector<256xf32>
    %21 = vector.shape_cast %20 : vector<256xf32> to vector<1x256xf32>
    %cst_14 = arith.constant 7.812500e-03 : f32
    %22 = vector.broadcast %cst_14 : f32 to vector<1x256xf32>
    %23 = arith.mulf %21, %22 : vector<1x256xf32>
    %24 = arith.mulf %18, %18 : vector<1x256xf32>
    %25 = arith.subf %23, %24 : vector<1x256xf32>
    %cst_15 = arith.constant 0.000000e+00 : f32
    %26 = vector.broadcast %cst_15 : f32 to vector<1x256xf32>
    %27 = arith.maximumf %25, %26 : vector<1x256xf32>
    %28 = vector.broadcast %18 : vector<1x256xf32> to vector<128x256xf32>
    %29 = arith.subf %12, %28 : vector<128x256xf32>
    %cst_16 = arith.constant 1.000000e-03 : f32
    %30 = vector.broadcast %cst_16 : f32 to vector<1x256xf32>
    %31 = arith.addf %27, %30 : vector<1x256xf32>
    %32 = math.rsqrt %31 : vector<1x256xf32>
    %33 = vector.broadcast %32 : vector<1x256xf32> to vector<128x256xf32>
    %34 = arith.mulf %29, %33 : vector<128x256xf32>
    %35 = vector.broadcast %13 : vector<1x256xf32> to vector<128x256xf32>
    %36 = arith.mulf %34, %35 : vector<128x256xf32>
    %37 = vector.broadcast %14 : vector<1x256xf32> to vector<128x256xf32>
    %38 = arith.addf %36, %37 : vector<128x256xf32>
    %cst_17 = arith.constant 0.000000e+00 : f32
    %39 = vector.broadcast %cst_17 : f32 to vector<128x256xf32>
    %40 = arith.cmpf ogt, %38, %39 : vector<128x256xf32>
    %41 = math.exp %38 : vector<128x256xf32>
    %cst_18 = arith.constant 1.000000e+00 : f32
    %42 = vector.broadcast %cst_18 : f32 to vector<128x256xf32>
    %43 = arith.subf %41, %42 : vector<128x256xf32>
    %cst_19 = arith.constant 1.67326319 : f32
    %44 = vector.broadcast %cst_19 : f32 to vector<128x256xf32>
    %45 = arith.mulf %44, %43 : vector<128x256xf32>
    %46 = arith.select %40, %38, %45 : vector<128x256xi1>, vector<128x256xf32>
    %cst_20 = arith.constant 1.05070102 : f32
    %47 = vector.broadcast %cst_20 : f32 to vector<128x256xf32>
    %48 = arith.mulf %47, %46 : vector<128x256xf32>
    %49 = arith.truncf %48 : vector<128x256xf32> to vector<128x256xbf16>
    %c0_21 = arith.constant 0 : index
    %c0_22 = arith.constant 0 : index
    %50 = vector.load %arg7[%c0_21, %c0_22] : memref<256x128xbf16, #tpu.memory_space<vmem>>, vector<256x128xbf16>
    %cst_23 = arith.constant dense<0.000000e+00> : vector<128x128xf32>
    %51 = tpu.matmul %49, %50, %cst_23 {dimension_numbers = #tpu.dot_dimension_numbers<[1], [0], [0], [1], [0, 0, 1, 1], [], []>} : vector<128x256xbf16>, vector<256x128xbf16>, vector<128x128xf32> -> vector<128x128xf32>
    %c0_24 = arith.constant 0 : index
    %c0_25 = arith.constant 0 : index
    %52 = vector.load %arg8[%c0_24, %c0_25] : memref<1x128xf32, #tpu.memory_space<vmem>>, vector<1x128xf32>
    %53 = vector.broadcast %52 : vector<1x128xf32> to vector<128x128xf32>
    %54 = arith.addf %51, %53 : vector<128x128xf32>
    %c0_26 = arith.constant 0 : index
    %c0_27 = arith.constant 0 : index
    %55 = vector.load %arg9[%c0_26, %c0_27] : memref<1x128xf32, #tpu.memory_space<vmem>>, vector<1x128xf32>
    %c0_28 = arith.constant 0 : index
    %c0_29 = arith.constant 0 : index
    %56 = vector.load %arg10[%c0_28, %c0_29] : memref<1x128xf32, #tpu.memory_space<vmem>>, vector<1x128xf32>
    %cst_30 = arith.constant dense<0.000000e+00> : vector<128xf32>
    %57 = vector.multi_reduction <add>, %54, %cst_30 [0] : vector<128x128xf32> to vector<128xf32>
    %58 = vector.shape_cast %57 : vector<128xf32> to vector<1x128xf32>
    %cst_31 = arith.constant 7.812500e-03 : f32
    %59 = vector.broadcast %cst_31 : f32 to vector<1x128xf32>
    %60 = arith.mulf %58, %59 : vector<1x128xf32>
    %61 = arith.mulf %54, %54 : vector<128x128xf32>
    %cst_32 = arith.constant dense<0.000000e+00> : vector<128xf32>
    %62 = vector.multi_reduction <add>, %61, %cst_32 [0] : vector<128x128xf32> to vector<128xf32>
    %63 = vector.shape_cast %62 : vector<128xf32> to vector<1x128xf32>
    %cst_33 = arith.constant 7.812500e-03 : f32
    %64 = vector.broadcast %cst_33 : f32 to vector<1x128xf32>
    %65 = arith.mulf %63, %64 : vector<1x128xf32>
    %66 = arith.mulf %60, %60 : vector<1x128xf32>
    %67 = arith.subf %65, %66 : vector<1x128xf32>
    %cst_34 = arith.constant 0.000000e+00 : f32
    %68 = vector.broadcast %cst_34 : f32 to vector<1x128xf32>
    %69 = arith.maximumf %67, %68 : vector<1x128xf32>
    %70 = vector.broadcast %60 : vector<1x128xf32> to vector<128x128xf32>
    %71 = arith.subf %54, %70 : vector<128x128xf32>
    %cst_35 = arith.constant 1.000000e-03 : f32
    %72 = vector.broadcast %cst_35 : f32 to vector<1x128xf32>
    %73 = arith.addf %69, %72 : vector<1x128xf32>
    %74 = math.rsqrt %73 : vector<1x128xf32>
    %75 = vector.broadcast %74 : vector<1x128xf32> to vector<128x128xf32>
    %76 = arith.mulf %71, %75 : vector<128x128xf32>
    %77 = vector.broadcast %55 : vector<1x128xf32> to vector<128x128xf32>
    %78 = arith.mulf %76, %77 : vector<128x128xf32>
    %79 = vector.broadcast %56 : vector<1x128xf32> to vector<128x128xf32>
    %80 = arith.addf %78, %79 : vector<128x128xf32>
    %cst_36 = arith.constant 0.000000e+00 : f32
    %81 = vector.broadcast %cst_36 : f32 to vector<128x128xf32>
    %82 = arith.cmpf ogt, %80, %81 : vector<128x128xf32>
    %83 = math.exp %80 : vector<128x128xf32>
    %cst_37 = arith.constant 1.000000e+00 : f32
    %84 = vector.broadcast %cst_37 : f32 to vector<128x128xf32>
    %85 = arith.subf %83, %84 : vector<128x128xf32>
    %cst_38 = arith.constant 1.67326319 : f32
    %86 = vector.broadcast %cst_38 : f32 to vector<128x128xf32>
    %87 = arith.mulf %86, %85 : vector<128x128xf32>
    %88 = arith.select %82, %80, %87 : vector<128x128xi1>, vector<128x128xf32>
    %cst_39 = arith.constant 1.05070102 : f32
    %89 = vector.broadcast %cst_39 : f32 to vector<128x128xf32>
    %90 = arith.mulf %89, %88 : vector<128x128xf32>
    %cst_40 = arith.constant 1.000000e+07 : f32
    %91 = vector.broadcast %cst_40 : f32 to vector<128x128xf32>
    %92 = arith.minimumf %90, %91 : vector<128x128xf32>
    %93 = arith.truncf %92 : vector<128x128xf32> to vector<128x128xbf16>
    %c0_41 = arith.constant 0 : index
    %c0_42 = arith.constant 0 : index
    %94 = vector.load %arg11[%c0_41, %c0_42] : memref<128x128xbf16, #tpu.memory_space<vmem>>, vector<128x128xbf16>
    %cst_43 = arith.constant dense<0.000000e+00> : vector<128x128xf32>
    %95 = tpu.matmul %93, %94, %cst_43 {dimension_numbers = #tpu.dot_dimension_numbers<[1], [0], [0], [1], [0, 0, 1, 1], [], []>} : vector<128x128xbf16>, vector<128x128xbf16>, vector<128x128xf32> -> vector<128x128xf32>
    %c0_44 = arith.constant 0 : index
    %c0_45 = arith.constant 0 : index
    %96 = vector.load %arg12[%c0_44, %c0_45] : memref<1x128xf32, #tpu.memory_space<vmem>>, vector<1x128xf32>
    %97 = vector.broadcast %96 : vector<1x128xf32> to vector<128x128xf32>
    %98 = arith.addf %95, %97 : vector<128x128xf32>
    %99 = arith.truncf %92 : vector<128x128xf32> to vector<128x128xbf16>
    %c0_46 = arith.constant 0 : index
    %c0_47 = arith.constant 0 : index
    %100 = vector.load %arg13[%c0_46, %c0_47] : memref<128x128xbf16, #tpu.memory_space<vmem>>, vector<128x128xbf16>
    %cst_48 = arith.constant dense<0.000000e+00> : vector<128x128xf32>
    %101 = tpu.matmul %99, %100, %cst_48 {dimension_numbers = #tpu.dot_dimension_numbers<[1], [0], [0], [1], [0, 0, 1, 1], [], []>} : vector<128x128xbf16>, vector<128x128xbf16>, vector<128x128xf32> -> vector<128x128xf32>
    %c0_49 = arith.constant 0 : index
    %c0_50 = arith.constant 0 : index
    %102 = vector.load %arg14[%c0_49, %c0_50] : memref<1x128xf32, #tpu.memory_space<vmem>>, vector<1x128xf32>
    %103 = vector.broadcast %102 : vector<1x128xf32> to vector<128x128xf32>
    %104 = arith.addf %101, %103 : vector<128x128xf32>
    %105 = math.exp %104 : vector<128x128xf32>
    %cst_51 = arith.constant 9.99999974E-5 : f32
    %106 = vector.broadcast %cst_51 : f32 to vector<128x128xf32>
    %107 = arith.addf %105, %106 : vector<128x128xf32>
    %108 = math.sqrt %107 : vector<128x128xf32>
    %c0_52 = arith.constant 0 : index
    %c0_53 = arith.constant 0 : index
    %109 = vector.load %arg1[%c0_52, %c0_53] : memref<128x128xf32, #tpu.memory_space<vmem>>, vector<128x128xf32>
    %110 = arith.mulf %108, %109 : vector<128x128xf32>
    %111 = arith.addf %98, %110 : vector<128x128xf32>
    %112 = tpu.iota {dimensions = array<i32: 1>} : vector<1x128xi32>
    %c15_i32 = arith.constant 15 : i32
    %113 = vector.broadcast %c15_i32 : i32 to vector<1x128xi32>
    %114 = arith.cmpi slt, %112, %113 : vector<1x128xi32>
    %cst_54 = arith.constant 0xFF800000 : f32
    %115 = vector.shape_cast %114 : vector<1x128xi1> to vector<1x128xi1>
    %116 = vector.broadcast %115 : vector<1x128xi1> to vector<128x128xi1>
    %117 = vector.broadcast %cst_54 : f32 to vector<128x128xf32>
    %118 = arith.select %116, %111, %117 : vector<128x128xi1>, vector<128x128xf32>
    %cst_55 = arith.constant dense<0xFF800000> : vector<128xf32>
    %119 = vector.multi_reduction <maximumf>, %118, %cst_55 [1] : vector<128x128xf32> to vector<128xf32>
    %120 = vector.shape_cast %119 : vector<128xf32> to vector<128x1xf32>
    %121 = vector.broadcast %120 : vector<128x1xf32> to vector<128x128xf32>
    %122 = arith.subf %118, %121 : vector<128x128xf32>
    %123 = math.exp %122 : vector<128x128xf32>
    %cst_56 = arith.constant dense<0.000000e+00> : vector<128xf32>
    %124 = vector.multi_reduction <add>, %123, %cst_56 [1] : vector<128x128xf32> to vector<128xf32>
    %125 = vector.shape_cast %124 : vector<128xf32> to vector<128x1xf32>
    %126 = tpu.reciprocal %125 {approx = true} : vector<128x1xf32> -> vector<128x1xf32>
    %127 = vector.broadcast %126 : vector<128x1xf32> to vector<128x128xf32>
    %128 = arith.mulf %123, %127 : vector<128x128xf32>
    %c0_57 = arith.constant 0 : index
    %c0_58 = arith.constant 0 : index
    %129 = vector.load %arg26[%c0_57, %c0_58] : memref<128x128xf32, #tpu.memory_space<vmem>>, vector<128x128xf32>
    tpu.vector_store %arg26[%c0_57, %c0_58], %98 {strides = array<i32>} : memref<128x128xf32, #tpu.memory_space<vmem>>, vector<128x128xf32>,
    %c0_59 = arith.constant 0 : index
    %c0_60 = arith.constant 0 : index
    %130 = vector.load %arg27[%c0_59, %c0_60] : memref<128x128xf32, #tpu.memory_space<vmem>>, vector<128x128xf32>
    tpu.vector_store %arg27[%c0_59, %c0_60], %107 {strides = array<i32>} : memref<128x128xf32, #tpu.memory_space<vmem>>, vector<128x128xf32>,
    %131 = arith.truncf %128 : vector<128x128xf32> to vector<128x128xbf16>
    %c0_61 = arith.constant 0 : index
    %c0_62 = arith.constant 0 : index
    %132 = vector.load %arg15[%c0_61, %c0_62] : memref<128x128xbf16, #tpu.memory_space<vmem>>, vector<128x128xbf16>
    %cst_63 = arith.constant dense<0.000000e+00> : vector<128x128xf32>
    %133 = tpu.matmul %131, %132, %cst_63 {dimension_numbers = #tpu.dot_dimension_numbers<[1], [0], [0], [1], [0, 0, 1, 1], [], []>} : vector<128x128xbf16>, vector<128x128xbf16>, vector<128x128xf32> -> vector<128x128xf32>
    %c0_64 = arith.constant 0 : index
    %c0_65 = arith.constant 0 : index
    %134 = vector.load %arg16[%c0_64, %c0_65] : memref<1x128xf32, #tpu.memory_space<vmem>>, vector<1x128xf32>
    %135 = vector.broadcast %134 : vector<1x128xf32> to vector<128x128xf32>
    %136 = arith.addf %133, %135 : vector<128x128xf32>
    %c0_66 = arith.constant 0 : index
    %c0_67 = arith.constant 0 : index
    %137 = vector.load %arg2[%c0_66, %c0_67] : memref<128x128xf32, #tpu.memory_space<vmem>>, vector<128x128xf32>
    %138 = arith.addf %136, %137 : vector<128x128xf32>
    %c0_68 = arith.constant 0 : index
    %c0_69 = arith.constant 0 : index
    %139 = vector.load %arg17[%c0_68, %c0_69] : memref<1x128xf32, #tpu.memory_space<vmem>>, vector<1x128xf32>
    %c0_70 = arith.constant 0 : index
    %c0_71 = arith.constant 0 : index
    %140 = vector.load %arg18[%c0_70, %c0_71] : memref<1x128xf32, #tpu.memory_space<vmem>>, vector<1x128xf32>
    %cst_72 = arith.constant dense<0.000000e+00> : vector<128xf32>
    %141 = vector.multi_reduction <add>, %138, %cst_72 [0] : vector<128x128xf32> to vector<128xf32>
    %142 = vector.shape_cast %141 : vector<128xf32> to vector<1x128xf32>
    %cst_73 = arith.constant 7.812500e-03 : f32
    %143 = vector.broadcast %cst_73 : f32 to vector<1x128xf32>
    %144 = arith.mulf %142, %143 : vector<1x128xf32>
    %145 = arith.mulf %138, %138 : vector<128x128xf32>
    %cst_74 = arith.constant dense<0.000000e+00> : vector<128xf32>
    %146 = vector.multi_reduction <add>, %145, %cst_74 [0] : vector<128x128xf32> to vector<128xf32>
    %147 = vector.shape_cast %146 : vector<128xf32> to vector<1x128xf32>
    %cst_75 = arith.constant 7.812500e-03 : f32
    %148 = vector.broadcast %cst_75 : f32 to vector<1x128xf32>
    %149 = arith.mulf %147, %148 : vector<1x128xf32>
    %150 = arith.mulf %144, %144 : vector<1x128xf32>
    %151 = arith.subf %149, %150 : vector<1x128xf32>
    %cst_76 = arith.constant 0.000000e+00 : f32
    %152 = vector.broadcast %cst_76 : f32 to vector<1x128xf32>
    %153 = arith.maximumf %151, %152 : vector<1x128xf32>
    %154 = vector.broadcast %144 : vector<1x128xf32> to vector<128x128xf32>
    %155 = arith.subf %138, %154 : vector<128x128xf32>
    %cst_77 = arith.constant 1.000000e-03 : f32
    %156 = vector.broadcast %cst_77 : f32 to vector<1x128xf32>
    %157 = arith.addf %153, %156 : vector<1x128xf32>
    %158 = math.rsqrt %157 : vector<1x128xf32>
    %159 = vector.broadcast %158 : vector<1x128xf32> to vector<128x128xf32>
    %160 = arith.mulf %155, %159 : vector<128x128xf32>
    %161 = vector.broadcast %139 : vector<1x128xf32> to vector<128x128xf32>
    %162 = arith.mulf %160, %161 : vector<128x128xf32>
    %163 = vector.broadcast %140 : vector<1x128xf32> to vector<128x128xf32>
    %164 = arith.addf %162, %163 : vector<128x128xf32>
    %cst_78 = arith.constant 0.000000e+00 : f32
    %165 = vector.broadcast %cst_78 : f32 to vector<128x128xf32>
    %166 = arith.cmpf ogt, %164, %165 : vector<128x128xf32>
    %167 = math.exp %164 : vector<128x128xf32>
    %cst_79 = arith.constant 1.000000e+00 : f32
    %168 = vector.broadcast %cst_79 : f32 to vector<128x128xf32>
    %169 = arith.subf %167, %168 : vector<128x128xf32>
    %cst_80 = arith.constant 1.67326319 : f32
    %170 = vector.broadcast %cst_80 : f32 to vector<128x128xf32>
    %171 = arith.mulf %170, %169 : vector<128x128xf32>
    %172 = arith.select %166, %164, %171 : vector<128x128xi1>, vector<128x128xf32>
    %cst_81 = arith.constant 1.05070102 : f32
    %173 = vector.broadcast %cst_81 : f32 to vector<128x128xf32>
    %174 = arith.mulf %173, %172 : vector<128x128xf32>
    %175 = arith.truncf %174 : vector<128x128xf32> to vector<128x128xbf16>
    %c0_82 = arith.constant 0 : index
    %c0_83 = arith.constant 0 : index
    %176 = vector.load %arg19[%c0_82, %c0_83] : memref<128x256xbf16, #tpu.memory_space<vmem>>, vector<128x256xbf16>
    %cst_84 = arith.constant dense<0.000000e+00> : vector<128x256xf32>
    %177 = tpu.matmul %175, %176, %cst_84 {dimension_numbers = #tpu.dot_dimension_numbers<[1], [0], [0], [1], [0, 0, 1, 1], [], []>} : vector<128x128xbf16>, vector<128x256xbf16>, vector<128x256xf32> -> vector<128x256xf32>
    %c0_85 = arith.constant 0 : index
    %c0_86 = arith.constant 0 : index
    %178 = vector.load %arg20[%c0_85, %c0_86] : memref<1x256xf32, #tpu.memory_space<vmem>>, vector<1x256xf32>
    %179 = vector.broadcast %178 : vector<1x256xf32> to vector<128x256xf32>
    %180 = arith.addf %177, %179 : vector<128x256xf32>
    %c0_87 = arith.constant 0 : index
    %c0_88 = arith.constant 0 : index
    %181 = vector.load %arg21[%c0_87, %c0_88] : memref<1x256xf32, #tpu.memory_space<vmem>>, vector<1x256xf32>
    %c0_89 = arith.constant 0 : index
    %c0_90 = arith.constant 0 : index
    %182 = vector.load %arg22[%c0_89, %c0_90] : memref<1x256xf32, #tpu.memory_space<vmem>>, vector<1x256xf32>
    %cst_91 = arith.constant dense<0.000000e+00> : vector<256xf32>
    %183 = vector.multi_reduction <add>, %180, %cst_91 [0] : vector<128x256xf32> to vector<256xf32>
    %184 = vector.shape_cast %183 : vector<256xf32> to vector<1x256xf32>
    %cst_92 = arith.constant 7.812500e-03 : f32
    %185 = vector.broadcast %cst_92 : f32 to vector<1x256xf32>
    %186 = arith.mulf %184, %185 : vector<1x256xf32>
    %187 = arith.mulf %180, %180 : vector<128x256xf32>
    %cst_93 = arith.constant dense<0.000000e+00> : vector<256xf32>
    %188 = vector.multi_reduction <add>, %187, %cst_93 [0] : vector<128x256xf32> to vector<256xf32>
    %189 = vector.shape_cast %188 : vector<256xf32> to vector<1x256xf32>
    %cst_94 = arith.constant 7.812500e-03 : f32
    %190 = vector.broadcast %cst_94 : f32 to vector<1x256xf32>
    %191 = arith.mulf %189, %190 : vector<1x256xf32>
    %192 = arith.mulf %186, %186 : vector<1x256xf32>
    %193 = arith.subf %191, %192 : vector<1x256xf32>
    %cst_95 = arith.constant 0.000000e+00 : f32
    %194 = vector.broadcast %cst_95 : f32 to vector<1x256xf32>
    %195 = arith.maximumf %193, %194 : vector<1x256xf32>
    %196 = vector.broadcast %186 : vector<1x256xf32> to vector<128x256xf32>
    %197 = arith.subf %180, %196 : vector<128x256xf32>
    %cst_96 = arith.constant 1.000000e-03 : f32
    %198 = vector.broadcast %cst_96 : f32 to vector<1x256xf32>
    %199 = arith.addf %195, %198 : vector<1x256xf32>
    %200 = math.rsqrt %199 : vector<1x256xf32>
    %201 = vector.broadcast %200 : vector<1x256xf32> to vector<128x256xf32>
    %202 = arith.mulf %197, %201 : vector<128x256xf32>
    %203 = vector.broadcast %181 : vector<1x256xf32> to vector<128x256xf32>
    %204 = arith.mulf %202, %203 : vector<128x256xf32>
    %205 = vector.broadcast %182 : vector<1x256xf32> to vector<128x256xf32>
    %206 = arith.addf %204, %205 : vector<128x256xf32>
    %cst_97 = arith.constant 0.000000e+00 : f32
    %207 = vector.broadcast %cst_97 : f32 to vector<128x256xf32>
    %208 = arith.cmpf ogt, %206, %207 : vector<128x256xf32>
    %209 = math.exp %206 : vector<128x256xf32>
    %cst_98 = arith.constant 1.000000e+00 : f32
    %210 = vector.broadcast %cst_98 : f32 to vector<128x256xf32>
    %211 = arith.subf %209, %210 : vector<128x256xf32>
    %cst_99 = arith.constant 1.67326319 : f32
    %212 = vector.broadcast %cst_99 : f32 to vector<128x256xf32>
    %213 = arith.mulf %212, %211 : vector<128x256xf32>
    %214 = arith.select %208, %206, %213 : vector<128x256xi1>, vector<128x256xf32>
    %cst_100 = arith.constant 1.05070102 : f32
    %215 = vector.broadcast %cst_100 : f32 to vector<128x256xf32>
    %216 = arith.mulf %215, %214 : vector<128x256xf32>
    %cst_101 = arith.constant 1.000000e+07 : f32
    %217 = vector.broadcast %cst_101 : f32 to vector<128x256xf32>
    %218 = arith.minimumf %216, %217 : vector<128x256xf32>
    %219 = arith.truncf %218 : vector<128x256xf32> to vector<128x256xbf16>
    %c0_102 = arith.constant 0 : index
    %c0_103 = arith.constant 0 : index
    %220 = vector.load %arg23[%c0_102, %c0_103] : memref<256x256xbf16, #tpu.memory_space<vmem>>, vector<256x256xbf16>
    %cst_104 = arith.constant dense<0.000000e+00> : vector<128x256xf32>
    %221 = tpu.matmul %219, %220, %cst_104 {dimension_numbers = #tpu.dot_dimension_numbers<[1], [0], [0], [1], [0, 0, 1, 1], [], []>} : vector<128x256xbf16>, vector<256x256xbf16>, vector<128x256xf32> -> vector<128x256xf32>
    %c0_105 = arith.constant 0 : index
    %c0_106 = arith.constant 0 : index
    %222 = vector.load %arg24[%c0_105, %c0_106] : memref<1x256xf32, #tpu.memory_space<vmem>>, vector<1x256xf32>
    %223 = vector.broadcast %222 : vector<1x256xf32> to vector<128x256xf32>
    %224 = arith.addf %221, %223 : vector<128x256xf32>
    %225 = tpu.iota {dimensions = array<i32: 1>} : vector<1x256xi32>
    %c200_i32 = arith.constant 200 : i32
    %226 = vector.broadcast %c200_i32 : i32 to vector<1x256xi32>
    %227 = arith.cmpi slt, %225, %226 : vector<1x256xi32>
    %cst_107 = arith.constant 0.000000e+00 : f32
    %228 = vector.broadcast %cst_107 : f32 to vector<128x256xf32>
    %229 = arith.cmpf ogt, %224, %228 : vector<128x256xf32>
    %cst_108 = arith.constant 0.000000e+00 : f32
    %230 = vector.broadcast %cst_108 : f32 to vector<128x256xf32>
    %231 = arith.subf %230, %224 : vector<128x256xf32>
    %232 = math.exp %231 : vector<128x256xf32>
    %233 = math.log1p %232 : vector<128x256xf32>
    %234 = arith.addf %224, %233 : vector<128x256xf32>
    %235 = math.exp %224 : vector<128x256xf32>
    %236 = math.log1p %235 : vector<128x256xf32>
    %237 = arith.select %229, %234, %236 : vector<128x256xi1>, vector<128x256xf32>
    %cst_109 = arith.constant 0.313261688 : f32
    %238 = vector.broadcast %cst_109 : f32 to vector<128x256xf32>
    %239 = arith.subf %237, %238 : vector<128x256xf32>
    %cst_110 = arith.constant 0.000000e+00 : f32
    %240 = vector.broadcast %cst_110 : f32 to vector<128x256xf32>
    %241 = arith.cmpf ole, %239, %240 : vector<128x256xf32>
    %cst_111 = arith.constant 0.000000e+00 : f32
    %242 = vector.broadcast %cst_111 : f32 to vector<128x256xf32>
    %243 = arith.select %241, %242, %239 : vector<128x256xi1>, vector<128x256xf32>
    %cst_112 = arith.constant 0.000000e+00 : f32
    %244 = vector.shape_cast %227 : vector<1x256xi1> to vector<1x256xi1>
    %245 = vector.broadcast %244 : vector<1x256xi1> to vector<128x256xi1>
    %246 = vector.broadcast %cst_112 : f32 to vector<128x256xf32>
    %247 = arith.select %245, %243, %246 : vector<128x256xi1>, vector<128x256xf32>
    %cst_113 = arith.constant dense<0.000000e+00> : vector<128xf32>
    %248 = vector.multi_reduction <add>, %247, %cst_113 [1] : vector<128x256xf32> to vector<128xf32>
    %249 = vector.shape_cast %248 : vector<128xf32> to vector<128x1xf32>
    %cst_114 = arith.constant 9.99999974E-6 : f32
    %250 = vector.broadcast %cst_114 : f32 to vector<128x1xf32>
    %251 = arith.addf %249, %250 : vector<128x1xf32>
    %252 = tpu.reciprocal %251 {approx = true} : vector<128x1xf32> -> vector<128x1xf32>
    %253 = vector.broadcast %252 : vector<128x1xf32> to vector<128x256xf32>
    %254 = arith.mulf %247, %253 : vector<128x256xf32>
    %255 = math.tanh %224 : vector<128x256xf32>
    %cst_115 = arith.constant 1.000000e+00 : f32
    %256 = vector.broadcast %cst_115 : f32 to vector<128x256xf32>
    %257 = arith.addf %256, %255 : vector<128x256xf32>
    %cst_116 = arith.constant 5.000000e-01 : f32
    %258 = vector.broadcast %cst_116 : f32 to vector<128x256xf32>
    %259 = arith.mulf %258, %257 : vector<128x256xf32>
    %c200_i32_117 = arith.constant 200 : i32
    %260 = vector.broadcast %c200_i32_117 : i32 to vector<1x256xi32>
    %261 = arith.cmpi eq, %225, %260 : vector<1x256xi32>
    %cst_118 = arith.constant 0.000000e+00 : f32
    %262 = vector.shape_cast %261 : vector<1x256xi1> to vector<1x256xi1>
    %263 = vector.broadcast %262 : vector<1x256xi1> to vector<128x256xi1>
    %264 = vector.broadcast %cst_118 : f32 to vector<128x256xf32>
    %265 = arith.select %263, %259, %264 : vector<128x256xi1>, vector<128x256xf32>
    %266 = vector.shape_cast %227 : vector<1x256xi1> to vector<1x256xi1>
    %267 = vector.broadcast %266 : vector<1x256xi1> to vector<128x256xi1>
    %268 = arith.select %267, %254, %265 : vector<128x256xi1>, vector<128x256xf32>
    %c0_119 = arith.constant 0 : index
    %c0_120 = arith.constant 0 : index
    %269 = vector.load %arg25[%c0_119, %c0_120] : memref<128x256xf32, #tpu.memory_space<vmem>>, vector<128x256xf32>
    tpu.vector_store %arg25[%c0_119, %c0_120], %268 {strides = array<i32>} : memref<128x256xf32, #tpu.memory_space<vmem>>, vector<128x256xf32>,
    return
  }
}

</mosaic_0001>

<llo_original>
// kernel: vae_forward.1
$region0: #{vae_forward.1}
  #allocation0 [shape = 'u32[]', space=smem, size = 0x4, offset = 0x4, fixed_abs, tag = 'smem constant byte address 0x4 - core index']
  #allocation1 [shape = 'u32[144,128]{1,0:T(1,128)}', space=vmem, size = 0x12000, scoped, tag = 'internal scratch']
  %s0 = inlined_call_operand.vmem [shape: f32[128,256], index: 0, kind: input, shape index: {}]
  %s1 = inlined_call_operand.vmem [shape: f32[128,128], index: 1, kind: input, shape index: {}]
  %s2 = inlined_call_operand.vmem [shape: f32[128,128], index: 2, kind: input, shape index: {}]
  %s3 = inlined_call_operand.vmem [shape: bf16[256,256], index: 3, kind: input, shape index: {}]
  %s4 = inlined_call_operand.vmem [shape: f32[1,256], index: 4, kind: input, shape index: {}]
  %s5 = inlined_call_operand.vmem [shape: f32[1,256], index: 5, kind: input, shape index: {}]
  %s6 = inlined_call_operand.vmem [shape: f32[1,256], index: 6, kind: input, shape index: {}]
  %s7 = inlined_call_operand.vmem [shape: bf16[256,128], index: 7, kind: input, shape index: {}]
  %s8 = inlined_call_operand.vmem [shape: f32[1,128], index: 8, kind: input, shape index: {}]
  %s9 = inlined_call_operand.vmem [shape: f32[1,128], index: 9, kind: input, shape index: {}]
  %s10 = inlined_call_operand.vmem [shape: f32[1,128], index: 10, kind: input, shape index: {}]
  %s11 = inlined_call_operand.vmem [shape: bf16[128,128], index: 11, kind: input, shape index: {}]
  %s12 = inlined_call_operand.vmem [shape: f32[1,128], index: 12, kind: input, shape index: {}]
  %s13 = inlined_call_operand.vmem [shape: bf16[128,128], index: 13, kind: input, shape index: {}]
  %s14 = inlined_call_operand.vmem [shape: f32[1,128], index: 14, kind: input, shape index: {}]
  %s15 = inlined_call_operand.vmem [shape: bf16[128,128], index: 15, kind: input, shape index: {}]
  %s16 = inlined_call_operand.vmem [shape: f32[1,128], index: 16, kind: input, shape index: {}]
  %s17 = inlined_call_operand.vmem [shape: f32[1,128], index: 17, kind: input, shape index: {}]
  %s18 = inlined_call_operand.vmem [shape: f32[1,128], index: 18, kind: input, shape index: {}]
  %s19 = inlined_call_operand.vmem [shape: bf16[128,256], index: 19, kind: input, shape index: {}]
  %s20 = inlined_call_operand.vmem [shape: f32[1,256], index: 20, kind: input, shape index: {}]
  %s21 = inlined_call_operand.vmem [shape: f32[1,256], index: 21, kind: input, shape index: {}]
  %s22 = inlined_call_operand.vmem [shape: f32[1,256], index: 22, kind: input, shape index: {}]
  %s23 = inlined_call_operand.vmem [shape: bf16[256,256], index: 23, kind: input, shape index: {}]
  %s24 = inlined_call_operand.vmem [shape: f32[1,256], index: 24, kind: input, shape index: {}]
  %s25 = inlined_call_operand.vmem [shape: f32[128,256], index: 25, kind: output, shape index: {0}]
  %s26 = inlined_call_operand.vmem [shape: f32[128,128], index: 26, kind: output, shape index: {1}]
  %s27 = inlined_call_operand.vmem [shape: f32[128,128], index: 27, kind: output, shape index: {2}]
  %28 = xla_tuple %s25, %s26, %s27
  %s29 = sld [smem:[#allocation0]]
  $region126: #{vae_forward.1} parent=0
    _
  %s31 = ssub.s32 1, %s29
  %s32 = scalar_select 0, %s31, %s29
  // Predicated region
  $region2: #{vae_forward.1} parent=0 // pred_check
    _
  $region3: #{vae_forward.1} parent=0 // pred_check_branch
    %34 = sbr.rel (0) target = $region5
  $region4: #{vae_forward.1} parent=0 // pred_region
    _
  $region5: #{vae_forward.1} parent=0 // pred_fallthru
    _
  // Predicated region
  $region6: #{vae_forward.1} parent=0 // pred_check
    _
  $region7: #{vae_forward.1} parent=0 // pred_check_branch
    %36 = sbr.rel (0) target = $region9
  $region8: #{vae_forward.1} parent=0 // pred_region
    _
  $region9: #{vae_forward.1} parent=0 // pred_fallthru
    _
  // Predicated region
  $region10: #{vae_forward.1} parent=0 // pred_check
    _
  $region11: #{vae_forward.1} parent=0 // pred_check_branch
    %38 = sbr.rel (0) target = $region13
  $region12: #{vae_forward.1} parent=0 // pred_region
    _
  $region13: #{vae_forward.1} parent=0 // pred_fallthru
    _
  // Predicated region
  $region14: #{vae_forward.1} parent=0 // pred_check
    _
  $region15: #{vae_forward.1} parent=0 // pred_check_branch
    %40 = sbr.rel (0) target = $region17
  $region16: #{vae_forward.1} parent=0 // pred_region
    _
  $region17: #{vae_forward.1} parent=0 // pred_fallthru
    _
  // Predicated region
  $region18: #{vae_forward.1} parent=0 // pred_check
    _
  $region19: #{vae_forward.1} parent=0 // pred_check_branch
    %42 = sbr.rel (0) target = $region21
  $region20: #{vae_forward.1} parent=0 // pred_region
    _
  $region21: #{vae_forward.1} parent=0 // pred_fallthru
    _
  // Predicated region
  $region22: #{vae_forward.1} parent=0 // pred_check
    _
  $region23: #{vae_forward.1} parent=0 // pred_check_branch
    %44 = sbr.rel (0) target = $region25
  $region24: #{vae_forward.1} parent=0 // pred_region
    _
  $region25: #{vae_forward.1} parent=0 // pred_fallthru
    _
  // Predicated region
  $region26: #{vae_forward.1} parent=0 // pred_check
    _
  $region27: #{vae_forward.1} parent=0 // pred_check_branch
    %46 = sbr.rel (0) target = $region29
  $region28: #{vae_forward.1} parent=0 // pred_region
    _
  $region29: #{vae_forward.1} parent=0 // pred_fallthru
    _
  // Predicated region
  $region30: #{vae_forward.1} parent=0 // pred_check
    _
  $region31: #{vae_forward.1} parent=0 // pred_check_branch
    %48 = sbr.rel (0) target = $region33
  $region32: #{vae_forward.1} parent=0 // pred_region
    _
  $region33: #{vae_forward.1} parent=0 // pred_fallthru
    _
  // Predicated region
  $region34: #{vae_forward.1} parent=0 // pred_check
    _
  $region35: #{vae_forward.1} parent=0 // pred_check_branch
    %50 = sbr.rel (0) target = $region37
  $region36: #{vae_forward.1} parent=0 // pred_region
    _
  $region37: #{vae_forward.1} parent=0 // pred_fallthru
    _
  // Predicated region
  $region38: #{vae_forward.1} parent=0 // pred_check
    _
  $region39: #{vae_forward.1} parent=0 // pred_check_branch
    %52 = sbr.rel (0) target = $region41
  $region40: #{vae_forward.1} parent=0 // pred_region
    _
  $region41: #{vae_forward.1} parent=0 // pred_fallthru
    _
  // Predicated region
  $region42: #{vae_forward.1} parent=0 // pred_check
    _
  $region43: #{vae_forward.1} parent=0 // pred_check_branch
    %54 = sbr.rel (0) target = $region45
  $region44: #{vae_forward.1} parent=0 // pred_region
    _
  $region45: #{vae_forward.1} parent=0 // pred_fallthru
    _
  // Predicated region
  $region46: #{vae_forward.1} parent=0 // pred_check
    _
  $region47: #{vae_forward.1} parent=0 // pred_check_branch
    %56 = sbr.rel (0) target = $region49
  $region48: #{vae_forward.1} parent=0 // pred_region
    _
  $region49: #{vae_forward.1} parent=0 // pred_fallthru
    _
  // Predicated region
  $region50: #{vae_forward.1} parent=0 // pred_check
    _
  $region51: #{vae_forward.1} parent=0 // pred_check_branch
    %58 = sbr.rel (0) target = $region53
  $region52: #{vae_forward.1} parent=0 // pred_region
    _
  $region53: #{vae_forward.1} parent=0 // pred_fallthru
    _
  // Predicated region
  $region54: #{vae_forward.1} parent=0 // pred_check
    _
  $region55: #{vae_forward.1} parent=0 // pred_check_branch
    %60 = sbr.rel (0) target = $region57
  $region56: #{vae_forward.1} parent=0 // pred_region
    _
  $region57: #{vae_forward.1} parent=0 // pred_fallthru
    _
  // Predicated region
  $region58: #{vae_forward.1} parent=0 // pred_check
    _
  $region59: #{vae_forward.1} parent=0 // pred_check_branch
    %62 = sbr.rel (0) target = $region61
  $region60: #{vae_forward.1} parent=0 // pred_region
    _
  $region61: #{vae_forward.1} parent=0 // pred_fallthru
    _
  // Predicated region
  $region62: #{vae_forward.1} parent=0 // pred_check
    _
  $region63: #{vae_forward.1} parent=0 // pred_check_branch
    %64 = sbr.rel (0) target = $region65
  $region64: #{vae_forward.1} parent=0 // pred_region
    _
  $region65: #{vae_forward.1} parent=0 // pred_fallthru
    _
  // Predicated region
  $region66: #{vae_forward.1} parent=0 // pred_check
    _
  $region67: #{vae_forward.1} parent=0 // pred_check_branch
    %66 = sbr.rel (0) target = $region69
  $region68: #{vae_forward.1} parent=0 // pred_region
    _
  $region69: #{vae_forward.1} parent=0 // pred_fallthru
    _
  // Predicated region
  $region70: #{vae_forward.1} parent=0 // pred_check
    _
  $region71: #{vae_forward.1} parent=0 // pred_check_branch
    %68 = sbr.rel (0) target = $region73
  $region72: #{vae_forward.1} parent=0 // pred_region
    _
  $region73: #{vae_forward.1} parent=0 // pred_fallthru
    _
  // Predicated region
  $region74: #{vae_forward.1} parent=0 // pred_check
    _
  $region75: #{vae_forward.1} parent=0 // pred_check_branch
    %70 = sbr.rel (0) target = $region77
  $region76: #{vae_forward.1} parent=0 // pred_region
    _
  $region77: #{vae_forward.1} parent=0 // pred_fallthru
    _
  // Predicated region
  $region78: #{vae_forward.1} parent=0 // pred_check
    _
  $region79: #{vae_forward.1} parent=0 // pred_check_branch
    %72 = sbr.rel (0) target = $region81
  $region80: #{vae_forward.1} parent=0 // pred_region
    _
  $region81: #{vae_forward.1} parent=0 // pred_fallthru
    _
  // Predicated region
  $region82: #{vae_forward.1} parent=0 // pred_check
    _
  $region83: #{vae_forward.1} parent=0 // pred_check_branch
    %74 = sbr.rel (0) target = $region85
  $region84: #{vae_forward.1} parent=0 // pred_region
    _
  $region85: #{vae_forward.1} parent=0 // pred_fallthru
    _
  // Predicated region
  $region86: #{vae_forward.1} parent=0 // pred_check
    _
  $region87: #{vae_forward.1} parent=0 // pred_check_branch
    %76 = sbr.rel (0) target = $region89
  $region88: #{vae_forward.1} parent=0 // pred_region
    _
  $region89: #{vae_forward.1} parent=0 // pred_fallthru
    _
  // Predicated region
  $region90: #{vae_forward.1} parent=0 // pred_check
    _
  $region91: #{vae_forward.1} parent=0 // pred_check_branch
    %78 = sbr.rel (0) target = $region93
  $region92: #{vae_forward.1} parent=0 // pred_region
    _
  $region93: #{vae_forward.1} parent=0 // pred_fallthru
    _
  // Predicated region
  $region94: #{vae_forward.1} parent=0 // pred_check
    _
  $region95: #{vae_forward.1} parent=0 // pred_check_branch
    %80 = sbr.rel (0) target = $region97
  $region96: #{vae_forward.1} parent=0 // pred_region
    _
  $region97: #{vae_forward.1} parent=0 // pred_fallthru
    _
  // Predicated region
  $region98: #{vae_forward.1} parent=0 // pred_check
    _
  $region99: #{vae_forward.1} parent=0 // pred_check_branch
    %82 = sbr.rel (0) target = $region101
  $region100: #{vae_forward.1} parent=0 // pred_region
    _
  $region101: #{vae_forward.1} parent=0 // pred_fallthru
    _
  %v84 = vld [vmem:[%s0] sm:$0xff]
  %v85 = vld [vmem:[%s0 + $0x8] sm:$0xff]
  %v86 = vld [vmem:[%s0 + $0x10] sm:$0xff]
  %v87 = vld [vmem:[%s0 + $0x18] sm:$0xff]
  %v88 = vld [vmem:[%s0 + $0x20] sm:$0xff]
  %v89 = vld [vmem:[%s0 + $0x28] sm:$0xff]
  %v90 = vld [vmem:[%s0 + $0x30] sm:$0xff]
  %v91 = vld [vmem:[%s0 + $0x38] sm:$0xff]
  %v92 = vld [vmem:[%s0 + $0x40] sm:$0xff]
  %v93 = vld [vmem:[%s0 + $0x48] sm:$0xff]
  %v94 = vld [vmem:[%s0 + $0x50] sm:$0xff]
  %v95 = vld [vmem:[%s0 + $0x58] sm:$0xff]
  %v96 = vld [vmem:[%s0 + $0x60] sm:$0xff]
  %v97 = vld [vmem:[%s0 + $0x68] sm:$0xff]
  %v98 = vld [vmem:[%s0 + $0x70] sm:$0xff]
  %v99 = vld [vmem:[%s0 + $0x78] sm:$0xff]
  %v100 = vld [vmem:[%s0 + $0x80] sm:$0xff]
  %v101 = vld [vmem:[%s0 + $0x88] sm:$0xff]
  %v102 = vld [vmem:[%s0 + $0x90] sm:$0xff]
  %v103 = vld [vmem:[%s0 + $0x98] sm:$0xff]
  %v104 = vld [vmem:[%s0 + $0xa0] sm:$0xff]
  %v105 = vld [vmem:[%s0 + $0xa8] sm:$0xff]
  %v106 = vld [vmem:[%s0 + $0xb0] sm:$0xff]
  %v107 = vld [vmem:[%s0 + $0xb8] sm:$0xff]
  %v108 = vld [vmem:[%s0 + $0xc0] sm:$0xff]
  %v109 = vld [vmem:[%s0 + $0xc8] sm:$0xff]
  %v110 = vld [vmem:[%s0 + $0xd0] sm:$0xff]
  %v111 = vld [vmem:[%s0 + $0xd8] sm:$0xff]
  %v112 = vld [vmem:[%s0 + $0xe0] sm:$0xff]
  %v113 = vld [vmem:[%s0 + $0xe8] sm:$0xff]
  %v114 = vld [vmem:[%s0 + $0xf0] sm:$0xff]
  %v115 = vld [vmem:[%s0 + $0xf8] sm:$0xff]
  %v116 = vadd.f32 %v84, 1.0
  %v117 = vadd.f32 %v85, 1.0
  %v118 = vadd.f32 %v86, 1.0
  %v119 = vadd.f32 %v87, 1.0
  %v120 = vadd.f32 %v88, 1.0
  %v121 = vadd.f32 %v89, 1.0
  %v122 = vadd.f32 %v90, 1.0
  %v123 = vadd.f32 %v91, 1.0
  %v124 = vadd.f32 %v92, 1.0
  %v125 = vadd.f32 %v93, 1.0
  %v126 = vadd.f32 %v94, 1.0
  %v127 = vadd.f32 %v95, 1.0
  %v128 = vadd.f32 %v96, 1.0
  %v129 = vadd.f32 %v97, 1.0
  %v130 = vadd.f32 %v98, 1.0
  %v131 = vadd.f32 %v99, 1.0
  %v132 = vadd.f32 %v100, 1.0
  %v133 = vadd.f32 %v101, 1.0
  %v134 = vadd.f32 %v102, 1.0
  %v135 = vadd.f32 %v103, 1.0
  %v136 = vadd.f32 %v104, 1.0
  %v137 = vadd.f32 %v105, 1.0
  %v138 = vadd.f32 %v106, 1.0
  %v139 = vadd.f32 %v107, 1.0
  %v140 = vadd.f32 %v108, 1.0
  %v141 = vadd.f32 %v109, 1.0
  %v142 = vadd.f32 %v110, 1.0
  %v143 = vadd.f32 %v111, 1.0
  %v144 = vadd.f32 %v112, 1.0
  %v145 = vadd.f32 %v113, 1.0
  %v146 = vadd.f32 %v114, 1.0
  %v147 = vadd.f32 %v115, 1.0
  %v148 = vlog2.pop %v116
  %v149 = vmul.f32 %v148, 0.6931472
  %v150 = vlog2.pop %v117
  %v151 = vmul.f32 %v150, 0.6931472
  %v152 = vlog2.pop %v118
  %v153 = vmul.f32 %v152, 0.6931472
  %v154 = vlog2.pop %v119
  %v155 = vmul.f32 %v154, 0.6931472
  %v156 = vlog2.pop %v120
  %v157 = vmul.f32 %v156, 0.6931472
  %v158 = vlog2.pop %v121
  %v159 = vmul.f32 %v158, 0.6931472
  %v160 = vlog2.pop %v122
  %v161 = vmul.f32 %v160, 0.6931472
  %v162 = vlog2.pop %v123
  %v163 = vmul.f32 %v162, 0.6931472
  %v164 = vlog2.pop %v124
  %v165 = vmul.f32 %v164, 0.6931472
  %v166 = vlog2.pop %v125
  %v167 = vmul.f32 %v166, 0.6931472
  %v168 = vlog2.pop %v126
  %v169 = vmul.f32 %v168, 0.6931472
  %v170 = vlog2.pop %v127
  %v171 = vmul.f32 %v170, 0.6931472
  %v172 = vlog2.pop %v128
  %v173 = vmul.f32 %v172, 0.6931472
  %v174 = vlog2.pop %v129
  %v175 = vmul.f32 %v174, 0.6931472
  %v176 = vlog2.pop %v130
  %v177 = vmul.f32 %v176, 0.6931472
  %v178 = vlog2.pop %v131
  %v179 = vmul.f32 %v178, 0.6931472
  %v180 = vlog2.pop %v132
  %v181 = vmul.f32 %v180, 0.6931472
  %v182 = vlog2.pop %v133
  %v183 = vmul.f32 %v182, 0.6931472
  %v184 = vlog2.pop %v134
  %v185 = vmul.f32 %v184, 0.6931472
  %v186 = vlog2.pop %v135
  %v187 = vmul.f32 %v186, 0.6931472
  %v188 = vlog2.pop %v136
  %v189 = vmul.f32 %v188, 0.6931472
  %v190 = vlog2.pop %v137
  %v191 = vmul.f32 %v190, 0.6931472
  %v192 = vlog2.pop %v138
  %v193 = vmul.f32 %v192, 0.6931472
  %v194 = vlog2.pop %v139
  %v195 = vmul.f32 %v194, 0.6931472
  %v196 = vlog2.pop %v140
  %v197 = vmul.f32 %v196, 0.6931472
  %v198 = vlog2.pop %v141
  %v199 = vmul.f32 %v198, 0.6931472
  %v200 = vlog2.pop %v142
  %v201 = vmul.f32 %v200, 0.6931472
  %v202 = vlog2.pop %v143
  %v203 = vmul.f32 %v202, 0.6931472
  %v204 = vlog2.pop %v144
  %v205 = vmul.f32 %v204, 0.6931472
  %v206 = vlog2.pop %v145
  %v207 = vmul.f32 %v206, 0.6931472
  %v208 = vlog2.pop %v146
  %v209 = vmul.f32 %v208, 0.6931472
  %v210 = vlog2.pop %v147
  %v211 = vmul.f32 %v210, 0.6931472
  %v212 = vrcp.pop 0.6931472
  %v213 = vmul.f32 %v149, %v212
  %v214 = vmul.f32 %v151, %v212
  %v215 = vmul.f32 %v153, %v212
  %v216 = vmul.f32 %v155, %v212
  %v217 = vmul.f32 %v157, %v212
  %v218 = vmul.f32 %v159, %v212
  %v219 = vmul.f32 %v161, %v212
  %v220 = vmul.f32 %v163, %v212
  %v221 = vmul.f32 %v165, %v212
  %v222 = vmul.f32 %v167, %v212
  %v223 = vmul.f32 %v169, %v212
  %v224 = vmul.f32 %v171, %v212
  %v225 = vmul.f32 %v173, %v212
  %v226 = vmul.f32 %v175, %v212
  %v227 = vmul.f32 %v177, %v212
  %v228 = vmul.f32 %v179, %v212
  %v229 = vmul.f32 %v181, %v212
  %v230 = vmul.f32 %v183, %v212
  %v231 = vmul.f32 %v185, %v212
  %v232 = vmul.f32 %v187, %v212
  %v233 = vmul.f32 %v189, %v212
  %v234 = vmul.f32 %v191, %v212
  %v235 = vmul.f32 %v193, %v212
  %v236 = vmul.f32 %v195, %v212
  %v237 = vmul.f32 %v197, %v212
  %v238 = vmul.f32 %v199, %v212
  %v239 = vmul.f32 %v201, %v212
  %v240 = vmul.f32 %v203, %v212
  %v241 = vmul.f32 %v205, %v212
  %v242 = vmul.f32 %v207, %v212
  %v243 = vmul.f32 %v209, %v212
  %v244 = vmul.f32 %v211, %v212
  %v245 = vpack.c.bf16 %v215, %v213
  %v246 = vpack.c.bf16 %v216, %v214
  %v247 = vpack.c.bf16 %v219, %v217
  %v248 = vpack.c.bf16 %v220, %v218
  %v249 = vpack.c.bf16 %v223, %v221
  %v250 = vpack.c.bf16 %v224, %v222
  %v251 = vpack.c.bf16 %v227, %v225
  %v252 = vpack.c.bf16 %v228, %v226
  %v253 = vpack.c.bf16 %v231, %v229
  %v254 = vpack.c.bf16 %v232, %v230
  %v255 = vpack.c.bf16 %v235, %v233
  %v256 = vpack.c.bf16 %v236, %v234
  %v257 = vpack.c.bf16 %v239, %v237
  %v258 = vpack.c.bf16 %v240, %v238
  %v259 = vpack.c.bf16 %v243, %v241
  %v260 = vpack.c.bf16 %v244, %v242
  %v261 = vld [vmem:[%s3] sm:$0xff]
  %v262 = vld [vmem:[%s3 + $0x8] sm:$0xff]
  %v263 = vld [vmem:[%s3 + $0x10] sm:$0xff]
  %v264 = vld [vmem:[%s3 + $0x18] sm:$0xff]
  %v265 = vld [vmem:[%s3 + $0x20] sm:$0xff]
  %v266 = vld [vmem:[%s3 + $0x28] sm:$0xff]
  %v267 = vld [vmem:[%s3 + $0x30] sm:$0xff]
  %v268 = vld [vmem:[%s3 + $0x38] sm:$0xff]
  %v269 = vld [vmem:[%s3 + $0x40] sm:$0xff]
  %v270 = vld [vmem:[%s3 + $0x48] sm:$0xff]
  %v271 = vld [vmem:[%s3 + $0x50] sm:$0xff]
  %v272 = vld [vmem:[%s3 + $0x58] sm:$0xff]
  %v273 = vld [vmem:[%s3 + $0x60] sm:$0xff]
  %v274 = vld [vmem:[%s3 + $0x68] sm:$0xff]
  %v275 = vld [vmem:[%s3 + $0x70] sm:$0xff]
  %v276 = vld [vmem:[%s3 + $0x78] sm:$0xff]
  %v277 = vld [vmem:[%s3 + $0x80] sm:$0xff]
  %v278 = vld [vmem:[%s3 + $0x88] sm:$0xff]
  %v279 = vld [vmem:[%s3 + $0x90] sm:$0xff]
  %v280 = vld [vmem:[%s3 + $0x98] sm:$0xff]
  %v281 = vld [vmem:[%s3 + $0xa0] sm:$0xff]
  %v282 = vld [vmem:[%s3 + $0xa8] sm:$0xff]
  %v283 = vld [vmem:[%s3 + $0xb0] sm:$0xff]
  %v284 = vld [vmem:[%s3 + $0xb8] sm:$0xff]
  %v285 = vld [vmem:[%s3 + $0xc0] sm:$0xff]
  %v286 = vld [vmem:[%s3 + $0xc8] sm:$0xff]
  %v287 = vld [vmem:[%s3 + $0xd0] sm:$0xff]
  %v288 = vld [vmem:[%s3 + $0xd8] sm:$0xff]
  %v289 = vld [vmem:[%s3 + $0xe0] sm:$0xff]
  %v290 = vld [vmem:[%s3 + $0xe8] sm:$0xff]
  %v291 = vld [vmem:[%s3 + $0xf0] sm:$0xff]
  %v292 = vld [vmem:[%s3 + $0xf8] sm:$0xff]
  %v293 = vld [vmem:[%s4] sm:$0x3]
  %v295 = vlaneseq
  %v296 = vshrl.u32 %v295, 7
  %v297 = vsub.s32 0, %v296
  %v298 = vrot.slane %v293, %v297
  %v299 = vlaneseq
  %v300 = vshrl.u32 %v299, 7
  %v301 = vsub.s32 1, %v300
  %v302 = vrot.slane %v293, %v301
  %v337 = vunpack.c.l.b16 %v261
  %v338 = vunpack.c.h.b16 %v261
  %v339 = vunpack.c.l.b16 %v262
  %v340 = vunpack.c.h.b16 %v262
  %v341 = vunpack.c.l.b16 %v263
  %v342 = vunpack.c.h.b16 %v263
  %v343 = vunpack.c.l.b16 %v264
  %v344 = vunpack.c.h.b16 %v264
  %v345 = vunpack.c.l.b16 %v265
  %v346 = vunpack.c.h.b16 %v265
  %v347 = vunpack.c.l.b16 %v266
  %v348 = vunpack.c.h.b16 %v266
  %v349 = vunpack.c.l.b16 %v267
  %v350 = vunpack.c.h.b16 %v267
  %v351 = vunpack.c.l.b16 %v268
  %v352 = vunpack.c.h.b16 %v268
  %v353 = vunpack.c.l.b16 %v269
  %v354 = vunpack.c.h.b16 %v269
  %v355 = vunpack.c.l.b16 %v270
  %v356 = vunpack.c.h.b16 %v270
  %v357 = vunpack.c.l.b16 %v271
  %v358 = vunpack.c.h.b16 %v271
  %v359 = vunpack.c.l.b16 %v272
  %v360 = vunpack.c.h.b16 %v272
  %v361 = vunpack.c.l.b16 %v273
  %v362 = vunpack.c.h.b16 %v273
  %v363 = vunpack.c.l.b16 %v274
  %v364 = vunpack.c.h.b16 %v274
  %v365 = vunpack.c.l.b16 %v275
  %v366 = vunpack.c.h.b16 %v275
  %v367 = vunpack.c.l.b16 %v276
  %v368 = vunpack.c.h.b16 %v276
  %v369 = vunpack.c.l.b16 %v277
  %v370 = vunpack.c.h.b16 %v277
  %v371 = vunpack.c.l.b16 %v278
  %v372 = vunpack.c.h.b16 %v278
  %v373 = vunpack.c.l.b16 %v279
  %v374 = vunpack.c.h.b16 %v279
  %v375 = vunpack.c.l.b16 %v280
  %v376 = vunpack.c.h.b16 %v280
  %v377 = vunpack.c.l.b16 %v281
  %v378 = vunpack.c.h.b16 %v281
  %v379 = vunpack.c.l.b16 %v282
  %v380 = vunpack.c.h.b16 %v282
  %v381 = vunpack.c.l.b16 %v283
  %v382 = vunpack.c.h.b16 %v283
  %v383 = vunpack.c.l.b16 %v284
  %v384 = vunpack.c.h.b16 %v284
  %v385 = vunpack.c.l.b16 %v285
  %v386 = vunpack.c.h.b16 %v285
  %v387 = vunpack.c.l.b16 %v286
  %v388 = vunpack.c.h.b16 %v286
  %v389 = vunpack.c.l.b16 %v287
  %v390 = vunpack.c.h.b16 %v287
  %v391 = vunpack.c.l.b16 %v288
  %v392 = vunpack.c.h.b16 %v288
  %v393 = vunpack.c.l.b16 %v289
  %v394 = vunpack.c.h.b16 %v289
  %v395 = vunpack.c.l.b16 %v290
  %v396 = vunpack.c.h.b16 %v290
  %v397 = vunpack.c.l.b16 %v291
  %v398 = vunpack.c.h.b16 %v291
  %v399 = vunpack.c.l.b16 %v292
  %v400 = vunpack.c.h.b16 %v292
  %v401 = vpack.c.b16 %v339, %v337
  %v402 = vpack.c.b16 %v340, %v338
  %v403 = vpack.c.b16 %v343, %v341
  %v404 = vpack.c.b16 %v344, %v342
  %v405 = vpack.c.b16 %v347, %v345
  %v406 = vpack.c.b16 %v348, %v346
  %v407 = vpack.c.b16 %v351, %v349
  %v408 = vpack.c.b16 %v352, %v350
  %v409 = vpack.c.b16 %v355, %v353
  %v410 = vpack.c.b16 %v356, %v354
  %v411 = vpack.c.b16 %v359, %v357
  %v412 = vpack.c.b16 %v360, %v358
  %v413 = vpack.c.b16 %v363, %v361
  %v414 = vpack.c.b16 %v364, %v362
  %v415 = vpack.c.b16 %v367, %v365
  %v416 = vpack.c.b16 %v368, %v366
  %v417 = vpack.c.b16 %v371, %v369
  %v418 = vpack.c.b16 %v372, %v370
  %v419 = vpack.c.b16 %v375, %v373
  %v420 = vpack.c.b16 %v376, %v374
  %v421 = vpack.c.b16 %v379, %v377
  %v422 = vpack.c.b16 %v380, %v378
  %v423 = vpack.c.b16 %v383, %v381
  %v424 = vpack.c.b16 %v384, %v382
  %v425 = vpack.c.b16 %v387, %v385
  %v426 = vpack.c.b16 %v388, %v386
  %v427 = vpack.c.b16 %v391, %v389
  %v428 = vpack.c.b16 %v392, %v390
  %v429 = vpack.c.b16 %v395, %v393
  %v430 = vpack.c.b16 %v396, %v394
  %v431 = vpack.c.b16 %v399, %v397
  %v432 = vpack.c.b16 %v400, %v398
  %465 = vmatprep.subr.bf16.mxu0 %v402
  %466 = vmatpush1.bf16.msra.mxu0 %v401
  %467 = vmatprep.subr.bf16.mxu0 %v404
  %468 = vmatpush1.bf16.msra.mxu0 %v403
  %469 = vmatprep.subr.bf16.mxu0 %v406
  %470 = vmatpush1.bf16.msra.mxu0 %v405
  %471 = vmatprep.subr.bf16.mxu0 %v408
  %472 = vmatpush1.bf16.msra.mxu0 %v407
  %473 = vmatprep.subr.bf16.mxu0 %v410
  %474 = vmatpush1.bf16.msra.mxu0 %v409
  %475 = vmatprep.subr.bf16.mxu0 %v412
  %476 = vmatpush1.bf16.msra.mxu0 %v411
  %477 = vmatprep.subr.bf16.mxu0 %v414
  %478 = vmatpush1.bf16.msra.mxu0 %v413
  %479 = vmatprep.subr.bf16.mxu0 %v416
  %480 = vmatpush1.bf16.msra.mxu0 %v415
  %481 = vmatprep.subr.bf16.mxu0 %v418
  %482 = vmatpush1.bf16.msra.mxu0 %v417
  %483 = vmatprep.subr.bf16.mxu0 %v420
  %484 = vmatpush1.bf16.msra.mxu0 %v419
  %485 = vmatprep.subr.bf16.mxu0 %v422
  %486 = vmatpush1.bf16.msra.mxu0 %v421
  %487 = vmatprep.subr.bf16.mxu0 %v424
  %488 = vmatpush1.bf16.msra.mxu0 %v423
  %489 = vmatprep.subr.bf16.mxu0 %v426
  %490 = vmatpush1.bf16.msra.mxu0 %v425
  %491 = vmatprep.subr.bf16.mxu0 %v428
  %492 = vmatpush1.bf16.msra.mxu0 %v427
  %493 = vmatprep.subr.bf16.mxu0 %v430
  %494 = vmatpush1.bf16.msra.mxu0 %v429
  %495 = vmatprep.subr.bf16.mxu0 %v432
  %496 = vmatpush1.bf16.msra.mxu0 %v431
  %497 = vmatprep.mubr.bf16.mxu0 %v246
  %498 = vmatmul.mubr.bf16.gmra.mrb[0].mxu0 %v245
  %v499 = vpop.f32.mrb[0].mxu0
  %v500 = vadd.f32 %v298, %v499
  %v501 = vpop.f32.mrb[0].mxu0
  %v502 = vadd.f32 %v302, %v501
  %v503 = vpop.f32.mrb[0].mxu0
  %v504 = vadd.f32 %v298, %v503
  %v505 = vpop.f32.mrb[0].mxu0
  %v506 = vadd.f32 %v302, %v505
  %507 = vmatprep.mubr.bf16.mxu0 %v248
  %508 = vmatmul.mubr.bf16.gmra.mrb[0].mxu0 %v247
  %v509 = vpop.f32.mrb[0].mxu0
  %v510 = vadd.f32 %v298, %v509
  %v511 = vpop.f32.mrb[0].mxu0
  %v512 = vadd.f32 %v302, %v511
  %v513 = vpop.f32.mrb[0].mxu0
  %v514 = vadd.f32 %v298, %v513
  %v515 = vpop.f32.mrb[0].mxu0
  %v516 = vadd.f32 %v302, %v515
  %517 = vmatprep.mubr.bf16.mxu0 %v250
  %518 = vmatmul.mubr.bf16.gmra.mrb[0].mxu0 %v249
  %v519 = vpop.f32.mrb[0].mxu0
  %v520 = vadd.f32 %v298, %v519
  %v521 = vpop.f32.mrb[0].mxu0
  %v522 = vadd.f32 %v302, %v521
  %v523 = vpop.f32.mrb[0].mxu0
  %v524 = vadd.f32 %v298, %v523
  %v525 = vpop.f32.mrb[0].mxu0
  %v526 = vadd.f32 %v302, %v525
  %527 = vmatprep.mubr.bf16.mxu0 %v252
  %528 = vmatmul.mubr.bf16.gmra.mrb[0].mxu0 %v251
  %v529 = vpop.f32.mrb[0].mxu0
  %v530 = vadd.f32 %v298, %v529
  %v531 = vpop.f32.mrb[0].mxu0
  %v532 = vadd.f32 %v302, %v531
  %v533 = vpop.f32.mrb[0].mxu0
  %v534 = vadd.f32 %v298, %v533
  %v535 = vpop.f32.mrb[0].mxu0
  %v536 = vadd.f32 %v302, %v535
  %537 = vmatprep.mubr.bf16.mxu0 %v254
  %538 = vmatmul.mubr.bf16.gmra.mrb[0].mxu0 %v253
  %v539 = vpop.f32.mrb[0].mxu0
  %v540 = vadd.f32 %v298, %v539
  %v541 = vpop.f32.mrb[0].mxu0
  %v542 = vadd.f32 %v302, %v541
  %v543 = vpop.f32.mrb[0].mxu0
  %v544 = vadd.f32 %v298, %v543
  %v545 = vpop.f32.mrb[0].mxu0
  %v546 = vadd.f32 %v302, %v545
  %547 = vmatprep.mubr.bf16.mxu0 %v256
  %548 = vmatmul.mubr.bf16.gmra.mrb[0].mxu0 %v255
  %v549 = vpop.f32.mrb[0].mxu0
  %v550 = vadd.f32 %v298, %v549
  %v551 = vpop.f32.mrb[0].mxu0
  %v552 = vadd.f32 %v302, %v551
  %v553 = vpop.f32.mrb[0].mxu0
  %v554 = vadd.f32 %v298, %v553
  %v555 = vpop.f32.mrb[0].mxu0
  %v556 = vadd.f32 %v302, %v555
  %557 = vmatprep.mubr.bf16.mxu0 %v258
  %558 = vmatmul.mubr.bf16.gmra.mrb[0].mxu0 %v257
  %v559 = vpop.f32.mrb[0].mxu0
  %v560 = vadd.f32 %v298, %v559
  %v561 = vpop.f32.mrb[0].mxu0
  %v562 = vadd.f32 %v302, %v561
  %v563 = vpop.f32.mrb[0].mxu0
  %v564 = vadd.f32 %v298, %v563
  %v565 = vpop.f32.mrb[0].mxu0
  %v566 = vadd.f32 %v302, %v565
  %567 = vmatprep.mubr.bf16.mxu0 %v260
  %568 = vmatmul.mubr.bf16.gmra.mrb[0].mxu0 %v259
  %v569 = vpop.f32.mrb[0].mxu0
  %v570 = vadd.f32 %v298, %v569
  %v571 = vpop.f32.mrb[0].mxu0
  %v572 = vadd.f32 %v302, %v571
  %v573 = vpop.f32.mrb[0].mxu0
  %v574 = vadd.f32 %v298, %v573
  %v575 = vpop.f32.mrb[0].mxu0
  %v576 = vadd.f32 %v302, %v575
  %577 = vdwg.mxu0
  %v578 = vld [vmem:[%s5] sm:$0x3]
  %v579 = vld [vmem:[%s6] sm:$0x3]
  %v580 = vadd.f32 %v500, %v504
  %v581 = vadd.f32 %v580, %v510
  %v582 = vadd.f32 %v581, %v514
  %v583 = vadd.f32 %v582, %v520
  %v584 = vadd.f32 %v583, %v524
  %v585 = vadd.f32 %v584, %v530
  %v586 = vadd.f32 %v585, %v534
  %v587 = vadd.f32 %v586, %v540
  %v588 = vadd.f32 %v587, %v544
  %v589 = vadd.f32 %v588, %v550
  %v590 = vadd.f32 %v589, %v554
  %v591 = vadd.f32 %v590, %v560
  %v592 = vadd.f32 %v591, %v564
  %v593 = vadd.f32 %v592, %v570
  %v594 = vadd.f32 %v593, %v574
  %v595 = vrot.slane %v594, 4
  %v596 = vadd.f32 %v594, %v595
  %v597 = vrot.slane %v596, 2
  %v598 = vadd.f32 %v596, %v597
  %v599 = vrot.slane %v598, 1
  %v600 = vadd.f32 %v598, %v599
  %v601 = vadd.f32 %v502, %v506
  %v602 = vadd.f32 %v601, %v512
  %v603 = vadd.f32 %v602, %v516
  %v604 = vadd.f32 %v603, %v522
  %v605 = vadd.f32 %v604, %v526
  %v606 = vadd.f32 %v605, %v532
  %v607 = vadd.f32 %v606, %v536
  %v608 = vadd.f32 %v607, %v542
  %v609 = vadd.f32 %v608, %v546
  %v610 = vadd.f32 %v609, %v552
  %v611 = vadd.f32 %v610, %v556
  %v612 = vadd.f32 %v611, %v562
  %v613 = vadd.f32 %v612, %v566
  %v614 = vadd.f32 %v613, %v572
  %v615 = vadd.f32 %v614, %v576
  %v616 = vrot.slane %v615, 4
  %v617 = vadd.f32 %v615, %v616
  %v618 = vrot.slane %v617, 2
  %v619 = vadd.f32 %v617, %v618
  %v620 = vrot.slane %v619, 1
  %v621 = vadd.f32 %v619, %v620
  %v622 = vmul.f32 %v600, 0.0078125
  %v623 = vmul.f32 %v621, 0.0078125
  %v624 = vmul.f32 %v500, %v500
  %v625 = vmul.f32 %v502, %v502
  %v626 = vmul.f32 %v504, %v504
  %v627 = vmul.f32 %v506, %v506
  %v628 = vmul.f32 %v510, %v510
  %v629 = vmul.f32 %v512, %v512
  %v630 = vmul.f32 %v514, %v514
  %v631 = vmul.f32 %v516, %v516
  %v632 = vmul.f32 %v520, %v520
  %v633 = vmul.f32 %v522, %v522
  %v634 = vmul.f32 %v524, %v524
  %v635 = vmul.f32 %v526, %v526
  %v636 = vmul.f32 %v530, %v530
  %v637 = vmul.f32 %v532, %v532
  %v638 = vmul.f32 %v534, %v534
  %v639 = vmul.f32 %v536, %v536
  %v640 = vmul.f32 %v540, %v540
  %v641 = vmul.f32 %v542, %v542
  %v642 = vmul.f32 %v544, %v544
  %v643 = vmul.f32 %v546, %v546
  %v644 = vmul.f32 %v550, %v550
  %v645 = vmul.f32 %v552, %v552
  %v646 = vmul.f32 %v554, %v554
  %v647 = vmul.f32 %v556, %v556
  %v648 = vmul.f32 %v560, %v560
  %v649 = vmul.f32 %v562, %v562
  %v650 = vmul.f32 %v564, %v564
  %v651 = vmul.f32 %v566, %v566
  %v652 = vmul.f32 %v570, %v570
  %v653 = vmul.f32 %v572, %v572
  %v654 = vmul.f32 %v574, %v574
  %v655 = vmul.f32 %v576, %v576
  %v656 = vadd.f32 %v624, %v626
  %v657 = vadd.f32 %v656, %v628
  %v658 = vadd.f32 %v657, %v630
  %v659 = vadd.f32 %v658, %v632
  %v660 = vadd.f32 %v659, %v634
  %v661 = vadd.f32 %v660, %v636
  %v662 = vadd.f32 %v661, %v638
  %v663 = vadd.f32 %v662, %v640
  %v664 = vadd.f32 %v663, %v642
  %v665 = vadd.f32 %v664, %v644
  %v666 = vadd.f32 %v665, %v646
  %v667 = vadd.f32 %v666, %v648
  %v668 = vadd.f32 %v667, %v650
  %v669 = vadd.f32 %v668, %v652
  %v670 = vadd.f32 %v669, %v654
  %v671 = vrot.slane %v670, 4
  %v672 = vadd.f32 %v670, %v671
  %v673 = vrot.slane %v672, 2
  %v674 = vadd.f32 %v672, %v673
  %v675 = vrot.slane %v674, 1
  %v676 = vadd.f32 %v674, %v675
  %v677 = vadd.f32 %v625, %v627
  %v678 = vadd.f32 %v677, %v629
  %v679 = vadd.f32 %v678, %v631
  %v680 = vadd.f32 %v679, %v633
  %v681 = vadd.f32 %v680, %v635
  %v682 = vadd.f32 %v681, %v637
  %v683 = vadd.f32 %v682, %v639
  %v684 = vadd.f32 %v683, %v641
  %v685 = vadd.f32 %v684, %v643
  %v686 = vadd.f32 %v685, %v645
  %v687 = vadd.f32 %v686, %v647
  %v688 = vadd.f32 %v687, %v649
  %v689 = vadd.f32 %v688, %v651
  %v690 = vadd.f32 %v689, %v653
  %v691 = vadd.f32 %v690, %v655
  %v692 = vrot.slane %v691, 4
  %v693 = vadd.f32 %v691, %v692
  %v694 = vrot.slane %v693, 2
  %v695 = vadd.f32 %v693, %v694
  %v696 = vrot.slane %v695, 1
  %v697 = vadd.f32 %v695, %v696
  %v698 = vmul.f32 %v676, 0.0078125
  %v699 = vmul.f32 %v697, 0.0078125
  %v700 = vmul.f32 %v622, %v622
  %v701 = vmul.f32 %v623, %v623
  %v702 = vsub.f32 %v698, %v700
  %v703 = vsub.f32 %v699, %v701
  %v704 = vmax.f32 %v702, 0.0
  %v705 = vmax.f32 %v703, 0.0
  %v706 = vsub.f32 %v500, %v622
  %v707 = vsub.f32 %v502, %v623
  %v708 = vsub.f32 %v504, %v622
  %v709 = vsub.f32 %v506, %v623
  %v710 = vsub.f32 %v510, %v622
  %v711 = vsub.f32 %v512, %v623
  %v712 = vsub.f32 %v514, %v622
  %v713 = vsub.f32 %v516, %v623
  %v714 = vsub.f32 %v520, %v622
  %v715 = vsub.f32 %v522, %v623
  %v716 = vsub.f32 %v524, %v622
  %v717 = vsub.f32 %v526, %v623
  %v718 = vsub.f32 %v530, %v622
  %v719 = vsub.f32 %v532, %v623
  %v720 = vsub.f32 %v534, %v622
  %v721 = vsub.f32 %v536, %v623
  %v722 = vsub.f32 %v540, %v622
  %v723 = vsub.f32 %v542, %v623
  %v724 = vsub.f32 %v544, %v622
  %v725 = vsub.f32 %v546, %v623
  %v726 = vsub.f32 %v550, %v622
  %v727 = vsub.f32 %v552, %v623
  %v728 = vsub.f32 %v554, %v622
  %v729 = vsub.f32 %v556, %v623
  %v730 = vsub.f32 %v560, %v622
  %v731 = vsub.f32 %v562, %v623
  %v732 = vsub.f32 %v564, %v622
  %v733 = vsub.f32 %v566, %v623
  %v734 = vsub.f32 %v570, %v622
  %v735 = vsub.f32 %v572, %v623
  %v736 = vsub.f32 %v574, %v622
  %v737 = vsub.f32 %v576, %v623
  %v738 = vadd.f32 %v704, 0.001
  %v739 = vadd.f32 %v705, 0.001
  %v740 = vrsqrt.pop %v738
  %v741 = vrsqrt.pop %v739
  %v742 = vmul.f32 %v706, %v740
  %v743 = vmul.f32 %v707, %v741
  %v744 = vmul.f32 %v708, %v740
  %v745 = vmul.f32 %v709, %v741
  %v746 = vmul.f32 %v710, %v740
  %v747 = vmul.f32 %v711, %v741
  %v748 = vmul.f32 %v712, %v740
  %v749 = vmul.f32 %v713, %v741
  %v750 = vmul.f32 %v714, %v740
  %v751 = vmul.f32 %v715, %v741
  %v752 = vmul.f32 %v716, %v740
  %v753 = vmul.f32 %v717, %v741
  %v754 = vmul.f32 %v718, %v740
  %v755 = vmul.f32 %v719, %v741
  %v756 = vmul.f32 %v720, %v740
  %v757 = vmul.f32 %v721, %v741
  %v758 = vmul.f32 %v722, %v740
  %v759 = vmul.f32 %v723, %v741
  %v760 = vmul.f32 %v724, %v740
  %v761 = vmul.f32 %v725, %v741
  %v762 = vmul.f32 %v726, %v740
  %v763 = vmul.f32 %v727, %v741
  %v764 = vmul.f32 %v728, %v740
  %v765 = vmul.f32 %v729, %v741
  %v766 = vmul.f32 %v730, %v740
  %v767 = vmul.f32 %v731, %v741
  %v768 = vmul.f32 %v732, %v740
  %v769 = vmul.f32 %v733, %v741
  %v770 = vmul.f32 %v734, %v740
  %v771 = vmul.f32 %v735, %v741
  %v772 = vmul.f32 %v736, %v740
  %v773 = vmul.f32 %v737, %v741
  %v775 = vlaneseq
  %v776 = vshrl.u32 %v775, 7
  %v777 = vsub.s32 0, %v776
  %v778 = vrot.slane %v578, %v777
  %v779 = vlaneseq
  %v780 = vshrl.u32 %v779, 7
  %v781 = vsub.s32 1, %v780
  %v782 = vrot.slane %v578, %v781
  %v785 = vmul.f32 %v742, %v778
  %v786 = vmul.f32 %v743, %v782
  %v787 = vmul.f32 %v744, %v778
  %v788 = vmul.f32 %v745, %v782
  %v789 = vmul.f32 %v746, %v778
  %v790 = vmul.f32 %v747, %v782
  %v791 = vmul.f32 %v748, %v778
  %v792 = vmul.f32 %v749, %v782
  %v793 = vmul.f32 %v750, %v778
  %v794 = vmul.f32 %v751, %v782
  %v795 = vmul.f32 %v752, %v778
  %v796 = vmul.f32 %v753, %v782
  %v797 = vmul.f32 %v754, %v778
  %v798 = vmul.f32 %v755, %v782
  %v799 = vmul.f32 %v756, %v778
  %v800 = vmul.f32 %v757, %v782
  %v801 = vmul.f32 %v758, %v778
  %v802 = vmul.f32 %v759, %v782
  %v803 = vmul.f32 %v760, %v778
  %v804 = vmul.f32 %v761, %v782
  %v805 = vmul.f32 %v762, %v778
  %v806 = vmul.f32 %v763, %v782
  %v807 = vmul.f32 %v764, %v778
  %v808 = vmul.f32 %v765, %v782
  %v809 = vmul.f32 %v766, %v778
  %v810 = vmul.f32 %v767, %v782
  %v811 = vmul.f32 %v768, %v778
  %v812 = vmul.f32 %v769, %v782
  %v813 = vmul.f32 %v770, %v778
  %v814 = vmul.f32 %v771, %v782
  %v815 = vmul.f32 %v772, %v778
  %v816 = vmul.f32 %v773, %v782
  %v818 = vlaneseq
  %v819 = vshrl.u32 %v818, 7
  %v820 = vsub.s32 0, %v819
  %v821 = vrot.slane %v579, %v820
  %v822 = vlaneseq
  %v823 = vshrl.u32 %v822, 7
  %v824 = vsub.s32 1, %v823
  %v825 = vrot.slane %v579, %v824
  %v828 = vadd.f32 %v785, %v821
  %v829 = vadd.f32 %v786, %v825
  %v830 = vadd.f32 %v787, %v821
  %v831 = vadd.f32 %v788, %v825
  %v832 = vadd.f32 %v789, %v821
  %v833 = vadd.f32 %v790, %v825
  %v834 = vadd.f32 %v791, %v821
  %v835 = vadd.f32 %v792, %v825
  %v836 = vadd.f32 %v793, %v821
  %v837 = vadd.f32 %v794, %v825
  %v838 = vadd.f32 %v795, %v821
  %v839 = vadd.f32 %v796, %v825
  %v840 = vadd.f32 %v797, %v821
  %v841 = vadd.f32 %v798, %v825
  %v842 = vadd.f32 %v799, %v821
  %v843 = vadd.f32 %v800, %v825
  %v844 = vadd.f32 %v801, %v821
  %v845 = vadd.f32 %v802, %v825
  %v846 = vadd.f32 %v803, %v821
  %v847 = vadd.f32 %v804, %v825
  %v848 = vadd.f32 %v805, %v821
  %v849 = vadd.f32 %v806, %v825
  %v850 = vadd.f32 %v807, %v821
  %v851 = vadd.f32 %v808, %v825
  %v852 = vadd.f32 %v809, %v821
  %v853 = vadd.f32 %v810, %v825
  %v854 = vadd.f32 %v811, %v821
  %v855 = vadd.f32 %v812, %v825
  %v856 = vadd.f32 %v813, %v821
  %v857 = vadd.f32 %v814, %v825
  %v858 = vadd.f32 %v815, %v821
  %v859 = vadd.f32 %v816, %v825
  %vm860 = vcmp.gt.f32.partialorder %v828, 0.0
  %vm861 = vcmp.gt.f32.partialorder %v829, 0.0
  %vm862 = vcmp.gt.f32.partialorder %v830, 0.0
  %vm863 = vcmp.gt.f32.partialorder %v831, 0.0
  %vm864 = vcmp.gt.f32.partialorder %v832, 0.0
  %vm865 = vcmp.gt.f32.partialorder %v833, 0.0
  %vm866 = vcmp.gt.f32.partialorder %v834, 0.0
  %vm867 = vcmp.gt.f32.partialorder %v835, 0.0
  %vm868 = vcmp.gt.f32.partialorder %v836, 0.0
  %vm869 = vcmp.gt.f32.partialorder %v837, 0.0
  %vm870 = vcmp.gt.f32.partialorder %v838, 0.0
  %vm871 = vcmp.gt.f32.partialorder %v839, 0.0
  %vm872 = vcmp.gt.f32.partialorder %v840, 0.0
  %vm873 = vcmp.gt.f32.partialorder %v841, 0.0
  %vm874 = vcmp.gt.f32.partialorder %v842, 0.0
  %vm875 = vcmp.gt.f32.partialorder %v843, 0.0
  %vm876 = vcmp.gt.f32.partialorder %v844, 0.0
  %vm877 = vcmp.gt.f32.partialorder %v845, 0.0
  %vm878 = vcmp.gt.f32.partialorder %v846, 0.0
  %vm879 = vcmp.gt.f32.partialorder %v847, 0.0
  %vm880 = vcmp.gt.f32.partialorder %v848, 0.0
  %vm881 = vcmp.gt.f32.partialorder %v849, 0.0
  %vm882 = vcmp.gt.f32.partialorder %v850, 0.0
  %vm883 = vcmp.gt.f32.partialorder %v851, 0.0
  %vm884 = vcmp.gt.f32.partialorder %v852, 0.0
  %vm885 = vcmp.gt.f32.partialorder %v853, 0.0
  %vm886 = vcmp.gt.f32.partialorder %v854, 0.0
  %vm887 = vcmp.gt.f32.partialorder %v855, 0.0
  %vm888 = vcmp.gt.f32.partialorder %v856, 0.0
  %vm889 = vcmp.gt.f32.partialorder %v857, 0.0
  %vm890 = vcmp.gt.f32.partialorder %v858, 0.0
  %vm891 = vcmp.gt.f32.partialorder %v859, 0.0
  %v892 = vmul.f32 %v828, 1.442695
  %v893 = vpow.pop %v892
  %v894 = vmul.f32 %v829, 1.442695
  %v895 = vpow.pop %v894
  %v896 = vmul.f32 %v830, 1.442695
  %v897 = vpow.pop %v896
  %v898 = vmul.f32 %v831, 1.442695
  %v899 = vpow.pop %v898
  %v900 = vmul.f32 %v832, 1.442695
  %v901 = vpow.pop %v900
  %v902 = vmul.f32 %v833, 1.442695
  %v903 = vpow.pop %v902
  %v904 = vmul.f32 %v834, 1.442695
  %v905 = vpow.pop %v904
  %v906 = vmul.f32 %v835, 1.442695
  %v907 = vpow.pop %v906
  %v908 = vmul.f32 %v836, 1.442695
  %v909 = vpow.pop %v908
  %v910 = vmul.f32 %v837, 1.442695
  %v911 = vpow.pop %v910
  %v912 = vmul.f32 %v838, 1.442695
  %v913 = vpow.pop %v912
  %v914 = vmul.f32 %v839, 1.442695
  %v915 = vpow.pop %v914
  %v916 = vmul.f32 %v840, 1.442695
  %v917 = vpow.pop %v916
  %v918 = vmul.f32 %v841, 1.442695
  %v919 = vpow.pop %v918
  %v920 = vmul.f32 %v842, 1.442695
  %v921 = vpow.pop %v920
  %v922 = vmul.f32 %v843, 1.442695
  %v923 = vpow.pop %v922
  %v924 = vmul.f32 %v844, 1.442695
  %v925 = vpow.pop %v924
  %v926 = vmul.f32 %v845, 1.442695
  %v927 = vpow.pop %v926
  %v928 = vmul.f32 %v846, 1.442695
  %v929 = vpow.pop %v928
  %v930 = vmul.f32 %v847, 1.442695
  %v931 = vpow.pop %v930
  %v932 = vmul.f32 %v848, 1.442695
  %v933 = vpow.pop %v932
  %v934 = vmul.f32 %v849, 1.442695
  %v935 = vpow.pop %v934
  %v936 = vmul.f32 %v850, 1.442695
  %v937 = vpow.pop %v936
  %v938 = vmul.f32 %v851, 1.442695
  %v939 = vpow.pop %v938
  %v940 = vmul.f32 %v852, 1.442695
  %v941 = vpow.pop %v940
  %v942 = vmul.f32 %v853, 1.442695
  %v943 = vpow.pop %v942
  %v944 = vmul.f32 %v854, 1.442695
  %v945 = vpow.pop %v944
  %v946 = vmul.f32 %v855, 1.442695
  %v947 = vpow.pop %v946
  %v948 = vmul.f32 %v856, 1.442695
  %v949 = vpow.pop %v948
  %v950 = vmul.f32 %v857, 1.442695
  %v951 = vpow.pop %v950
  %v952 = vmul.f32 %v858, 1.442695
  %v953 = vpow.pop %v952
  %v954 = vmul.f32 %v859, 1.442695
  %v955 = vpow.pop %v954
  %v956 = vsub.f32 %v893, 1.0
  %v957 = vsub.f32 %v895, 1.0
  %v958 = vsub.f32 %v897, 1.0
  %v959 = vsub.f32 %v899, 1.0
  %v960 = vsub.f32 %v901, 1.0
  %v961 = vsub.f32 %v903, 1.0
  %v962 = vsub.f32 %v905, 1.0
  %v963 = vsub.f32 %v907, 1.0
  %v964 = vsub.f32 %v909, 1.0
  %v965 = vsub.f32 %v911, 1.0
  %v966 = vsub.f32 %v913, 1.0
  %v967 = vsub.f32 %v915, 1.0
  %v968 = vsub.f32 %v917, 1.0
  %v969 = vsub.f32 %v919, 1.0
  %v970 = vsub.f32 %v921, 1.0
  %v971 = vsub.f32 %v923, 1.0
  %v972 = vsub.f32 %v925, 1.0
  %v973 = vsub.f32 %v927, 1.0
  %v974 = vsub.f32 %v929, 1.0
  %v975 = vsub.f32 %v931, 1.0
  %v976 = vsub.f32 %v933, 1.0
  %v977 = vsub.f32 %v935, 1.0
  %v978 = vsub.f32 %v937, 1.0
  %v979 = vsub.f32 %v939, 1.0
  %v980 = vsub.f32 %v941, 1.0
  %v981 = vsub.f32 %v943, 1.0
  %v982 = vsub.f32 %v945, 1.0
  %v983 = vsub.f32 %v947, 1.0
  %v984 = vsub.f32 %v949, 1.0
  %v985 = vsub.f32 %v951, 1.0
  %v986 = vsub.f32 %v953, 1.0
  %v987 = vsub.f32 %v955, 1.0
  %v988 = vmul.f32 %v956, 1.6732632
  %v989 = vmul.f32 %v957, 1.6732632
  %v990 = vmul.f32 %v958, 1.6732632
  %v991 = vmul.f32 %v959, 1.6732632
  %v992 = vmul.f32 %v960, 1.6732632
  %v993 = vmul.f32 %v961, 1.6732632
  %v994 = vmul.f32 %v962, 1.6732632
  %v995 = vmul.f32 %v963, 1.6732632
  %v996 = vmul.f32 %v964, 1.6732632
  %v997 = vmul.f32 %v965, 1.6732632
  %v998 = vmul.f32 %v966, 1.6732632
  %v999 = vmul.f32 %v967, 1.6732632
  %v1000 = vmul.f32 %v968, 1.6732632
  %v1001 = vmul.f32 %v969, 1.6732632
  %v1002 = vmul.f32 %v970, 1.6732632
  %v1003 = vmul.f32 %v971, 1.6732632
  %v1004 = vmul.f32 %v972, 1.6732632
  %v1005 = vmul.f32 %v973, 1.6732632
  %v1006 = vmul.f32 %v974, 1.6732632
  %v1007 = vmul.f32 %v975, 1.6732632
  %v1008 = vmul.f32 %v976, 1.6732632
  %v1009 = vmul.f32 %v977, 1.6732632
  %v1010 = vmul.f32 %v978, 1.6732632
  %v1011 = vmul.f32 %v979, 1.6732632
  %v1012 = vmul.f32 %v980, 1.6732632
  %v1013 = vmul.f32 %v981, 1.6732632
  %v1014 = vmul.f32 %v982, 1.6732632
  %v1015 = vmul.f32 %v983, 1.6732632
  %v1016 = vmul.f32 %v984, 1.6732632
  %v1017 = vmul.f32 %v985, 1.6732632
  %v1018 = vmul.f32 %v986, 1.6732632
  %v1019 = vmul.f32 %v987, 1.6732632
  %v1020 = vsel %vm860, %v828, %v988
  %v1021 = vsel %vm861, %v829, %v989
  %v1022 = vsel %vm862, %v830, %v990
  %v1023 = vsel %vm863, %v831, %v991
  %v1024 = vsel %vm864, %v832, %v992
  %v1025 = vsel %vm865, %v833, %v993
  %v1026 = vsel %vm866, %v834, %v994
  %v1027 = vsel %vm867, %v835, %v995
  %v1028 = vsel %vm868, %v836, %v996
  %v1029 = vsel %vm869, %v837, %v997
  %v1030 = vsel %vm870, %v838, %v998
  %v1031 = vsel %vm871, %v839, %v999
  %v1032 = vsel %vm872, %v840, %v1000
  %v1033 = vsel %vm873, %v841, %v1001
  %v1034 = vsel %vm874, %v842, %v1002
  %v1035 = vsel %vm875, %v843, %v1003
  %v1036 = vsel %vm876, %v844, %v1004
  %v1037 = vsel %vm877, %v845, %v1005
  %v1038 = vsel %vm878, %v846, %v1006
  %v1039 = vsel %vm879, %v847, %v1007
  %v1040 = vsel %vm880, %v848, %v1008
  %v1041 = vsel %vm881, %v849, %v1009
  %v1042 = vsel %vm882, %v850, %v1010
  %v1043 = vsel %vm883, %v851, %v1011
  %v1044 = vsel %vm884, %v852, %v1012
  %v1045 = vsel %vm885, %v853, %v1013
  %v1046 = vsel %vm886, %v854, %v1014
  %v1047 = vsel %vm887, %v855, %v1015
  %v1048 = vsel %vm888, %v856, %v1016
  %v1049 = vsel %vm889, %v857, %v1017
  %v1050 = vsel %vm890, %v858, %v1018
  %v1051 = vsel %vm891, %v859, %v1019
  %v1052 = vmul.f32 %v1020, 1.050701
  %v1053 = vmul.f32 %v1021, 1.050701
  %v1054 = vmul.f32 %v1022, 1.050701
  %v1055 = vmul.f32 %v1023, 1.050701
  %v1056 = vmul.f32 %v1024, 1.050701
  %v1057 = vmul.f32 %v1025, 1.050701
  %v1058 = vmul.f32 %v1026, 1.050701
  %v1059 = vmul.f32 %v1027, 1.050701
  %v1060 = vmul.f32 %v1028, 1.050701
  %v1061 = vmul.f32 %v1029, 1.050701
  %v1062 = vmul.f32 %v1030, 1.050701
  %v1063 = vmul.f32 %v1031, 1.050701
  %v1064 = vmul.f32 %v1032, 1.050701
  %v1065 = vmul.f32 %v1033, 1.050701
  %v1066 = vmul.f32 %v1034, 1.050701
  %v1067 = vmul.f32 %v1035, 1.050701
  %v1068 = vmul.f32 %v1036, 1.050701
  %v1069 = vmul.f32 %v1037, 1.050701
  %v1070 = vmul.f32 %v1038, 1.050701
  %v1071 = vmul.f32 %v1039, 1.050701
  %v1072 = vmul.f32 %v1040, 1.050701
  %v1073 = vmul.f32 %v1041, 1.050701
  %v1074 = vmul.f32 %v1042, 1.050701
  %v1075 = vmul.f32 %v1043, 1.050701
  %v1076 = vmul.f32 %v1044, 1.050701
  %v1077 = vmul.f32 %v1045, 1.050701
  %v1078 = vmul.f32 %v1046, 1.050701
  %v1079 = vmul.f32 %v1047, 1.050701
  %v1080 = vmul.f32 %v1048, 1.050701
  %v1081 = vmul.f32 %v1049, 1.050701
  %v1082 = vmul.f32 %v1050, 1.050701
  %v1083 = vmul.f32 %v1051, 1.050701
  %v1084 = vpack.c.bf16 %v1054, %v1052
  %v1085 = vpack.c.bf16 %v1055, %v1053
  %v1086 = vpack.c.bf16 %v1058, %v1056
  %v1087 = vpack.c.bf16 %v1059, %v1057
  %v1088 = vpack.c.bf16 %v1062, %v1060
  %v1089 = vpack.c.bf16 %v1063, %v1061
  %v1090 = vpack.c.bf16 %v1066, %v1064
  %v1091 = vpack.c.bf16 %v1067, %v1065
  %v1092 = vpack.c.bf16 %v1070, %v1068
  %v1093 = vpack.c.bf16 %v1071, %v1069
  %v1094 = vpack.c.bf16 %v1074, %v1072
  %v1095 = vpack.c.bf16 %v1075, %v1073
  %v1096 = vpack.c.bf16 %v1078, %v1076
  %v1097 = vpack.c.bf16 %v1079, %v1077
  %v1098 = vpack.c.bf16 %v1082, %v1080
  %v1099 = vpack.c.bf16 %v1083, %v1081
  %v1100 = vld [vmem:[%s7] sm:$0xf]
  %v1101 = vld [vmem:[%s7 + $0x4] sm:$0xf]
  %v1102 = vld [vmem:[%s7 + $0x8] sm:$0xf]
  %v1103 = vld [vmem:[%s7 + $0xc] sm:$0xf]
  %v1104 = vld [vmem:[%s7 + $0x10] sm:$0xf]
  %v1105 = vld [vmem:[%s7 + $0x14] sm:$0xf]
  %v1106 = vld [vmem:[%s7 + $0x18] sm:$0xf]
  %v1107 = vld [vmem:[%s7 + $0x1c] sm:$0xf]
  %v1108 = vld [vmem:[%s7 + $0x20] sm:$0xf]
  %v1109 = vld [vmem:[%s7 + $0x24] sm:$0xf]
  %v1110 = vld [vmem:[%s7 + $0x28] sm:$0xf]
  %v1111 = vld [vmem:[%s7 + $0x2c] sm:$0xf]
  %v1112 = vld [vmem:[%s7 + $0x30] sm:$0xf]
  %v1113 = vld [vmem:[%s7 + $0x34] sm:$0xf]
  %v1114 = vld [vmem:[%s7 + $0x38] sm:$0xf]
  %v1115 = vld [vmem:[%s7 + $0x3c] sm:$0xf]
  %v1116 = vld [vmem:[%s7 + $0x40] sm:$0xf]
  %v1117 = vld [vmem:[%s7 + $0x44] sm:$0xf]
  %v1118 = vld [vmem:[%s7 + $0x48] sm:$0xf]
  %v1119 = vld [vmem:[%s7 + $0x4c] sm:$0xf]
  %v1120 = vld [vmem:[%s7 + $0x50] sm:$0xf]
  %v1121 = vld [vmem:[%s7 + $0x54] sm:$0xf]
  %v1122 = vld [vmem:[%s7 + $0x58] sm:$0xf]
  %v1123 = vld [vmem:[%s7 + $0x5c] sm:$0xf]
  %v1124 = vld [vmem:[%s7 + $0x60] sm:$0xf]
  %v1125 = vld [vmem:[%s7 + $0x64] sm:$0xf]
  %v1126 = vld [vmem:[%s7 + $0x68] sm:$0xf]
  %v1127 = vld [vmem:[%s7 + $0x6c] sm:$0xf]
  %v1128 = vld [vmem:[%s7 + $0x70] sm:$0xf]
  %v1129 = vld [vmem:[%s7 + $0x74] sm:$0xf]
  %v1130 = vld [vmem:[%s7 + $0x78] sm:$0xf]
  %v1131 = vld [vmem:[%s7 + $0x7c] sm:$0xf]
  %v1132 = vld [vmem:[%s8] sm:$0x1]
  %v1134 = vlaneseq
  %v1135 = vshrl.u32 %v1134, 7
  %v1136 = vsub.s32 0, %v1135
  %v1137 = vrot.slane %v1132, %v1136
  %v1171 = vunpack.c.l.b16 %v1100
  %v1172 = vunpack.c.l.b16 %v1101
  %v1173 = vunpack.c.l.b16 %v1102
  %v1174 = vunpack.c.l.b16 %v1103
  %v1175 = vunpack.c.l.b16 %v1104
  %v1176 = vunpack.c.l.b16 %v1105
  %v1177 = vunpack.c.l.b16 %v1106
  %v1178 = vunpack.c.l.b16 %v1107
  %v1179 = vunpack.c.l.b16 %v1108
  %v1180 = vunpack.c.l.b16 %v1109
  %v1181 = vunpack.c.l.b16 %v1110
  %v1182 = vunpack.c.l.b16 %v1111
  %v1183 = vunpack.c.l.b16 %v1112
  %v1184 = vunpack.c.l.b16 %v1113
  %v1185 = vunpack.c.l.b16 %v1114
  %v1186 = vunpack.c.l.b16 %v1115
  %v1187 = vunpack.c.l.b16 %v1116
  %v1188 = vunpack.c.l.b16 %v1117
  %v1189 = vunpack.c.l.b16 %v1118
  %v1190 = vunpack.c.l.b16 %v1119
  %v1191 = vunpack.c.l.b16 %v1120
  %v1192 = vunpack.c.l.b16 %v1121
  %v1193 = vunpack.c.l.b16 %v1122
  %v1194 = vunpack.c.l.b16 %v1123
  %v1195 = vunpack.c.l.b16 %v1124
  %v1196 = vunpack.c.l.b16 %v1125
  %v1197 = vunpack.c.l.b16 %v1126
  %v1198 = vunpack.c.l.b16 %v1127
  %v1199 = vunpack.c.l.b16 %v1128
  %v1200 = vunpack.c.l.b16 %v1129
  %v1201 = vunpack.c.l.b16 %v1130
  %v1202 = vunpack.c.l.b16 %v1131
  %v1203 = vpack.c.b16 %v1172, %v1171
  %v1204 = vpack.c.b16 %v1174, %v1173
  %v1205 = vpack.c.b16 %v1176, %v1175
  %v1206 = vpack.c.b16 %v1178, %v1177
  %v1207 = vpack.c.b16 %v1180, %v1179
  %v1208 = vpack.c.b16 %v1182, %v1181
  %v1209 = vpack.c.b16 %v1184, %v1183
  %v1210 = vpack.c.b16 %v1186, %v1185
  %v1211 = vpack.c.b16 %v1188, %v1187
  %v1212 = vpack.c.b16 %v1190, %v1189
  %v1213 = vpack.c.b16 %v1192, %v1191
  %v1214 = vpack.c.b16 %v1194, %v1193
  %v1215 = vpack.c.b16 %v1196, %v1195
  %v1216 = vpack.c.b16 %v1198, %v1197
  %v1217 = vpack.c.b16 %v1200, %v1199
  %v1218 = vpack.c.b16 %v1202, %v1201
  %1235 = vmatprep.subr.bf16.mxu0 0
  %1236 = vmatpush1.bf16.msra.mxu0 %v1203
  %1237 = vmatprep.subr.bf16.mxu0 0
  %1238 = vmatpush1.bf16.msra.mxu0 %v1204
  %1239 = vmatprep.subr.bf16.mxu0 0
  %1240 = vmatpush1.bf16.msra.mxu0 %v1205
  %1241 = vmatprep.subr.bf16.mxu0 0
  %1242 = vmatpush1.bf16.msra.mxu0 %v1206
  %1243 = vmatprep.subr.bf16.mxu0 0
  %1244 = vmatpush1.bf16.msra.mxu0 %v1207
  %1245 = vmatprep.subr.bf16.mxu0 0
  %1246 = vmatpush1.bf16.msra.mxu0 %v1208
  %1247 = vmatprep.subr.bf16.mxu0 0
  %1248 = vmatpush1.bf16.msra.mxu0 %v1209
  %1249 = vmatprep.subr.bf16.mxu0 0
  %1250 = vmatpush1.bf16.msra.mxu0 %v1210
  %1251 = vmatprep.subr.bf16.mxu0 0
  %1252 = vmatpush1.bf16.msra.mxu0 %v1211
  %1253 = vmatprep.subr.bf16.mxu0 0
  %1254 = vmatpush1.bf16.msra.mxu0 %v1212
  %1255 = vmatprep.subr.bf16.mxu0 0
  %1256 = vmatpush1.bf16.msra.mxu0 %v1213
  %1257 = vmatprep.subr.bf16.mxu0 0
  %1258 = vmatpush1.bf16.msra.mxu0 %v1214
  %1259 = vmatprep.subr.bf16.mxu0 0
  %1260 = vmatpush1.bf16.msra.mxu0 %v1215
  %1261 = vmatprep.subr.bf16.mxu0 0
  %1262 = vmatpush1.bf16.msra.mxu0 %v1216
  %1263 = vmatprep.subr.bf16.mxu0 0
  %1264 = vmatpush1.bf16.msra.mxu0 %v1217
  %1265 = vmatprep.subr.bf16.mxu0 0
  %1266 = vmatpush1.bf16.msra.mxu0 %v1218
  %1267 = vmatprep.mubr.bf16.mxu0 %v1085
  %1268 = vmatmul.mubr.bf16.gmra.mrb[0].mxu0 %v1084
  %v1269 = vpop.f32.mrb[0].mxu0
  %v1270 = vadd.f32 %v1137, %v1269
  %v1271 = vpop.f32.mrb[0].mxu0
  %v1272 = vpop.f32.mrb[0].mxu0
  %v1273 = vadd.f32 %v1137, %v1272
  %v1274 = vpop.f32.mrb[0].mxu0
  %1275 = vmatprep.mubr.bf16.mxu0 %v1087
  %1276 = vmatmul.mubr.bf16.gmra.mrb[0].mxu0 %v1086
  %v1277 = vpop.f32.mrb[0].mxu0
  %v1278 = vadd.f32 %v1137, %v1277
  %v1279 = vpop.f32.mrb[0].mxu0
  %v1280 = vpop.f32.mrb[0].mxu0
  %v1281 = vadd.f32 %v1137, %v1280
  %v1282 = vpop.f32.mrb[0].mxu0
  %1283 = vmatprep.mubr.bf16.mxu0 %v1089
  %1284 = vmatmul.mubr.bf16.gmra.mrb[0].mxu0 %v1088
  %v1285 = vpop.f32.mrb[0].mxu0
  %v1286 = vadd.f32 %v1137, %v1285
  %v1287 = vpop.f32.mrb[0].mxu0
  %v1288 = vpop.f32.mrb[0].mxu0
  %v1289 = vadd.f32 %v1137, %v1288
  %v1290 = vpop.f32.mrb[0].mxu0
  %1291 = vmatprep.mubr.bf16.mxu0 %v1091
  %1292 = vmatmul.mubr.bf16.gmra.mrb[0].mxu0 %v1090
  %v1293 = vpop.f32.mrb[0].mxu0
  %v1294 = vadd.f32 %v1137, %v1293
  %v1295 = vpop.f32.mrb[0].mxu0
  %v1296 = vpop.f32.mrb[0].mxu0
  %v1297 = vadd.f32 %v1137, %v1296
  %v1298 = vpop.f32.mrb[0].mxu0
  %1299 = vmatprep.mubr.bf16.mxu0 %v1093
  %1300 = vmatmul.mubr.bf16.gmra.mrb[0].mxu0 %v1092
  %v1301 = vpop.f32.mrb[0].mxu0
  %v1302 = vadd.f32 %v1137, %v1301
  %v1303 = vpop.f32.mrb[0].mxu0
  %v1304 = vpop.f32.mrb[0].mxu0
  %v1305 = vadd.f32 %v1137, %v1304
  %v1306 = vpop.f32.mrb[0].mxu0
  %1307 = vmatprep.mubr.bf16.mxu0 %v1095
  %1308 = vmatmul.mubr.bf16.gmra.mrb[0].mxu0 %v1094
  %v1309 = vpop.f32.mrb[0].mxu0
  %v1310 = vadd.f32 %v1137, %v1309
  %v1311 = vpop.f32.mrb[0].mxu0
  %v1312 = vpop.f32.mrb[0].mxu0
  %v1313 = vadd.f32 %v1137, %v1312
  %v1314 = vpop.f32.mrb[0].mxu0
  %1315 = vmatprep.mubr.bf16.mxu0 %v1097
  %1316 = vmatmul.mubr.bf16.gmra.mrb[0].mxu0 %v1096
  %v1317 = vpop.f32.mrb[0].mxu0
  %v1318 = vadd.f32 %v1137, %v1317
  %v1319 = vpop.f32.mrb[0].mxu0
  %v1320 = vpop.f32.mrb[0].mxu0
  %v1321 = vadd.f32 %v1137, %v1320
  %v1322 = vpop.f32.mrb[0].mxu0
  %1323 = vmatprep.mubr.bf16.mxu0 %v1099
  %1324 = vmatmul.mubr.bf16.gmra.mrb[0].mxu0 %v1098
  %v1325 = vpop.f32.mrb[0].mxu0
  %v1326 = vadd.f32 %v1137, %v1325
  %v1327 = vpop.f32.mrb[0].mxu0
  %v1328 = vpop.f32.mrb[0].mxu0
  %v1329 = vadd.f32 %v1137, %v1328
  %v1330 = vpop.f32.mrb[0].mxu0
  %1331 = vdwg.mxu0
  %v1332 = vld [vmem:[%s9] sm:$0x1]
  %v1333 = vld [vmem:[%s10] sm:$0x1]
  %v1334 = vadd.f32 %v1270, %v1273
  %v1335 = vadd.f32 %v1334, %v1278
  %v1336 = vadd.f32 %v1335, %v1281
  %v1337 = vadd.f32 %v1336, %v1286
  %v1338 = vadd.f32 %v1337, %v1289
  %v1339 = vadd.f32 %v1338, %v1294
  %v1340 = vadd.f32 %v1339, %v1297
  %v1341 = vadd.f32 %v1340, %v1302
  %v1342 = vadd.f32 %v1341, %v1305
  %v1343 = vadd.f32 %v1342, %v1310
  %v1344 = vadd.f32 %v1343, %v1313
  %v1345 = vadd.f32 %v1344, %v1318
  %v1346 = vadd.f32 %v1345, %v1321
  %v1347 = vadd.f32 %v1346, %v1326
  %v1348 = vadd.f32 %v1347, %v1329
  %v1349 = vrot.slane %v1348, 4
  %v1350 = vadd.f32 %v1348, %v1349
  %v1351 = vrot.slane %v1350, 2
  %v1352 = vadd.f32 %v1350, %v1351
  %v1353 = vrot.slane %v1352, 1
  %v1354 = vadd.f32 %v1352, %v1353
  %v1355 = vmul.f32 %v1354, 0.0078125
  %v1356 = vmul.f32 %v1270, %v1270
  %v1357 = vmul.f32 %v1273, %v1273
  %v1358 = vmul.f32 %v1278, %v1278
  %v1359 = vmul.f32 %v1281, %v1281
  %v1360 = vmul.f32 %v1286, %v1286
  %v1361 = vmul.f32 %v1289, %v1289
  %v1362 = vmul.f32 %v1294, %v1294
  %v1363 = vmul.f32 %v1297, %v1297
  %v1364 = vmul.f32 %v1302, %v1302
  %v1365 = vmul.f32 %v1305, %v1305
  %v1366 = vmul.f32 %v1310, %v1310
  %v1367 = vmul.f32 %v1313, %v1313
  %v1368 = vmul.f32 %v1318, %v1318
  %v1369 = vmul.f32 %v1321, %v1321
  %v1370 = vmul.f32 %v1326, %v1326
  %v1371 = vmul.f32 %v1329, %v1329
  %v1372 = vadd.f32 %v1356, %v1357
  %v1373 = vadd.f32 %v1372, %v1358
  %v1374 = vadd.f32 %v1373, %v1359
  %v1375 = vadd.f32 %v1374, %v1360
  %v1376 = vadd.f32 %v1375, %v1361
  %v1377 = vadd.f32 %v1376, %v1362
  %v1378 = vadd.f32 %v1377, %v1363
  %v1379 = vadd.f32 %v1378, %v1364
  %v1380 = vadd.f32 %v1379, %v1365
  %v1381 = vadd.f32 %v1380, %v1366
  %v1382 = vadd.f32 %v1381, %v1367
  %v1383 = vadd.f32 %v1382, %v1368
  %v1384 = vadd.f32 %v1383, %v1369
  %v1385 = vadd.f32 %v1384, %v1370
  %v1386 = vadd.f32 %v1385, %v1371
  %v1387 = vrot.slane %v1386, 4
  %v1388 = vadd.f32 %v1386, %v1387
  %v1389 = vrot.slane %v1388, 2
  %v1390 = vadd.f32 %v1388, %v1389
  %v1391 = vrot.slane %v1390, 1
  %v1392 = vadd.f32 %v1390, %v1391
  %v1393 = vmul.f32 %v1392, 0.0078125
  %v1394 = vmul.f32 %v1355, %v1355
  %v1395 = vsub.f32 %v1393, %v1394
  %v1396 = vmax.f32 %v1395, 0.0
  %v1397 = vsub.f32 %v1270, %v1355
  %v1398 = vsub.f32 %v1273, %v1355
  %v1399 = vsub.f32 %v1278, %v1355
  %v1400 = vsub.f32 %v1281, %v1355
  %v1401 = vsub.f32 %v1286, %v1355
  %v1402 = vsub.f32 %v1289, %v1355
  %v1403 = vsub.f32 %v1294, %v1355
  %v1404 = vsub.f32 %v1297, %v1355
  %v1405 = vsub.f32 %v1302, %v1355
  %v1406 = vsub.f32 %v1305, %v1355
  %v1407 = vsub.f32 %v1310, %v1355
  %v1408 = vsub.f32 %v1313, %v1355
  %v1409 = vsub.f32 %v1318, %v1355
  %v1410 = vsub.f32 %v1321, %v1355
  %v1411 = vsub.f32 %v1326, %v1355
  %v1412 = vsub.f32 %v1329, %v1355
  %v1413 = vadd.f32 %v1396, 0.001
  %v1414 = vrsqrt.pop %v1413
  %v1415 = vmul.f32 %v1397, %v1414
  %v1416 = vmul.f32 %v1398, %v1414
  %v1417 = vmul.f32 %v1399, %v1414
  %v1418 = vmul.f32 %v1400, %v1414
  %v1419 = vmul.f32 %v1401, %v1414
  %v1420 = vmul.f32 %v1402, %v1414
  %v1421 = vmul.f32 %v1403, %v1414
  %v1422 = vmul.f32 %v1404, %v1414
  %v1423 = vmul.f32 %v1405, %v1414
  %v1424 = vmul.f32 %v1406, %v1414
  %v1425 = vmul.f32 %v1407, %v1414
  %v1426 = vmul.f32 %v1408, %v1414
  %v1427 = vmul.f32 %v1409, %v1414
  %v1428 = vmul.f32 %v1410, %v1414
  %v1429 = vmul.f32 %v1411, %v1414
  %v1430 = vmul.f32 %v1412, %v1414
  %v1432 = vlaneseq
  %v1433 = vshrl.u32 %v1432, 7
  %v1434 = vsub.s32 0, %v1433
  %v1435 = vrot.slane %v1332, %v1434
  %v1437 = vmul.f32 %v1415, %v1435
  %v1438 = vmul.f32 %v1416, %v1435
  %v1439 = vmul.f32 %v1417, %v1435
  %v1440 = vmul.f32 %v1418, %v1435
  %v1441 = vmul.f32 %v1419, %v1435
  %v1442 = vmul.f32 %v1420, %v1435
  %v1443 = vmul.f32 %v1421, %v1435
  %v1444 = vmul.f32 %v1422, %v1435
  %v1445 = vmul.f32 %v1423, %v1435
  %v1446 = vmul.f32 %v1424, %v1435
  %v1447 = vmul.f32 %v1425, %v1435
  %v1448 = vmul.f32 %v1426, %v1435
  %v1449 = vmul.f32 %v1427, %v1435
  %v1450 = vmul.f32 %v1428, %v1435
  %v1451 = vmul.f32 %v1429, %v1435
  %v1452 = vmul.f32 %v1430, %v1435
  %v1454 = vlaneseq
  %v1455 = vshrl.u32 %v1454, 7
  %v1456 = vsub.s32 0, %v1455
  %v1457 = vrot.slane %v1333, %v1456
  %v1459 = vadd.f32 %v1437, %v1457
  %v1460 = vadd.f32 %v1438, %v1457
  %v1461 = vadd.f32 %v1439, %v1457
  %v1462 = vadd.f32 %v1440, %v1457
  %v1463 = vadd.f32 %v1441, %v1457
  %v1464 = vadd.f32 %v1442, %v1457
  %v1465 = vadd.f32 %v1443, %v1457
  %v1466 = vadd.f32 %v1444, %v1457
  %v1467 = vadd.f32 %v1445, %v1457
  %v1468 = vadd.f32 %v1446, %v1457
  %v1469 = vadd.f32 %v1447, %v1457
  %v1470 = vadd.f32 %v1448, %v1457
  %v1471 = vadd.f32 %v1449, %v1457
  %v1472 = vadd.f32 %v1450, %v1457
  %v1473 = vadd.f32 %v1451, %v1457
  %v1474 = vadd.f32 %v1452, %v1457
  %vm1475 = vcmp.gt.f32.partialorder %v1459, 0.0
  %vm1476 = vcmp.gt.f32.partialorder %v1460, 0.0
  %vm1477 = vcmp.gt.f32.partialorder %v1461, 0.0
  %vm1478 = vcmp.gt.f32.partialorder %v1462, 0.0
  %vm1479 = vcmp.gt.f32.partialorder %v1463, 0.0
  %vm1480 = vcmp.gt.f32.partialorder %v1464, 0.0
  %vm1481 = vcmp.gt.f32.partialorder %v1465, 0.0
  %vm1482 = vcmp.gt.f32.partialorder %v1466, 0.0
  %vm1483 = vcmp.gt.f32.partialorder %v1467, 0.0
  %vm1484 = vcmp.gt.f32.partialorder %v1468, 0.0
  %vm1485 = vcmp.gt.f32.partialorder %v1469, 0.0
  %vm1486 = vcmp.gt.f32.partialorder %v1470, 0.0
  %vm1487 = vcmp.gt.f32.partialorder %v1471, 0.0
  %vm1488 = vcmp.gt.f32.partialorder %v1472, 0.0
  %vm1489 = vcmp.gt.f32.partialorder %v1473, 0.0
  %vm1490 = vcmp.gt.f32.partialorder %v1474, 0.0
  %v1491 = vmul.f32 %v1459, 1.442695
  %v1492 = vpow.pop %v1491
  %v1493 = vmul.f32 %v1460, 1.442695
  %v1494 = vpow.pop %v1493
  %v1495 = vmul.f32 %v1461, 1.442695
  %v1496 = vpow.pop %v1495
  %v1497 = vmul.f32 %v1462, 1.442695
  %v1498 = vpow.pop %v1497
  %v1499 = vmul.f32 %v1463, 1.442695
  %v1500 = vpow.pop %v1499
  %v1501 = vmul.f32 %v1464, 1.442695
  %v1502 = vpow.pop %v1501
  %v1503 = vmul.f32 %v1465, 1.442695
  %v1504 = vpow.pop %v1503
  %v1505 = vmul.f32 %v1466, 1.442695
  %v1506 = vpow.pop %v1505
  %v1507 = vmul.f32 %v1467, 1.442695
  %v1508 = vpow.pop %v1507
  %v1509 = vmul.f32 %v1468, 1.442695
  %v1510 = vpow.pop %v1509
  %v1511 = vmul.f32 %v1469, 1.442695
  %v1512 = vpow.pop %v1511
  %v1513 = vmul.f32 %v1470, 1.442695
  %v1514 = vpow.pop %v1513
  %v1515 = vmul.f32 %v1471, 1.442695
  %v1516 = vpow.pop %v1515
  %v1517 = vmul.f32 %v1472, 1.442695
  %v1518 = vpow.pop %v1517
  %v1519 = vmul.f32 %v1473, 1.442695
  %v1520 = vpow.pop %v1519
  %v1521 = vmul.f32 %v1474, 1.442695
  %v1522 = vpow.pop %v1521
  %v1523 = vsub.f32 %v1492, 1.0
  %v1524 = vsub.f32 %v1494, 1.0
  %v1525 = vsub.f32 %v1496, 1.0
  %v1526 = vsub.f32 %v1498, 1.0
  %v1527 = vsub.f32 %v1500, 1.0
  %v1528 = vsub.f32 %v1502, 1.0
  %v1529 = vsub.f32 %v1504, 1.0
  %v1530 = vsub.f32 %v1506, 1.0
  %v1531 = vsub.f32 %v1508, 1.0
  %v1532 = vsub.f32 %v1510, 1.0
  %v1533 = vsub.f32 %v1512, 1.0
  %v1534 = vsub.f32 %v1514, 1.0
  %v1535 = vsub.f32 %v1516, 1.0
  %v1536 = vsub.f32 %v1518, 1.0
  %v1537 = vsub.f32 %v1520, 1.0
  %v1538 = vsub.f32 %v1522, 1.0
  %v1539 = vmul.f32 %v1523, 1.6732632
  %v1540 = vmul.f32 %v1524, 1.6732632
  %v1541 = vmul.f32 %v1525, 1.6732632
  %v1542 = vmul.f32 %v1526, 1.6732632
  %v1543 = vmul.f32 %v1527, 1.6732632
  %v1544 = vmul.f32 %v1528, 1.6732632
  %v1545 = vmul.f32 %v1529, 1.6732632
  %v1546 = vmul.f32 %v1530, 1.6732632
  %v1547 = vmul.f32 %v1531, 1.6732632
  %v1548 = vmul.f32 %v1532, 1.6732632
  %v1549 = vmul.f32 %v1533, 1.6732632
  %v1550 = vmul.f32 %v1534, 1.6732632
  %v1551 = vmul.f32 %v1535, 1.6732632
  %v1552 = vmul.f32 %v1536, 1.6732632
  %v1553 = vmul.f32 %v1537, 1.6732632
  %v1554 = vmul.f32 %v1538, 1.6732632
  %v1555 = vsel %vm1475, %v1459, %v1539
  %v1556 = vsel %vm1476, %v1460, %v1540
  %v1557 = vsel %vm1477, %v1461, %v1541
  %v1558 = vsel %vm1478, %v1462, %v1542
  %v1559 = vsel %vm1479, %v1463, %v1543
  %v1560 = vsel %vm1480, %v1464, %v1544
  %v1561 = vsel %vm1481, %v1465, %v1545
  %v1562 = vsel %vm1482, %v1466, %v1546
  %v1563 = vsel %vm1483, %v1467, %v1547
  %v1564 = vsel %vm1484, %v1468, %v1548
  %v1565 = vsel %vm1485, %v1469, %v1549
  %v1566 = vsel %vm1486, %v1470, %v1550
  %v1567 = vsel %vm1487, %v1471, %v1551
  %v1568 = vsel %vm1488, %v1472, %v1552
  %v1569 = vsel %vm1489, %v1473, %v1553
  %v1570 = vsel %vm1490, %v1474, %v1554
  %v1571 = vmul.f32 %v1555, 1.050701
  %v1572 = vmul.f32 %v1556, 1.050701
  %v1573 = vmul.f32 %v1557, 1.050701
  %v1574 = vmul.f32 %v1558, 1.050701
  %v1575 = vmul.f32 %v1559, 1.050701
  %v1576 = vmul.f32 %v1560, 1.050701
  %v1577 = vmul.f32 %v1561, 1.050701
  %v1578 = vmul.f32 %v1562, 1.050701
  %v1579 = vmul.f32 %v1563, 1.050701
  %v1580 = vmul.f32 %v1564, 1.050701
  %v1581 = vmul.f32 %v1565, 1.050701
  %v1582 = vmul.f32 %v1566, 1.050701
  %v1583 = vmul.f32 %v1567, 1.050701
  %v1584 = vmul.f32 %v1568, 1.050701
  %v1585 = vmul.f32 %v1569, 1.050701
  %v1586 = vmul.f32 %v1570, 1.050701
  %v1587 = vmin.f32 %v1571, 10000000.0
  %v1588 = vmin.f32 %v1572, 10000000.0
  %v1589 = vmin.f32 %v1573, 10000000.0
  %v1590 = vmin.f32 %v1574, 10000000.0
  %v1591 = vmin.f32 %v1575, 10000000.0
  %v1592 = vmin.f32 %v1576, 10000000.0
  %v1593 = vmin.f32 %v1577, 10000000.0
  %v1594 = vmin.f32 %v1578, 10000000.0
  %v1595 = vmin.f32 %v1579, 10000000.0
  %v1596 = vmin.f32 %v1580, 10000000.0
  %v1597 = vmin.f32 %v1581, 10000000.0
  %v1598 = vmin.f32 %v1582, 10000000.0
  %v1599 = vmin.f32 %v1583, 10000000.0
  %v1600 = vmin.f32 %v1584, 10000000.0
  %v1601 = vmin.f32 %v1585, 10000000.0
  %v1602 = vmin.f32 %v1586, 10000000.0
  %v1603 = vpack.c.bf16 %v1588, %v1587
  %v1604 = vpack.c.bf16 %v1590, %v1589
  %v1605 = vpack.c.bf16 %v1592, %v1591
  %v1606 = vpack.c.bf16 %v1594, %v1593
  %v1607 = vpack.c.bf16 %v1596, %v1595
  %v1608 = vpack.c.bf16 %v1598, %v1597
  %v1609 = vpack.c.bf16 %v1600, %v1599
  %v1610 = vpack.c.bf16 %v1602, %v1601
  %v1611 = vld [vmem:[%s11] sm:$0xf]
  %v1612 = vld [vmem:[%s11 + $0x4] sm:$0xf]
  %v1613 = vld [vmem:[%s11 + $0x8] sm:$0xf]
  %v1614 = vld [vmem:[%s11 + $0xc] sm:$0xf]
  %v1615 = vld [vmem:[%s11 + $0x10] sm:$0xf]
  %v1616 = vld [vmem:[%s11 + $0x14] sm:$0xf]
  %v1617 = vld [vmem:[%s11 + $0x18] sm:$0xf]
  %v1618 = vld [vmem:[%s11 + $0x1c] sm:$0xf]
  %v1619 = vld [vmem:[%s11 + $0x20] sm:$0xf]
  %v1620 = vld [vmem:[%s11 + $0x24] sm:$0xf]
  %v1621 = vld [vmem:[%s11 + $0x28] sm:$0xf]
  %v1622 = vld [vmem:[%s11 + $0x2c] sm:$0xf]
  %v1623 = vld [vmem:[%s11 + $0x30] sm:$0xf]
  %v1624 = vld [vmem:[%s11 + $0x34] sm:$0xf]
  %v1625 = vld [vmem:[%s11 + $0x38] sm:$0xf]
  %v1626 = vld [vmem:[%s11 + $0x3c] sm:$0xf]
  %v1627 = vld [vmem:[%s12] sm:$0x1]
  %v1629 = vlaneseq
  %v1630 = vshrl.u32 %v1629, 7
  %v1631 = vsub.s32 0, %v1630
  %v1632 = vrot.slane %v1627, %v1631
  %v1650 = vunpack.c.l.b16 %v1611
  %v1651 = vunpack.c.l.b16 %v1612
  %v1652 = vunpack.c.l.b16 %v1613
  %v1653 = vunpack.c.l.b16 %v1614
  %v1654 = vunpack.c.l.b16 %v1615
  %v1655 = vunpack.c.l.b16 %v1616
  %v1656 = vunpack.c.l.b16 %v1617
  %v1657 = vunpack.c.l.b16 %v1618
  %v1658 = vunpack.c.l.b16 %v1619
  %v1659 = vunpack.c.l.b16 %v1620
  %v1660 = vunpack.c.l.b16 %v1621
  %v1661 = vunpack.c.l.b16 %v1622
  %v1662 = vunpack.c.l.b16 %v1623
  %v1663 = vunpack.c.l.b16 %v1624
  %v1664 = vunpack.c.l.b16 %v1625
  %v1665 = vunpack.c.l.b16 %v1626
  %v1666 = vpack.c.b16 %v1651, %v1650
  %v1667 = vpack.c.b16 %v1653, %v1652
  %v1668 = vpack.c.b16 %v1655, %v1654
  %v1669 = vpack.c.b16 %v1657, %v1656
  %v1670 = vpack.c.b16 %v1659, %v1658
  %v1671 = vpack.c.b16 %v1661, %v1660
  %v1672 = vpack.c.b16 %v1663, %v1662
  %v1673 = vpack.c.b16 %v1665, %v1664
  %1682 = vmatprep.subr.bf16.mxu0 0
  %1683 = vmatpush1.bf16.msra.mxu0 %v1666
  %1684 = vmatprep.subr.bf16.mxu0 0
  %1685 = vmatpush1.bf16.msra.mxu0 %v1667
  %1686 = vmatprep.subr.bf16.mxu0 0
  %1687 = vmatpush1.bf16.msra.mxu0 %v1668
  %1688 = vmatprep.subr.bf16.mxu0 0
  %1689 = vmatpush1.bf16.msra.mxu0 %v1669
  %1690 = vmatprep.subr.bf16.mxu0 0
  %1691 = vmatpush1.bf16.msra.mxu0 %v1670
  %1692 = vmatprep.subr.bf16.mxu0 0
  %1693 = vmatpush1.bf16.msra.mxu0 %v1671
  %1694 = vmatprep.subr.bf16.mxu0 0
  %1695 = vmatpush1.bf16.msra.mxu0 %v1672
  %1696 = vmatprep.subr.bf16.mxu0 0
  %1697 = vmatpush1.bf16.msra.mxu0 %v1673
  %1698 = vmatprep.subr.bf16.mxu0 0
  %1699 = vmatpush1.bf16.msra.mxu0 0
  %1700 = vmatprep.subr.bf16.mxu0 0
  %1701 = vmatpush1.bf16.msra.mxu0 0
  %1702 = vmatprep.subr.bf16.mxu0 0
  %1703 = vmatpush1.bf16.msra.mxu0 0
  %1704 = vmatprep.subr.bf16.mxu0 0
  %1705 = vmatpush1.bf16.msra.mxu0 0
  %1706 = vmatprep.subr.bf16.mxu0 0
  %1707 = vmatpush1.bf16.msra.mxu0 0
  %1708 = vmatprep.subr.bf16.mxu0 0
  %1709 = vmatpush1.bf16.msra.mxu0 0
  %1710 = vmatprep.subr.bf16.mxu0 0
  %1711 = vmatpush1.bf16.msra.mxu0 0
  %1712 = vmatprep.subr.bf16.mxu0 0
  %1713 = vmatpush1.bf16.msra.mxu0 0
  %1714 = vmatprep.mubr.bf16.mxu0 0
  %1715 = vmatmul.mubr.bf16.gmra.mrb[0].mxu0 %v1603
  %v1716 = vpop.f32.mrb[0].mxu0
  %v1717 = vadd.f32 %v1632, %v1716
  %v1718 = vpop.f32.mrb[0].mxu0
  %v1719 = vpop.f32.mrb[0].mxu0
  %v1720 = vadd.f32 %v1632, %v1719
  %v1721 = vpop.f32.mrb[0].mxu0
  %1722 = vmatprep.mubr.bf16.mxu0 0
  %1723 = vmatmul.mubr.bf16.gmra.mrb[0].mxu0 %v1604
  %v1724 = vpop.f32.mrb[0].mxu0
  %v1725 = vadd.f32 %v1632, %v1724
  %v1726 = vpop.f32.mrb[0].mxu0
  %v1727 = vpop.f32.mrb[0].mxu0
  %v1728 = vadd.f32 %v1632, %v1727
  %v1729 = vpop.f32.mrb[0].mxu0
  %1730 = vmatprep.mubr.bf16.mxu0 0
  %1731 = vmatmul.mubr.bf16.gmra.mrb[0].mxu0 %v1605
  %v1732 = vpop.f32.mrb[0].mxu0
  %v1733 = vadd.f32 %v1632, %v1732
  %v1734 = vpop.f32.mrb[0].mxu0
  %v1735 = vpop.f32.mrb[0].mxu0
  %v1736 = vadd.f32 %v1632, %v1735
  %v1737 = vpop.f32.mrb[0].mxu0
  %1738 = vmatprep.mubr.bf16.mxu0 0
  %1739 = vmatmul.mubr.bf16.gmra.mrb[0].mxu0 %v1606
  %v1740 = vpop.f32.mrb[0].mxu0
  %v1741 = vadd.f32 %v1632, %v1740
  %v1742 = vpop.f32.mrb[0].mxu0
  %v1743 = vpop.f32.mrb[0].mxu0
  %v1744 = vadd.f32 %v1632, %v1743
  %v1745 = vpop.f32.mrb[0].mxu0
  %1746 = vmatprep.mubr.bf16.mxu0 0
  %1747 = vmatmul.mubr.bf16.gmra.mrb[0].mxu0 %v1607
  %v1748 = vpop.f32.mrb[0].mxu0
  %v1749 = vadd.f32 %v1632, %v1748
  %v1750 = vpop.f32.mrb[0].mxu0
  %v1751 = vpop.f32.mrb[0].mxu0
  %v1752 = vadd.f32 %v1632, %v1751
  %v1753 = vpop.f32.mrb[0].mxu0
  %1754 = vmatprep.mubr.bf16.mxu0 0
  %1755 = vmatmul.mubr.bf16.gmra.mrb[0].mxu0 %v1608
  %v1756 = vpop.f32.mrb[0].mxu0
  %v1757 = vadd.f32 %v1632, %v1756
  %v1758 = vpop.f32.mrb[0].mxu0
  %v1759 = vpop.f32.mrb[0].mxu0
  %v1760 = vadd.f32 %v1632, %v1759
  %v1761 = vpop.f32.mrb[0].mxu0
  %1762 = vmatprep.mubr.bf16.mxu0 0
  %1763 = vmatmul.mubr.bf16.gmra.mrb[0].mxu0 %v1609
  %v1764 = vpop.f32.mrb[0].mxu0
  %v1765 = vadd.f32 %v1632, %v1764
  %v1766 = vpop.f32.mrb[0].mxu0
  %v1767 = vpop.f32.mrb[0].mxu0
  %v1768 = vadd.f32 %v1632, %v1767
  %v1769 = vpop.f32.mrb[0].mxu0
  %1770 = vmatprep.mubr.bf16.mxu0 0
  %1771 = vmatmul.mubr.bf16.gmra.mrb[0].mxu0 %v1610
  %v1772 = vpop.f32.mrb[0].mxu0
  %v1773 = vadd.f32 %v1632, %v1772
  %v1774 = vpop.f32.mrb[0].mxu0
  %v1775 = vpop.f32.mrb[0].mxu0
  %v1776 = vadd.f32 %v1632, %v1775
  %v1777 = vpop.f32.mrb[0].mxu0
  %1778 = vdwg.mxu0
  %v1779 = vld [vmem:[%s13] sm:$0xf]
  %v1780 = vld [vmem:[%s13 + $0x4] sm:$0xf]
  %v1781 = vld [vmem:[%s13 + $0x8] sm:$0xf]
  %v1782 = vld [vmem:[%s13 + $0xc] sm:$0xf]
  %v1783 = vld [vmem:[%s13 + $0x10] sm:$0xf]
  %v1784 = vld [vmem:[%s13 + $0x14] sm:$0xf]
  %v1785 = vld [vmem:[%s13 + $0x18] sm:$0xf]
  %v1786 = vld [vmem:[%s13 + $0x1c] sm:$0xf]
  %v1787 = vld [vmem:[%s13 + $0x20] sm:$0xf]
  %v1788 = vld [vmem:[%s13 + $0x24] sm:$0xf]
  %v1789 = vld [vmem:[%s13 + $0x28] sm:$0xf]
  %v1790 = vld [vmem:[%s13 + $0x2c] sm:$0xf]
  %v1791 = vld [vmem:[%s13 + $0x30] sm:$0xf]
  %v1792 = vld [vmem:[%s13 + $0x34] sm:$0xf]
  %v1793 = vld [vmem:[%s13 + $0x38] sm:$0xf]
  %v1794 = vld [vmem:[%s13 + $0x3c] sm:$0xf]
  %v1795 = vld [vmem:[%s14] sm:$0x1]
  %v1797 = vlaneseq
  %v1798 = vshrl.u32 %v1797, 7
  %v1799 = vsub.s32 0, %v1798
  %v1800 = vrot.slane %v1795, %v1799
  %v1818 = vunpack.c.l.b16 %v1779
  %v1819 = vunpack.c.l.b16 %v1780
  %v1820 = vunpack.c.l.b16 %v1781
  %v1821 = vunpack.c.l.b16 %v1782
  %v1822 = vunpack.c.l.b16 %v1783
  %v1823 = vunpack.c.l.b16 %v1784
  %v1824 = vunpack.c.l.b16 %v1785
  %v1825 = vunpack.c.l.b16 %v1786
  %v1826 = vunpack.c.l.b16 %v1787
  %v1827 = vunpack.c.l.b16 %v1788
  %v1828 = vunpack.c.l.b16 %v1789
  %v1829 = vunpack.c.l.b16 %v1790
  %v1830 = vunpack.c.l.b16 %v1791
  %v1831 = vunpack.c.l.b16 %v1792
  %v1832 = vunpack.c.l.b16 %v1793
  %v1833 = vunpack.c.l.b16 %v1794
  %v1834 = vpack.c.b16 %v1819, %v1818
  %v1835 = vpack.c.b16 %v1821, %v1820
  %v1836 = vpack.c.b16 %v1823, %v1822
  %v1837 = vpack.c.b16 %v1825, %v1824
  %v1838 = vpack.c.b16 %v1827, %v1826
  %v1839 = vpack.c.b16 %v1829, %v1828
  %v1840 = vpack.c.b16 %v1831, %v1830
  %v1841 = vpack.c.b16 %v1833, %v1832
  %1850 = vmatprep.subr.bf16.mxu0 0
  %1851 = vmatpush1.bf16.msra.mxu0 %v1834
  %1852 = vmatprep.subr.bf16.mxu0 0
  %1853 = vmatpush1.bf16.msra.mxu0 %v1835
  %1854 = vmatprep.subr.bf16.mxu0 0
  %1855 = vmatpush1.bf16.msra.mxu0 %v1836
  %1856 = vmatprep.subr.bf16.mxu0 0
  %1857 = vmatpush1.bf16.msra.mxu0 %v1837
  %1858 = vmatprep.subr.bf16.mxu0 0
  %1859 = vmatpush1.bf16.msra.mxu0 %v1838
  %1860 = vmatprep.subr.bf16.mxu0 0
  %1861 = vmatpush1.bf16.msra.mxu0 %v1839
  %1862 = vmatprep.subr.bf16.mxu0 0
  %1863 = vmatpush1.bf16.msra.mxu0 %v1840
  %1864 = vmatprep.subr.bf16.mxu0 0
  %1865 = vmatpush1.bf16.msra.mxu0 %v1841
  %1866 = vmatprep.subr.bf16.mxu0 0
  %1867 = vmatpush1.bf16.msra.mxu0 0
  %1868 = vmatprep.subr.bf16.mxu0 0
  %1869 = vmatpush1.bf16.msra.mxu0 0
  %1870 = vmatprep.subr.bf16.mxu0 0
  %1871 = vmatpush1.bf16.msra.mxu0 0
  %1872 = vmatprep.subr.bf16.mxu0 0
  %1873 = vmatpush1.bf16.msra.mxu0 0
  %1874 = vmatprep.subr.bf16.mxu0 0
  %1875 = vmatpush1.bf16.msra.mxu0 0
  %1876 = vmatprep.subr.bf16.mxu0 0
  %1877 = vmatpush1.bf16.msra.mxu0 0
  %1878 = vmatprep.subr.bf16.mxu0 0
  %1879 = vmatpush1.bf16.msra.mxu0 0
  %1880 = vmatprep.subr.bf16.mxu0 0
  %1881 = vmatpush1.bf16.msra.mxu0 0
  %1882 = vmatprep.mubr.bf16.mxu0 0
  %1883 = vmatmul.mubr.bf16.gmra.mrb[0].mxu0 %v1603
  %v1884 = vpop.f32.mrb[0].mxu0
  %v1885 = vadd.f32 %v1800, %v1884
  %v1886 = vpop.f32.mrb[0].mxu0
  %v1887 = vpop.f32.mrb[0].mxu0
  %v1888 = vadd.f32 %v1800, %v1887
  %v1889 = vpop.f32.mrb[0].mxu0
  %1890 = vmatprep.mubr.bf16.mxu0 0
  %1891 = vmatmul.mubr.bf16.gmra.mrb[0].mxu0 %v1604
  %v1892 = vpop.f32.mrb[0].mxu0
  %v1893 = vadd.f32 %v1800, %v1892
  %v1894 = vpop.f32.mrb[0].mxu0
  %v1895 = vpop.f32.mrb[0].mxu0
  %v1896 = vadd.f32 %v1800, %v1895
  %v1897 = vpop.f32.mrb[0].mxu0
  %1898 = vmatprep.mubr.bf16.mxu0 0
  %1899 = vmatmul.mubr.bf16.gmra.mrb[0].mxu0 %v1605
  %v1900 = vpop.f32.mrb[0].mxu0
  %v1901 = vadd.f32 %v1800, %v1900
  %v1902 = vpop.f32.mrb[0].mxu0
  %v1903 = vpop.f32.mrb[0].mxu0
  %v1904 = vadd.f32 %v1800, %v1903
  %v1905 = vpop.f32.mrb[0].mxu0
  %1906 = vmatprep.mubr.bf16.mxu0 0
  %1907 = vmatmul.mubr.bf16.gmra.mrb[0].mxu0 %v1606
  %v1908 = vpop.f32.mrb[0].mxu0
  %v1909 = vadd.f32 %v1800, %v1908
  %v1910 = vpop.f32.mrb[0].mxu0
  %v1911 = vpop.f32.mrb[0].mxu0
  %v1912 = vadd.f32 %v1800, %v1911
  %v1913 = vpop.f32.mrb[0].mxu0
  %1914 = vmatprep.mubr.bf16.mxu0 0
  %1915 = vmatmul.mubr.bf16.gmra.mrb[0].mxu0 %v1607
  %v1916 = vpop.f32.mrb[0].mxu0
  %v1917 = vadd.f32 %v1800, %v1916
  %v1918 = vpop.f32.mrb[0].mxu0
  %v1919 = vpop.f32.mrb[0].mxu0
  %v1920 = vadd.f32 %v1800, %v1919
  %v1921 = vpop.f32.mrb[0].mxu0
  %1922 = vmatprep.mubr.bf16.mxu0 0
  %1923 = vmatmul.mubr.bf16.gmra.mrb[0].mxu0 %v1608
  %v1924 = vpop.f32.mrb[0].mxu0
  %v1925 = vadd.f32 %v1800, %v1924
  %v1926 = vpop.f32.mrb[0].mxu0
  %v1927 = vpop.f32.mrb[0].mxu0
  %v1928 = vadd.f32 %v1800, %v1927
  %v1929 = vpop.f32.mrb[0].mxu0
  %1930 = vmatprep.mubr.bf16.mxu0 0
  %1931 = vmatmul.mubr.bf16.gmra.mrb[0].mxu0 %v1609
  %v1932 = vpop.f32.mrb[0].mxu0
  %v1933 = vadd.f32 %v1800, %v1932
  %v1934 = vpop.f32.mrb[0].mxu0
  %v1935 = vpop.f32.mrb[0].mxu0
  %v1936 = vadd.f32 %v1800, %v1935
  %v1937 = vpop.f32.mrb[0].mxu0
  %1938 = vmatprep.mubr.bf16.mxu0 0
  %1939 = vmatmul.mubr.bf16.gmra.mrb[0].mxu0 %v1610
  %v1940 = vpop.f32.mrb[0].mxu0
  %v1941 = vadd.f32 %v1800, %v1940
  %v1942 = vpop.f32.mrb[0].mxu0
  %v1943 = vpop.f32.mrb[0].mxu0
  %v1944 = vadd.f32 %v1800, %v1943
  %v1945 = vpop.f32.mrb[0].mxu0
  %1946 = vdwg.mxu0
  %v1947 = vmul.f32 %v1885, 1.442695
  %v1948 = vpow.pop %v1947
  %v1949 = vmul.f32 %v1888, 1.442695
  %v1950 = vpow.pop %v1949
  %v1951 = vmul.f32 %v1893, 1.442695
  %v1952 = vpow.pop %v1951
  %v1953 = vmul.f32 %v1896, 1.442695
  %v1954 = vpow.pop %v1953
  %v1955 = vmul.f32 %v1901, 1.442695
  %v1956 = vpow.pop %v1955
  %v1957 = vmul.f32 %v1904, 1.442695
  %v1958 = vpow.pop %v1957
  %v1959 = vmul.f32 %v1909, 1.442695
  %v1960 = vpow.pop %v1959
  %v1961 = vmul.f32 %v1912, 1.442695
  %v1962 = vpow.pop %v1961
  %v1963 = vmul.f32 %v1917, 1.442695
  %v1964 = vpow.pop %v1963
  %v1965 = vmul.f32 %v1920, 1.442695
  %v1966 = vpow.pop %v1965
  %v1967 = vmul.f32 %v1925, 1.442695
  %v1968 = vpow.pop %v1967
  %v1969 = vmul.f32 %v1928, 1.442695
  %v1970 = vpow.pop %v1969
  %v1971 = vmul.f32 %v1933, 1.442695
  %v1972 = vpow.pop %v1971
  %v1973 = vmul.f32 %v1936, 1.442695
  %v1974 = vpow.pop %v1973
  %v1975 = vmul.f32 %v1941, 1.442695
  %v1976 = vpow.pop %v1975
  %v1977 = vmul.f32 %v1944, 1.442695
  %v1978 = vpow.pop %v1977
  %v1979 = vadd.f32 %v1948, 0.0001
  %v1980 = vadd.f32 %v1950, 0.0001
  %v1981 = vadd.f32 %v1952, 0.0001
  %v1982 = vadd.f32 %v1954, 0.0001
  %v1983 = vadd.f32 %v1956, 0.0001
  %v1984 = vadd.f32 %v1958, 0.0001
  %v1985 = vadd.f32 %v1960, 0.0001
  %v1986 = vadd.f32 %v1962, 0.0001
  %v1987 = vadd.f32 %v1964, 0.0001
  %v1988 = vadd.f32 %v1966, 0.0001
  %v1989 = vadd.f32 %v1968, 0.0001
  %v1990 = vadd.f32 %v1970, 0.0001
  %v1991 = vadd.f32 %v1972, 0.0001
  %v1992 = vadd.f32 %v1974, 0.0001
  %v1993 = vadd.f32 %v1976, 0.0001
  %v1994 = vadd.f32 %v1978, 0.0001
  %v1995 = vrsqrt.pop %v1979
  %v1996 = vmul.f32 %v1979, %v1995
  %vm1997 = vcmp.eq.f32.partialorder %v1979, inf
  %v1998 = vsel %vm1997, %v1979, %v1996
  %vm1999 = vcmp.eq.f32.partialorder %v1979, 0.0
  %v2000 = vand.u32 %v1979, 2147483648
  %v2001 = vsel %vm1999, %v2000, %v1998
  %v2002 = vrsqrt.pop %v1980
  %v2003 = vmul.f32 %v1980, %v2002
  %vm2004 = vcmp.eq.f32.partialorder %v1980, inf
  %v2005 = vsel %vm2004, %v1980, %v2003
  %vm2006 = vcmp.eq.f32.partialorder %v1980, 0.0
  %v2007 = vand.u32 %v1980, 2147483648
  %v2008 = vsel %vm2006, %v2007, %v2005
  %v2009 = vrsqrt.pop %v1981
  %v2010 = vmul.f32 %v1981, %v2009
  %vm2011 = vcmp.eq.f32.partialorder %v1981, inf
  %v2012 = vsel %vm2011, %v1981, %v2010
  %vm2013 = vcmp.eq.f32.partialorder %v1981, 0.0
  %v2014 = vand.u32 %v1981, 2147483648
  %v2015 = vsel %vm2013, %v2014, %v2012
  %v2016 = vrsqrt.pop %v1982
  %v2017 = vmul.f32 %v1982, %v2016
  %vm2018 = vcmp.eq.f32.partialorder %v1982, inf
  %v2019 = vsel %vm2018, %v1982, %v2017
  %vm2020 = vcmp.eq.f32.partialorder %v1982, 0.0
  %v2021 = vand.u32 %v1982, 2147483648
  %v2022 = vsel %vm2020, %v2021, %v2019
  %v2023 = vrsqrt.pop %v1983
  %v2024 = vmul.f32 %v1983, %v2023
  %vm2025 = vcmp.eq.f32.partialorder %v1983, inf
  %v2026 = vsel %vm2025, %v1983, %v2024
  %vm2027 = vcmp.eq.f32.partialorder %v1983, 0.0
  %v2028 = vand.u32 %v1983, 2147483648
  %v2029 = vsel %vm2027, %v2028, %v2026
  %v2030 = vrsqrt.pop %v1984
  %v2031 = vmul.f32 %v1984, %v2030
  %vm2032 = vcmp.eq.f32.partialorder %v1984, inf
  %v2033 = vsel %vm2032, %v1984, %v2031
  %vm2034 = vcmp.eq.f32.partialorder %v1984, 0.0
  %v2035 = vand.u32 %v1984, 2147483648
  %v2036 = vsel %vm2034, %v2035, %v2033
  %v2037 = vrsqrt.pop %v1985
  %v2038 = vmul.f32 %v1985, %v2037
  %vm2039 = vcmp.eq.f32.partialorder %v1985, inf
  %v2040 = vsel %vm2039, %v1985, %v2038
  %vm2041 = vcmp.eq.f32.partialorder %v1985, 0.0
  %v2042 = vand.u32 %v1985, 2147483648
  %v2043 = vsel %vm2041, %v2042, %v2040
  %v2044 = vrsqrt.pop %v1986
  %v2045 = vmul.f32 %v1986, %v2044
  %vm2046 = vcmp.eq.f32.partialorder %v1986, inf
  %v2047 = vsel %vm2046, %v1986, %v2045
  %vm2048 = vcmp.eq.f32.partialorder %v1986, 0.0
  %v2049 = vand.u32 %v1986, 2147483648
  %v2050 = vsel %vm2048, %v2049, %v2047
  %v2051 = vrsqrt.pop %v1987
  %v2052 = vmul.f32 %v1987, %v2051
  %vm2053 = vcmp.eq.f32.partialorder %v1987, inf
  %v2054 = vsel %vm2053, %v1987, %v2052
  %vm2055 = vcmp.eq.f32.partialorder %v1987, 0.0
  %v2056 = vand.u32 %v1987, 2147483648
  %v2057 = vsel %vm2055, %v2056, %v2054
  %v2058 = vrsqrt.pop %v1988
  %v2059 = vmul.f32 %v1988, %v2058
  %vm2060 = vcmp.eq.f32.partialorder %v1988, inf
  %v2061 = vsel %vm2060, %v1988, %v2059
  %vm2062 = vcmp.eq.f32.partialorder %v1988, 0.0
  %v2063 = vand.u32 %v1988, 2147483648
  %v2064 = vsel %vm2062, %v2063, %v2061
  %v2065 = vrsqrt.pop %v1989
  %v2066 = vmul.f32 %v1989, %v2065
  %vm2067 = vcmp.eq.f32.partialorder %v1989, inf
  %v2068 = vsel %vm2067, %v1989, %v2066
  %vm2069 = vcmp.eq.f32.partialorder %v1989, 0.0
  %v2070 = vand.u32 %v1989, 2147483648
  %v2071 = vsel %vm2069, %v2070, %v2068
  %v2072 = vrsqrt.pop %v1990
  %v2073 = vmul.f32 %v1990, %v2072
  %vm2074 = vcmp.eq.f32.partialorder %v1990, inf
  %v2075 = vsel %vm2074, %v1990, %v2073
  %vm2076 = vcmp.eq.f32.partialorder %v1990, 0.0
  %v2077 = vand.u32 %v1990, 2147483648
  %v2078 = vsel %vm2076, %v2077, %v2075
  %v2079 = vrsqrt.pop %v1991
  %v2080 = vmul.f32 %v1991, %v2079
  %vm2081 = vcmp.eq.f32.partialorder %v1991, inf
  %v2082 = vsel %vm2081, %v1991, %v2080
  %vm2083 = vcmp.eq.f32.partialorder %v1991, 0.0
  %v2084 = vand.u32 %v1991, 2147483648
  %v2085 = vsel %vm2083, %v2084, %v2082
  %v2086 = vrsqrt.pop %v1992
  %v2087 = vmul.f32 %v1992, %v2086
  %vm2088 = vcmp.eq.f32.partialorder %v1992, inf
  %v2089 = vsel %vm2088, %v1992, %v2087
  %vm2090 = vcmp.eq.f32.partialorder %v1992, 0.0
  %v2091 = vand.u32 %v1992, 2147483648
  %v2092 = vsel %vm2090, %v2091, %v2089
  %v2093 = vrsqrt.pop %v1993
  %v2094 = vmul.f32 %v1993, %v2093
  %vm2095 = vcmp.eq.f32.partialorder %v1993, inf
  %v2096 = vsel %vm2095, %v1993, %v2094
  %vm2097 = vcmp.eq.f32.partialorder %v1993, 0.0
  %v2098 = vand.u32 %v1993, 2147483648
  %v2099 = vsel %vm2097, %v2098, %v2096
  %v2100 = vrsqrt.pop %v1994
  %v2101 = vmul.f32 %v1994, %v2100
  %vm2102 = vcmp.eq.f32.partialorder %v1994, inf
  %v2103 = vsel %vm2102, %v1994, %v2101
  %vm2104 = vcmp.eq.f32.partialorder %v1994, 0.0
  %v2105 = vand.u32 %v1994, 2147483648
  %v2106 = vsel %vm2104, %v2105, %v2103
  %v2107 = vld [vmem:[%s1] sm:$0xff]
  %v2108 = vld [vmem:[%s1 + $0x8] sm:$0xff]
  %v2109 = vld [vmem:[%s1 + $0x10] sm:$0xff]
  %v2110 = vld [vmem:[%s1 + $0x18] sm:$0xff]
  %v2111 = vld [vmem:[%s1 + $0x20] sm:$0xff]
  %v2112 = vld [vmem:[%s1 + $0x28] sm:$0xff]
  %v2113 = vld [vmem:[%s1 + $0x30] sm:$0xff]
  %v2114 = vld [vmem:[%s1 + $0x38] sm:$0xff]
  %v2115 = vld [vmem:[%s1 + $0x40] sm:$0xff]
  %v2116 = vld [vmem:[%s1 + $0x48] sm:$0xff]
  %v2117 = vld [vmem:[%s1 + $0x50] sm:$0xff]
  %v2118 = vld [vmem:[%s1 + $0x58] sm:$0xff]
  %v2119 = vld [vmem:[%s1 + $0x60] sm:$0xff]
  %v2120 = vld [vmem:[%s1 + $0x68] sm:$0xff]
  %v2121 = vld [vmem:[%s1 + $0x70] sm:$0xff]
  %v2122 = vld [vmem:[%s1 + $0x78] sm:$0xff]
  %v2123 = vmul.f32 %v2001, %v2107
  %v2124 = vmul.f32 %v2008, %v2108
  %v2125 = vmul.f32 %v2015, %v2109
  %v2126 = vmul.f32 %v2022, %v2110
  %v2127 = vmul.f32 %v2029, %v2111
  %v2128 = vmul.f32 %v2036, %v2112
  %v2129 = vmul.f32 %v2043, %v2113
  %v2130 = vmul.f32 %v2050, %v2114
  %v2131 = vmul.f32 %v2057, %v2115
  %v2132 = vmul.f32 %v2064, %v2116
  %v2133 = vmul.f32 %v2071, %v2117
  %v2134 = vmul.f32 %v2078, %v2118
  %v2135 = vmul.f32 %v2085, %v2119
  %v2136 = vmul.f32 %v2092, %v2120
  %v2137 = vmul.f32 %v2099, %v2121
  %v2138 = vmul.f32 %v2106, %v2122
  %v2139 = vadd.f32 %v1717, %v2123
  %v2140 = vadd.f32 %v1720, %v2124
  %v2141 = vadd.f32 %v1725, %v2125
  %v2142 = vadd.f32 %v1728, %v2126
  %v2143 = vadd.f32 %v1733, %v2127
  %v2144 = vadd.f32 %v1736, %v2128
  %v2145 = vadd.f32 %v1741, %v2129
  %v2146 = vadd.f32 %v1744, %v2130
  %v2147 = vadd.f32 %v1749, %v2131
  %v2148 = vadd.f32 %v1752, %v2132
  %v2149 = vadd.f32 %v1757, %v2133
  %v2150 = vadd.f32 %v1760, %v2134
  %v2151 = vadd.f32 %v1765, %v2135
  %v2152 = vadd.f32 %v1768, %v2136
  %v2153 = vadd.f32 %v1773, %v2137
  %v2154 = vadd.f32 %v1776, %v2138
  %v2155 = vlaneseq
  %v2156 = vand.u32 %v2155, 127
  %vm2157 = vcmp.lt.s32.totalorder %v2156, 15
  %v2158 = vsel %vm2157, 1, 0
  %vm2159 = vcmp.eq.s32.totalorder %v2158, 1
  %v2160 = vsel %vm2159, %v2139, -inf
  %v2161 = vsel %vm2159, %v2140, -inf
  %v2162 = vsel %vm2159, %v2141, -inf
  %v2163 = vsel %vm2159, %v2142, -inf
  %v2164 = vsel %vm2159, %v2143, -inf
  %v2165 = vsel %vm2159, %v2144, -inf
  %v2166 = vsel %vm2159, %v2145, -inf
  %v2167 = vsel %vm2159, %v2146, -inf
  %v2168 = vsel %vm2159, %v2147, -inf
  %v2169 = vsel %vm2159, %v2148, -inf
  %v2170 = vsel %vm2159, %v2149, -inf
  %v2171 = vsel %vm2159, %v2150, -inf
  %v2172 = vsel %vm2159, %v2151, -inf
  %v2173 = vsel %vm2159, %v2152, -inf
  %v2174 = vsel %vm2159, %v2153, -inf
  %v2175 = vsel %vm2159, %v2154, -inf
  %2176 = vmax.xlane.f32.xlu0 %v2160
  %v2177 = vpop.xlane.xlu0 %2176
  %2178 = vmax.xlane.f32.xlu0 %v2161
  %v2179 = vpop.xlane.xlu0 %2178
  %2180 = vmax.xlane.f32.xlu0 %v2162
  %v2181 = vpop.xlane.xlu0 %2180
  %2182 = vmax.xlane.f32.xlu0 %v2163
  %v2183 = vpop.xlane.xlu0 %2182
  %2184 = vmax.xlane.f32.xlu0 %v2164
  %v2185 = vpop.xlane.xlu0 %2184
  %2186 = vmax.xlane.f32.xlu0 %v2165
  %v2187 = vpop.xlane.xlu0 %2186
  %2188 = vmax.xlane.f32.xlu0 %v2166
  %v2189 = vpop.xlane.xlu0 %2188
  %2190 = vmax.xlane.f32.xlu0 %v2167
  %v2191 = vpop.xlane.xlu0 %2190
  %2192 = vmax.xlane.f32.xlu0 %v2168
  %v2193 = vpop.xlane.xlu0 %2192
  %2194 = vmax.xlane.f32.xlu0 %v2169
  %v2195 = vpop.xlane.xlu0 %2194
  %2196 = vmax.xlane.f32.xlu0 %v2170
  %v2197 = vpop.xlane.xlu0 %2196
  %2198 = vmax.xlane.f32.xlu0 %v2171
  %v2199 = vpop.xlane.xlu0 %2198
  %2200 = vmax.xlane.f32.xlu0 %v2172
  %v2201 = vpop.xlane.xlu0 %2200
  %2202 = vmax.xlane.f32.xlu0 %v2173
  %v2203 = vpop.xlane.xlu0 %2202
  %2204 = vmax.xlane.f32.xlu0 %v2174
  %v2205 = vpop.xlane.xlu0 %2204
  %2206 = vmax.xlane.f32.xlu0 %v2175
  %v2207 = vpop.xlane.xlu0 %2206
  %v2208 = vsub.f32 %v2160, %v2177
  %v2209 = vsub.f32 %v2161, %v2179
  %v2210 = vsub.f32 %v2162, %v2181
  %v2211 = vsub.f32 %v2163, %v2183
  %v2212 = vsub.f32 %v2164, %v2185
  %v2213 = vsub.f32 %v2165, %v2187
  %v2214 = vsub.f32 %v2166, %v2189
  %v2215 = vsub.f32 %v2167, %v2191
  %v2216 = vsub.f32 %v2168, %v2193
  %v2217 = vsub.f32 %v2169, %v2195
  %v2218 = vsub.f32 %v2170, %v2197
  %v2219 = vsub.f32 %v2171, %v2199
  %v2220 = vsub.f32 %v2172, %v2201
  %v2221 = vsub.f32 %v2173, %v2203
  %v2222 = vsub.f32 %v2174, %v2205
  %v2223 = vsub.f32 %v2175, %v2207
  %v2224 = vmul.f32 %v2208, 1.442695
  %v2225 = vpow.pop %v2224
  %v2226 = vmul.f32 %v2209, 1.442695
  %v2227 = vpow.pop %v2226
  %v2228 = vmul.f32 %v2210, 1.442695
  %v2229 = vpow.pop %v2228
  %v2230 = vmul.f32 %v2211, 1.442695
  %v2231 = vpow.pop %v2230
  %v2232 = vmul.f32 %v2212, 1.442695
  %v2233 = vpow.pop %v2232
  %v2234 = vmul.f32 %v2213, 1.442695
  %v2235 = vpow.pop %v2234
  %v2236 = vmul.f32 %v2214, 1.442695
  %v2237 = vpow.pop %v2236
  %v2238 = vmul.f32 %v2215, 1.442695
  %v2239 = vpow.pop %v2238
  %v2240 = vmul.f32 %v2216, 1.442695
  %v2241 = vpow.pop %v2240
  %v2242 = vmul.f32 %v2217, 1.442695
  %v2243 = vpow.pop %v2242
  %v2244 = vmul.f32 %v2218, 1.442695
  %v2245 = vpow.pop %v2244
  %v2246 = vmul.f32 %v2219, 1.442695
  %v2247 = vpow.pop %v2246
  %v2248 = vmul.f32 %v2220, 1.442695
  %v2249 = vpow.pop %v2248
  %v2250 = vmul.f32 %v2221, 1.442695
  %v2251 = vpow.pop %v2250
  %v2252 = vmul.f32 %v2222, 1.442695
  %v2253 = vpow.pop %v2252
  %v2254 = vmul.f32 %v2223, 1.442695
  %v2255 = vpow.pop %v2254
  %2256 = vadd.xlane.f32.xlu0 %v2225
  %v2257 = vpop.xlane.xlu0 %2256
  %2258 = vadd.xlane.f32.xlu0 %v2227
  %v2259 = vpop.xlane.xlu0 %2258
  %2260 = vadd.xlane.f32.xlu0 %v2229
  %v2261 = vpop.xlane.xlu0 %2260
  %2262 = vadd.xlane.f32.xlu0 %v2231
  %v2263 = vpop.xlane.xlu0 %2262
  %2264 = vadd.xlane.f32.xlu0 %v2233
  %v2265 = vpop.xlane.xlu0 %2264
  %2266 = vadd.xlane.f32.xlu0 %v2235
  %v2267 = vpop.xlane.xlu0 %2266
  %2268 = vadd.xlane.f32.xlu0 %v2237
  %v2269 = vpop.xlane.xlu0 %2268
  %2270 = vadd.xlane.f32.xlu0 %v2239
  %v2271 = vpop.xlane.xlu0 %2270
  %2272 = vadd.xlane.f32.xlu0 %v2241
  %v2273 = vpop.xlane.xlu0 %2272
  %2274 = vadd.xlane.f32.xlu0 %v2243
  %v2275 = vpop.xlane.xlu0 %2274
  %2276 = vadd.xlane.f32.xlu0 %v2245
  %v2277 = vpop.xlane.xlu0 %2276
  %2278 = vadd.xlane.f32.xlu0 %v2247
  %v2279 = vpop.xlane.xlu0 %2278
  %2280 = vadd.xlane.f32.xlu0 %v2249
  %v2281 = vpop.xlane.xlu0 %2280
  %2282 = vadd.xlane.f32.xlu0 %v2251
  %v2283 = vpop.xlane.xlu0 %2282
  %2284 = vadd.xlane.f32.xlu0 %v2253
  %v2285 = vpop.xlane.xlu0 %2284
  %2286 = vadd.xlane.f32.xlu0 %v2255
  %v2287 = vpop.xlane.xlu0 %2286
  %v2288 = vrcp.pop %v2257
  %v2289 = vrcp.pop %v2259
  %v2290 = vrcp.pop %v2261
  %v2291 = vrcp.pop %v2263
  %v2292 = vrcp.pop %v2265
  %v2293 = vrcp.pop %v2267
  %v2294 = vrcp.pop %v2269
  %v2295 = vrcp.pop %v2271
  %v2296 = vrcp.pop %v2273
  %v2297 = vrcp.pop %v2275
  %v2298 = vrcp.pop %v2277
  %v2299 = vrcp.pop %v2279
  %v2300 = vrcp.pop %v2281
  %v2301 = vrcp.pop %v2283
  %v2302 = vrcp.pop %v2285
  %v2303 = vrcp.pop %v2287
  %v2304 = vmul.f32 %v2225, %v2288
  %v2305 = vmul.f32 %v2227, %v2289
  %v2306 = vmul.f32 %v2229, %v2290
  %v2307 = vmul.f32 %v2231, %v2291
  %v2308 = vmul.f32 %v2233, %v2292
  %v2309 = vmul.f32 %v2235, %v2293
  %v2310 = vmul.f32 %v2237, %v2294
  %v2311 = vmul.f32 %v2239, %v2295
  %v2312 = vmul.f32 %v2241, %v2296
  %v2313 = vmul.f32 %v2243, %v2297
  %v2314 = vmul.f32 %v2245, %v2298
  %v2315 = vmul.f32 %v2247, %v2299
  %v2316 = vmul.f32 %v2249, %v2300
  %v2317 = vmul.f32 %v2251, %v2301
  %v2318 = vmul.f32 %v2253, %v2302
  %v2319 = vmul.f32 %v2255, %v2303
  %2320 = vst [vmem:[%s26] sm:$0xff] %v1717
  %2321 = vst [vmem:[%s26 + $0x8] sm:$0xff] %v1720
  %2322 = vst [vmem:[%s26 + $0x10] sm:$0xff] %v1725
  %2323 = vst [vmem:[%s26 + $0x18] sm:$0xff] %v1728
  %2324 = vst [vmem:[%s26 + $0x20] sm:$0xff] %v1733
  %2325 = vst [vmem:[%s26 + $0x28] sm:$0xff] %v1736
  %2326 = vst [vmem:[%s26 + $0x30] sm:$0xff] %v1741
  %2327 = vst [vmem:[%s26 + $0x38] sm:$0xff] %v1744
  %2328 = vst [vmem:[%s26 + $0x40] sm:$0xff] %v1749
  %2329 = vst [vmem:[%s26 + $0x48] sm:$0xff] %v1752
  %2330 = vst [vmem:[%s26 + $0x50] sm:$0xff] %v1757
  %2331 = vst [vmem:[%s26 + $0x58] sm:$0xff] %v1760
  %2332 = vst [vmem:[%s26 + $0x60] sm:$0xff] %v1765
  %2333 = vst [vmem:[%s26 + $0x68] sm:$0xff] %v1768
  %2334 = vst [vmem:[%s26 + $0x70] sm:$0xff] %v1773
  %2335 = vst [vmem:[%s26 + $0x78] sm:$0xff] %v1776
  %2336 = vst [vmem:[%s27] sm:$0xff] %v1979
  %2337 = vst [vmem:[%s27 + $0x8] sm:$0xff] %v1980
  %2338 = vst [vmem:[%s27 + $0x10] sm:$0xff] %v1981
  %2339 = vst [vmem:[%s27 + $0x18] sm:$0xff] %v1982
  %2340 = vst [vmem:[%s27 + $0x20] sm:$0xff] %v1983
  %2341 = vst [vmem:[%s27 + $0x28] sm:$0xff] %v1984
  %2342 = vst [vmem:[%s27 + $0x30] sm:$0xff] %v1985
  %2343 = vst [vmem:[%s27 + $0x38] sm:$0xff] %v1986
  %2344 = vst [vmem:[%s27 + $0x40] sm:$0xff] %v1987
  %2345 = vst [vmem:[%s27 + $0x48] sm:$0xff] %v1988
  %2346 = vst [vmem:[%s27 + $0x50] sm:$0xff] %v1989
  %2347 = vst [vmem:[%s27 + $0x58] sm:$0xff] %v1990
  %2348 = vst [vmem:[%s27 + $0x60] sm:$0xff] %v1991
  %2349 = vst [vmem:[%s27 + $0x68] sm:$0xff] %v1992
  %2350 = vst [vmem:[%s27 + $0x70] sm:$0xff] %v1993
  %2351 = vst [vmem:[%s27 + $0x78] sm:$0xff] %v1994
  %v2352 = vpack.c.bf16 %v2305, %v2304
  %v2353 = vpack.c.bf16 %v2307, %v2306
  %v2354 = vpack.c.bf16 %v2309, %v2308
  %v2355 = vpack.c.bf16 %v2311, %v2310
  %v2356 = vpack.c.bf16 %v2313, %v2312
  %v2357 = vpack.c.bf16 %v2315, %v2314
  %v2358 = vpack.c.bf16 %v2317, %v2316
  %v2359 = vpack.c.bf16 %v2319, %v2318
  %v2360 = vld [vmem:[%s15] sm:$0xf]
  %v2361 = vld [vmem:[%s15 + $0x4] sm:$0xf]
  %v2362 = vld [vmem:[%s15 + $0x8] sm:$0xf]
  %v2363 = vld [vmem:[%s15 + $0xc] sm:$0xf]
  %v2364 = vld [vmem:[%s15 + $0x10] sm:$0xf]
  %v2365 = vld [vmem:[%s15 + $0x14] sm:$0xf]
  %v2366 = vld [vmem:[%s15 + $0x18] sm:$0xf]
  %v2367 = vld [vmem:[%s15 + $0x1c] sm:$0xf]
  %v2368 = vld [vmem:[%s15 + $0x20] sm:$0xf]
  %v2369 = vld [vmem:[%s15 + $0x24] sm:$0xf]
  %v2370 = vld [vmem:[%s15 + $0x28] sm:$0xf]
  %v2371 = vld [vmem:[%s15 + $0x2c] sm:$0xf]
  %v2372 = vld [vmem:[%s15 + $0x30] sm:$0xf]
  %v2373 = vld [vmem:[%s15 + $0x34] sm:$0xf]
  %v2374 = vld [vmem:[%s15 + $0x38] sm:$0xf]
  %v2375 = vld [vmem:[%s15 + $0x3c] sm:$0xf]
  %v2376 = vld [vmem:[%s16] sm:$0x1]
  %v2378 = vlaneseq
  %v2379 = vshrl.u32 %v2378, 7
  %v2380 = vsub.s32 0, %v2379
  %v2381 = vrot.slane %v2376, %v2380
  %v2399 = vunpack.c.l.b16 %v2360
  %v2400 = vunpack.c.l.b16 %v2361
  %v2401 = vunpack.c.l.b16 %v2362
  %v2402 = vunpack.c.l.b16 %v2363
  %v2403 = vunpack.c.l.b16 %v2364
  %v2404 = vunpack.c.l.b16 %v2365
  %v2405 = vunpack.c.l.b16 %v2366
  %v2406 = vunpack.c.l.b16 %v2367
  %v2407 = vunpack.c.l.b16 %v2368
  %v2408 = vunpack.c.l.b16 %v2369
  %v2409 = vunpack.c.l.b16 %v2370
  %v2410 = vunpack.c.l.b16 %v2371
  %v2411 = vunpack.c.l.b16 %v2372
  %v2412 = vunpack.c.l.b16 %v2373
  %v2413 = vunpack.c.l.b16 %v2374
  %v2414 = vunpack.c.l.b16 %v2375
  %v2415 = vpack.c.b16 %v2400, %v2399
  %v2416 = vpack.c.b16 %v2402, %v2401
  %v2417 = vpack.c.b16 %v2404, %v2403
  %v2418 = vpack.c.b16 %v2406, %v2405
  %v2419 = vpack.c.b16 %v2408, %v2407
  %v2420 = vpack.c.b16 %v2410, %v2409
  %v2421 = vpack.c.b16 %v2412, %v2411
  %v2422 = vpack.c.b16 %v2414, %v2413
  %2431 = vmatprep.subr.bf16.mxu0 0
  %2432 = vmatpush1.bf16.msra.mxu0 %v2415
  %2433 = vmatprep.subr.bf16.mxu0 0
  %2434 = vmatpush1.bf16.msra.mxu0 %v2416
  %2435 = vmatprep.subr.bf16.mxu0 0
  %2436 = vmatpush1.bf16.msra.mxu0 %v2417
  %2437 = vmatprep.subr.bf16.mxu0 0
  %2438 = vmatpush1.bf16.msra.mxu0 %v2418
  %2439 = vmatprep.subr.bf16.mxu0 0
  %2440 = vmatpush1.bf16.msra.mxu0 %v2419
  %2441 = vmatprep.subr.bf16.mxu0 0
  %2442 = vmatpush1.bf16.msra.mxu0 %v2420
  %2443 = vmatprep.subr.bf16.mxu0 0
  %2444 = vmatpush1.bf16.msra.mxu0 %v2421
  %2445 = vmatprep.subr.bf16.mxu0 0
  %2446 = vmatpush1.bf16.msra.mxu0 %v2422
  %2447 = vmatprep.subr.bf16.mxu0 0
  %2448 = vmatpush1.bf16.msra.mxu0 0
  %2449 = vmatprep.subr.bf16.mxu0 0
  %2450 = vmatpush1.bf16.msra.mxu0 0
  %2451 = vmatprep.subr.bf16.mxu0 0
  %2452 = vmatpush1.bf16.msra.mxu0 0
  %2453 = vmatprep.subr.bf16.mxu0 0
  %2454 = vmatpush1.bf16.msra.mxu0 0
  %2455 = vmatprep.subr.bf16.mxu0 0
  %2456 = vmatpush1.bf16.msra.mxu0 0
  %2457 = vmatprep.subr.bf16.mxu0 0
  %2458 = vmatpush1.bf16.msra.mxu0 0
  %2459 = vmatprep.subr.bf16.mxu0 0
  %2460 = vmatpush1.bf16.msra.mxu0 0
  %2461 = vmatprep.subr.bf16.mxu0 0
  %2462 = vmatpush1.bf16.msra.mxu0 0
  %2463 = vmatprep.mubr.bf16.mxu0 0
  %2464 = vmatmul.mubr.bf16.gmra.mrb[0].mxu0 %v2352
  %v2465 = vpop.f32.mrb[0].mxu0
  %v2466 = vadd.f32 %v2381, %v2465
  %v2467 = vpop.f32.mrb[0].mxu0
  %v2468 = vpop.f32.mrb[0].mxu0
  %v2469 = vadd.f32 %v2381, %v2468
  %v2470 = vpop.f32.mrb[0].mxu0
  %2471 = vmatprep.mubr.bf16.mxu0 0
  %2472 = vmatmul.mubr.bf16.gmra.mrb[0].mxu0 %v2353
  %v2473 = vpop.f32.mrb[0].mxu0
  %v2474 = vadd.f32 %v2381, %v2473
  %v2475 = vpop.f32.mrb[0].mxu0
  %v2476 = vpop.f32.mrb[0].mxu0
  %v2477 = vadd.f32 %v2381, %v2476
  %v2478 = vpop.f32.mrb[0].mxu0
  %2479 = vmatprep.mubr.bf16.mxu0 0
  %2480 = vmatmul.mubr.bf16.gmra.mrb[0].mxu0 %v2354
  %v2481 = vpop.f32.mrb[0].mxu0
  %v2482 = vadd.f32 %v2381, %v2481
  %v2483 = vpop.f32.mrb[0].mxu0
  %v2484 = vpop.f32.mrb[0].mxu0
  %v2485 = vadd.f32 %v2381, %v2484
  %v2486 = vpop.f32.mrb[0].mxu0
  %2487 = vmatprep.mubr.bf16.mxu0 0
  %2488 = vmatmul.mubr.bf16.gmra.mrb[0].mxu0 %v2355
  %v2489 = vpop.f32.mrb[0].mxu0
  %v2490 = vadd.f32 %v2381, %v2489
  %v2491 = vpop.f32.mrb[0].mxu0
  %v2492 = vpop.f32.mrb[0].mxu0
  %v2493 = vadd.f32 %v2381, %v2492
  %v2494 = vpop.f32.mrb[0].mxu0
  %2495 = vmatprep.mubr.bf16.mxu0 0
  %2496 = vmatmul.mubr.bf16.gmra.mrb[0].mxu0 %v2356
  %v2497 = vpop.f32.mrb[0].mxu0
  %v2498 = vadd.f32 %v2381, %v2497
  %v2499 = vpop.f32.mrb[0].mxu0
  %v2500 = vpop.f32.mrb[0].mxu0
  %v2501 = vadd.f32 %v2381, %v2500
  %v2502 = vpop.f32.mrb[0].mxu0
  %2503 = vmatprep.mubr.bf16.mxu0 0
  %2504 = vmatmul.mubr.bf16.gmra.mrb[0].mxu0 %v2357
  %v2505 = vpop.f32.mrb[0].mxu0
  %v2506 = vadd.f32 %v2381, %v2505
  %v2507 = vpop.f32.mrb[0].mxu0
  %v2508 = vpop.f32.mrb[0].mxu0
  %v2509 = vadd.f32 %v2381, %v2508
  %v2510 = vpop.f32.mrb[0].mxu0
  %2511 = vmatprep.mubr.bf16.mxu0 0
  %2512 = vmatmul.mubr.bf16.gmra.mrb[0].mxu0 %v2358
  %v2513 = vpop.f32.mrb[0].mxu0
  %v2514 = vadd.f32 %v2381, %v2513
  %v2515 = vpop.f32.mrb[0].mxu0
  %v2516 = vpop.f32.mrb[0].mxu0
  %v2517 = vadd.f32 %v2381, %v2516
  %v2518 = vpop.f32.mrb[0].mxu0
  %2519 = vmatprep.mubr.bf16.mxu0 0
  %2520 = vmatmul.mubr.bf16.gmra.mrb[0].mxu0 %v2359
  %v2521 = vpop.f32.mrb[0].mxu0
  %v2522 = vadd.f32 %v2381, %v2521
  %v2523 = vpop.f32.mrb[0].mxu0
  %v2524 = vpop.f32.mrb[0].mxu0
  %v2525 = vadd.f32 %v2381, %v2524
  %v2526 = vpop.f32.mrb[0].mxu0
  %2527 = vdwg.mxu0
  %v2528 = vld [vmem:[%s2] sm:$0xff]
  %v2529 = vld [vmem:[%s2 + $0x8] sm:$0xff]
  %v2530 = vld [vmem:[%s2 + $0x10] sm:$0xff]
  %v2531 = vld [vmem:[%s2 + $0x18] sm:$0xff]
  %v2532 = vld [vmem:[%s2 + $0x20] sm:$0xff]
  %v2533 = vld [vmem:[%s2 + $0x28] sm:$0xff]
  %v2534 = vld [vmem:[%s2 + $0x30] sm:$0xff]
  %v2535 = vld [vmem:[%s2 + $0x38] sm:$0xff]
  %v2536 = vld [vmem:[%s2 + $0x40] sm:$0xff]
  %v2537 = vld [vmem:[%s2 + $0x48] sm:$0xff]
  %v2538 = vld [vmem:[%s2 + $0x50] sm:$0xff]
  %v2539 = vld [vmem:[%s2 + $0x58] sm:$0xff]
  %v2540 = vld [vmem:[%s2 + $0x60] sm:$0xff]
  %v2541 = vld [vmem:[%s2 + $0x68] sm:$0xff]
  %v2542 = vld [vmem:[%s2 + $0x70] sm:$0xff]
  %v2543 = vld [vmem:[%s2 + $0x78] sm:$0xff]
  %v2544 = vadd.f32 %v2466, %v2528
  %v2545 = vadd.f32 %v2469, %v2529
  %v2546 = vadd.f32 %v2474, %v2530
  %v2547 = vadd.f32 %v2477, %v2531
  %v2548 = vadd.f32 %v2482, %v2532
  %v2549 = vadd.f32 %v2485, %v2533
  %v2550 = vadd.f32 %v2490, %v2534
  %v2551 = vadd.f32 %v2493, %v2535
  %v2552 = vadd.f32 %v2498, %v2536
  %v2553 = vadd.f32 %v2501, %v2537
  %v2554 = vadd.f32 %v2506, %v2538
  %v2555 = vadd.f32 %v2509, %v2539
  %v2556 = vadd.f32 %v2514, %v2540
  %v2557 = vadd.f32 %v2517, %v2541
  %v2558 = vadd.f32 %v2522, %v2542
  %v2559 = vadd.f32 %v2525, %v2543
  %v2560 = vld [vmem:[%s17] sm:$0x1]
  %v2561 = vld [vmem:[%s18] sm:$0x1]
  %v2562 = vadd.f32 %v2544, %v2545
  %v2563 = vadd.f32 %v2562, %v2546
  %v2564 = vadd.f32 %v2563, %v2547
  %v2565 = vadd.f32 %v2564, %v2548
  %v2566 = vadd.f32 %v2565, %v2549
  %v2567 = vadd.f32 %v2566, %v2550
  %v2568 = vadd.f32 %v2567, %v2551
  %v2569 = vadd.f32 %v2568, %v2552
  %v2570 = vadd.f32 %v2569, %v2553
  %v2571 = vadd.f32 %v2570, %v2554
  %v2572 = vadd.f32 %v2571, %v2555
  %v2573 = vadd.f32 %v2572, %v2556
  %v2574 = vadd.f32 %v2573, %v2557
  %v2575 = vadd.f32 %v2574, %v2558
  %v2576 = vadd.f32 %v2575, %v2559
  %v2577 = vrot.slane %v2576, 4
  %v2578 = vadd.f32 %v2576, %v2577
  %v2579 = vrot.slane %v2578, 2
  %v2580 = vadd.f32 %v2578, %v2579
  %v2581 = vrot.slane %v2580, 1
  %v2582 = vadd.f32 %v2580, %v2581
  %v2583 = vmul.f32 %v2582, 0.0078125
  %v2584 = vmul.f32 %v2544, %v2544
  %v2585 = vmul.f32 %v2545, %v2545
  %v2586 = vmul.f32 %v2546, %v2546
  %v2587 = vmul.f32 %v2547, %v2547
  %v2588 = vmul.f32 %v2548, %v2548
  %v2589 = vmul.f32 %v2549, %v2549
  %v2590 = vmul.f32 %v2550, %v2550
  %v2591 = vmul.f32 %v2551, %v2551
  %v2592 = vmul.f32 %v2552, %v2552
  %v2593 = vmul.f32 %v2553, %v2553
  %v2594 = vmul.f32 %v2554, %v2554
  %v2595 = vmul.f32 %v2555, %v2555
  %v2596 = vmul.f32 %v2556, %v2556
  %v2597 = vmul.f32 %v2557, %v2557
  %v2598 = vmul.f32 %v2558, %v2558
  %v2599 = vmul.f32 %v2559, %v2559
  %v2600 = vadd.f32 %v2584, %v2585
  %v2601 = vadd.f32 %v2600, %v2586
  %v2602 = vadd.f32 %v2601, %v2587
  %v2603 = vadd.f32 %v2602, %v2588
  %v2604 = vadd.f32 %v2603, %v2589
  %v2605 = vadd.f32 %v2604, %v2590
  %v2606 = vadd.f32 %v2605, %v2591
  %v2607 = vadd.f32 %v2606, %v2592
  %v2608 = vadd.f32 %v2607, %v2593
  %v2609 = vadd.f32 %v2608, %v2594
  %v2610 = vadd.f32 %v2609, %v2595
  %v2611 = vadd.f32 %v2610, %v2596
  %v2612 = vadd.f32 %v2611, %v2597
  %v2613 = vadd.f32 %v2612, %v2598
  %v2614 = vadd.f32 %v2613, %v2599
  %v2615 = vrot.slane %v2614, 4
  %v2616 = vadd.f32 %v2614, %v2615
  %v2617 = vrot.slane %v2616, 2
  %v2618 = vadd.f32 %v2616, %v2617
  %v2619 = vrot.slane %v2618, 1
  %v2620 = vadd.f32 %v2618, %v2619
  %v2621 = vmul.f32 %v2620, 0.0078125
  %v2622 = vmul.f32 %v2583, %v2583
  %v2623 = vsub.f32 %v2621, %v2622
  %v2624 = vmax.f32 %v2623, 0.0
  %v2625 = vsub.f32 %v2544, %v2583
  %v2626 = vsub.f32 %v2545, %v2583
  %v2627 = vsub.f32 %v2546, %v2583
  %v2628 = vsub.f32 %v2547, %v2583
  %v2629 = vsub.f32 %v2548, %v2583
  %v2630 = vsub.f32 %v2549, %v2583
  %v2631 = vsub.f32 %v2550, %v2583
  %v2632 = vsub.f32 %v2551, %v2583
  %v2633 = vsub.f32 %v2552, %v2583
  %v2634 = vsub.f32 %v2553, %v2583
  %v2635 = vsub.f32 %v2554, %v2583
  %v2636 = vsub.f32 %v2555, %v2583
  %v2637 = vsub.f32 %v2556, %v2583
  %v2638 = vsub.f32 %v2557, %v2583
  %v2639 = vsub.f32 %v2558, %v2583
  %v2640 = vsub.f32 %v2559, %v2583
  %v2641 = vadd.f32 %v2624, 0.001
  %v2642 = vrsqrt.pop %v2641
  %v2643 = vmul.f32 %v2625, %v2642
  %v2644 = vmul.f32 %v2626, %v2642
  %v2645 = vmul.f32 %v2627, %v2642
  %v2646 = vmul.f32 %v2628, %v2642
  %v2647 = vmul.f32 %v2629, %v2642
  %v2648 = vmul.f32 %v2630, %v2642
  %v2649 = vmul.f32 %v2631, %v2642
  %v2650 = vmul.f32 %v2632, %v2642
  %v2651 = vmul.f32 %v2633, %v2642
  %v2652 = vmul.f32 %v2634, %v2642
  %v2653 = vmul.f32 %v2635, %v2642
  %v2654 = vmul.f32 %v2636, %v2642
  %v2655 = vmul.f32 %v2637, %v2642
  %v2656 = vmul.f32 %v2638, %v2642
  %v2657 = vmul.f32 %v2639, %v2642
  %v2658 = vmul.f32 %v2640, %v2642
  %v2660 = vlaneseq
  %v2661 = vshrl.u32 %v2660, 7
  %v2662 = vsub.s32 0, %v2661
  %v2663 = vrot.slane %v2560, %v2662
  %v2665 = vmul.f32 %v2643, %v2663
  %v2666 = vmul.f32 %v2644, %v2663
  %v2667 = vmul.f32 %v2645, %v2663
  %v2668 = vmul.f32 %v2646, %v2663
  %v2669 = vmul.f32 %v2647, %v2663
  %v2670 = vmul.f32 %v2648, %v2663
  %v2671 = vmul.f32 %v2649, %v2663
  %v2672 = vmul.f32 %v2650, %v2663
  %v2673 = vmul.f32 %v2651, %v2663
  %v2674 = vmul.f32 %v2652, %v2663
  %v2675 = vmul.f32 %v2653, %v2663
  %v2676 = vmul.f32 %v2654, %v2663
  %v2677 = vmul.f32 %v2655, %v2663
  %v2678 = vmul.f32 %v2656, %v2663
  %v2679 = vmul.f32 %v2657, %v2663
  %v2680 = vmul.f32 %v2658, %v2663
  %v2682 = vlaneseq
  %v2683 = vshrl.u32 %v2682, 7
  %v2684 = vsub.s32 0, %v2683
  %v2685 = vrot.slane %v2561, %v2684
  %v2687 = vadd.f32 %v2665, %v2685
  %v2688 = vadd.f32 %v2666, %v2685
  %v2689 = vadd.f32 %v2667, %v2685
  %v2690 = vadd.f32 %v2668, %v2685
  %v2691 = vadd.f32 %v2669, %v2685
  %v2692 = vadd.f32 %v2670, %v2685
  %v2693 = vadd.f32 %v2671, %v2685
  %v2694 = vadd.f32 %v2672, %v2685
  %v2695 = vadd.f32 %v2673, %v2685
  %v2696 = vadd.f32 %v2674, %v2685
  %v2697 = vadd.f32 %v2675, %v2685
  %v2698 = vadd.f32 %v2676, %v2685
  %v2699 = vadd.f32 %v2677, %v2685
  %v2700 = vadd.f32 %v2678, %v2685
  %v2701 = vadd.f32 %v2679, %v2685
  %v2702 = vadd.f32 %v2680, %v2685
  %vm2703 = vcmp.gt.f32.partialorder %v2687, 0.0
  %vm2704 = vcmp.gt.f32.partialorder %v2688, 0.0
  %vm2705 = vcmp.gt.f32.partialorder %v2689, 0.0
  %vm2706 = vcmp.gt.f32.partialorder %v2690, 0.0
  %vm2707 = vcmp.gt.f32.partialorder %v2691, 0.0
  %vm2708 = vcmp.gt.f32.partialorder %v2692, 0.0
  %vm2709 = vcmp.gt.f32.partialorder %v2693, 0.0
  %vm2710 = vcmp.gt.f32.partialorder %v2694, 0.0
  %vm2711 = vcmp.gt.f32.partialorder %v2695, 0.0
  %vm2712 = vcmp.gt.f32.partialorder %v2696, 0.0
  %vm2713 = vcmp.gt.f32.partialorder %v2697, 0.0
  %vm2714 = vcmp.gt.f32.partialorder %v2698, 0.0
  %vm2715 = vcmp.gt.f32.partialorder %v2699, 0.0
  %vm2716 = vcmp.gt.f32.partialorder %v2700, 0.0
  %vm2717 = vcmp.gt.f32.partialorder %v2701, 0.0
  %vm2718 = vcmp.gt.f32.partialorder %v2702, 0.0
  %v2719 = vmul.f32 %v2687, 1.442695
  %v2720 = vpow.pop %v2719
  %v2721 = vmul.f32 %v2688, 1.442695
  %v2722 = vpow.pop %v2721
  %v2723 = vmul.f32 %v2689, 1.442695
  %v2724 = vpow.pop %v2723
  %v2725 = vmul.f32 %v2690, 1.442695
  %v2726 = vpow.pop %v2725
  %v2727 = vmul.f32 %v2691, 1.442695
  %v2728 = vpow.pop %v2727
  %v2729 = vmul.f32 %v2692, 1.442695
  %v2730 = vpow.pop %v2729
  %v2731 = vmul.f32 %v2693, 1.442695
  %v2732 = vpow.pop %v2731
  %v2733 = vmul.f32 %v2694, 1.442695
  %v2734 = vpow.pop %v2733
  %v2735 = vmul.f32 %v2695, 1.442695
  %v2736 = vpow.pop %v2735
  %v2737 = vmul.f32 %v2696, 1.442695
  %v2738 = vpow.pop %v2737
  %v2739 = vmul.f32 %v2697, 1.442695
  %v2740 = vpow.pop %v2739
  %v2741 = vmul.f32 %v2698, 1.442695
  %v2742 = vpow.pop %v2741
  %v2743 = vmul.f32 %v2699, 1.442695
  %v2744 = vpow.pop %v2743
  %v2745 = vmul.f32 %v2700, 1.442695
  %v2746 = vpow.pop %v2745
  %v2747 = vmul.f32 %v2701, 1.442695
  %v2748 = vpow.pop %v2747
  %v2749 = vmul.f32 %v2702, 1.442695
  %v2750 = vpow.pop %v2749
  %v2751 = vsub.f32 %v2720, 1.0
  %v2752 = vsub.f32 %v2722, 1.0
  %v2753 = vsub.f32 %v2724, 1.0
  %v2754 = vsub.f32 %v2726, 1.0
  %v2755 = vsub.f32 %v2728, 1.0
  %v2756 = vsub.f32 %v2730, 1.0
  %v2757 = vsub.f32 %v2732, 1.0
  %v2758 = vsub.f32 %v2734, 1.0
  %v2759 = vsub.f32 %v2736, 1.0
  %v2760 = vsub.f32 %v2738, 1.0
  %v2761 = vsub.f32 %v2740, 1.0
  %v2762 = vsub.f32 %v2742, 1.0
  %v2763 = vsub.f32 %v2744, 1.0
  %v2764 = vsub.f32 %v2746, 1.0
  %v2765 = vsub.f32 %v2748, 1.0
  %v2766 = vsub.f32 %v2750, 1.0
  %v2767 = vmul.f32 %v2751, 1.6732632
  %v2768 = vmul.f32 %v2752, 1.6732632
  %v2769 = vmul.f32 %v2753, 1.6732632
  %v2770 = vmul.f32 %v2754, 1.6732632
  %v2771 = vmul.f32 %v2755, 1.6732632
  %v2772 = vmul.f32 %v2756, 1.6732632
  %v2773 = vmul.f32 %v2757, 1.6732632
  %v2774 = vmul.f32 %v2758, 1.6732632
  %v2775 = vmul.f32 %v2759, 1.6732632
  %v2776 = vmul.f32 %v2760, 1.6732632
  %v2777 = vmul.f32 %v2761, 1.6732632
  %v2778 = vmul.f32 %v2762, 1.6732632
  %v2779 = vmul.f32 %v2763, 1.6732632
  %v2780 = vmul.f32 %v2764, 1.6732632
  %v2781 = vmul.f32 %v2765, 1.6732632
  %v2782 = vmul.f32 %v2766, 1.6732632
  %v2783 = vsel %vm2703, %v2687, %v2767
  %v2784 = vsel %vm2704, %v2688, %v2768
  %v2785 = vsel %vm2705, %v2689, %v2769
  %v2786 = vsel %vm2706, %v2690, %v2770
  %v2787 = vsel %vm2707, %v2691, %v2771
  %v2788 = vsel %vm2708, %v2692, %v2772
  %v2789 = vsel %vm2709, %v2693, %v2773
  %v2790 = vsel %vm2710, %v2694, %v2774
  %v2791 = vsel %vm2711, %v2695, %v2775
  %v2792 = vsel %vm2712, %v2696, %v2776
  %v2793 = vsel %vm2713, %v2697, %v2777
  %v2794 = vsel %vm2714, %v2698, %v2778
  %v2795 = vsel %vm2715, %v2699, %v2779
  %v2796 = vsel %vm2716, %v2700, %v2780
  %v2797 = vsel %vm2717, %v2701, %v2781
  %v2798 = vsel %vm2718, %v2702, %v2782
  %v2799 = vmul.f32 %v2783, 1.050701
  %v2800 = vmul.f32 %v2784, 1.050701
  %v2801 = vmul.f32 %v2785, 1.050701
  %v2802 = vmul.f32 %v2786, 1.050701
  %v2803 = vmul.f32 %v2787, 1.050701
  %v2804 = vmul.f32 %v2788, 1.050701
  %v2805 = vmul.f32 %v2789, 1.050701
  %v2806 = vmul.f32 %v2790, 1.050701
  %v2807 = vmul.f32 %v2791, 1.050701
  %v2808 = vmul.f32 %v2792, 1.050701
  %v2809 = vmul.f32 %v2793, 1.050701
  %v2810 = vmul.f32 %v2794, 1.050701
  %v2811 = vmul.f32 %v2795, 1.050701
  %v2812 = vmul.f32 %v2796, 1.050701
  %v2813 = vmul.f32 %v2797, 1.050701
  %v2814 = vmul.f32 %v2798, 1.050701
  %v2815 = vpack.c.bf16 %v2800, %v2799
  %v2816 = vpack.c.bf16 %v2802, %v2801
  %v2817 = vpack.c.bf16 %v2804, %v2803
  %v2818 = vpack.c.bf16 %v2806, %v2805
  %v2819 = vpack.c.bf16 %v2808, %v2807
  %v2820 = vpack.c.bf16 %v2810, %v2809
  %v2821 = vpack.c.bf16 %v2812, %v2811
  %v2822 = vpack.c.bf16 %v2814, %v2813
  %v2823 = vld [vmem:[%s19] sm:$0xff]
  %v2824 = vld [vmem:[%s19 + $0x8] sm:$0xff]
  %v2825 = vld [vmem:[%s19 + $0x10] sm:$0xff]
  %v2826 = vld [vmem:[%s19 + $0x18] sm:$0xff]
  %v2827 = vld [vmem:[%s19 + $0x20] sm:$0xff]
  %v2828 = vld [vmem:[%s19 + $0x28] sm:$0xff]
  %v2829 = vld [vmem:[%s19 + $0x30] sm:$0xff]
  %v2830 = vld [vmem:[%s19 + $0x38] sm:$0xff]
  %v2831 = vld [vmem:[%s19 + $0x40] sm:$0xff]
  %v2832 = vld [vmem:[%s19 + $0x48] sm:$0xff]
  %v2833 = vld [vmem:[%s19 + $0x50] sm:$0xff]
  %v2834 = vld [vmem:[%s19 + $0x58] sm:$0xff]
  %v2835 = vld [vmem:[%s19 + $0x60] sm:$0xff]
  %v2836 = vld [vmem:[%s19 + $0x68] sm:$0xff]
  %v2837 = vld [vmem:[%s19 + $0x70] sm:$0xff]
  %v2838 = vld [vmem:[%s19 + $0x78] sm:$0xff]
  %v2839 = vld [vmem:[%s20] sm:$0x3]
  %v2841 = vlaneseq
  %v2842 = vshrl.u32 %v2841, 7
  %v2843 = vsub.s32 0, %v2842
  %v2844 = vrot.slane %v2839, %v2843
  %v2845 = vlaneseq
  %v2846 = vshrl.u32 %v2845, 7
  %v2847 = vsub.s32 1, %v2846
  %v2848 = vrot.slane %v2839, %v2847
  %v2867 = vunpack.c.l.b16 %v2823
  %v2868 = vunpack.c.h.b16 %v2823
  %v2869 = vunpack.c.l.b16 %v2824
  %v2870 = vunpack.c.h.b16 %v2824
  %v2871 = vunpack.c.l.b16 %v2825
  %v2872 = vunpack.c.h.b16 %v2825
  %v2873 = vunpack.c.l.b16 %v2826
  %v2874 = vunpack.c.h.b16 %v2826
  %v2875 = vunpack.c.l.b16 %v2827
  %v2876 = vunpack.c.h.b16 %v2827
  %v2877 = vunpack.c.l.b16 %v2828
  %v2878 = vunpack.c.h.b16 %v2828
  %v2879 = vunpack.c.l.b16 %v2829
  %v2880 = vunpack.c.h.b16 %v2829
  %v2881 = vunpack.c.l.b16 %v2830
  %v2882 = vunpack.c.h.b16 %v2830
  %v2883 = vunpack.c.l.b16 %v2831
  %v2884 = vunpack.c.h.b16 %v2831
  %v2885 = vunpack.c.l.b16 %v2832
  %v2886 = vunpack.c.h.b16 %v2832
  %v2887 = vunpack.c.l.b16 %v2833
  %v2888 = vunpack.c.h.b16 %v2833
  %v2889 = vunpack.c.l.b16 %v2834
  %v2890 = vunpack.c.h.b16 %v2834
  %v2891 = vunpack.c.l.b16 %v2835
  %v2892 = vunpack.c.h.b16 %v2835
  %v2893 = vunpack.c.l.b16 %v2836
  %v2894 = vunpack.c.h.b16 %v2836
  %v2895 = vunpack.c.l.b16 %v2837
  %v2896 = vunpack.c.h.b16 %v2837
  %v2897 = vunpack.c.l.b16 %v2838
  %v2898 = vunpack.c.h.b16 %v2838
  %v2899 = vpack.c.b16 %v2869, %v2867
  %v2900 = vpack.c.b16 %v2870, %v2868
  %v2901 = vpack.c.b16 %v2873, %v2871
  %v2902 = vpack.c.b16 %v2874, %v2872
  %v2903 = vpack.c.b16 %v2877, %v2875
  %v2904 = vpack.c.b16 %v2878, %v2876
  %v2905 = vpack.c.b16 %v2881, %v2879
  %v2906 = vpack.c.b16 %v2882, %v2880
  %v2907 = vpack.c.b16 %v2885, %v2883
  %v2908 = vpack.c.b16 %v2886, %v2884
  %v2909 = vpack.c.b16 %v2889, %v2887
  %v2910 = vpack.c.b16 %v2890, %v2888
  %v2911 = vpack.c.b16 %v2893, %v2891
  %v2912 = vpack.c.b16 %v2894, %v2892
  %v2913 = vpack.c.b16 %v2897, %v2895
  %v2914 = vpack.c.b16 %v2898, %v2896
  %2931 = vmatprep.subr.bf16.mxu0 %v2900
  %2932 = vmatpush1.bf16.msra.mxu0 %v2899
  %2933 = vmatprep.subr.bf16.mxu0 %v2902
  %2934 = vmatpush1.bf16.msra.mxu0 %v2901
  %2935 = vmatprep.subr.bf16.mxu0 %v2904
  %2936 = vmatpush1.bf16.msra.mxu0 %v2903
  %2937 = vmatprep.subr.bf16.mxu0 %v2906
  %2938 = vmatpush1.bf16.msra.mxu0 %v2905
  %2939 = vmatprep.subr.bf16.mxu0 %v2908
  %2940 = vmatpush1.bf16.msra.mxu0 %v2907
  %2941 = vmatprep.subr.bf16.mxu0 %v2910
  %2942 = vmatpush1.bf16.msra.mxu0 %v2909
  %2943 = vmatprep.subr.bf16.mxu0 %v2912
  %2944 = vmatpush1.bf16.msra.mxu0 %v2911
  %2945 = vmatprep.subr.bf16.mxu0 %v2914
  %2946 = vmatpush1.bf16.msra.mxu0 %v2913
  %2947 = vmatprep.subr.bf16.mxu0 0
  %2948 = vmatpush1.bf16.msra.mxu0 0
  %2949 = vmatprep.subr.bf16.mxu0 0
  %2950 = vmatpush1.bf16.msra.mxu0 0
  %2951 = vmatprep.subr.bf16.mxu0 0
  %2952 = vmatpush1.bf16.msra.mxu0 0
  %2953 = vmatprep.subr.bf16.mxu0 0
  %2954 = vmatpush1.bf16.msra.mxu0 0
  %2955 = vmatprep.subr.bf16.mxu0 0
  %2956 = vmatpush1.bf16.msra.mxu0 0
  %2957 = vmatprep.subr.bf16.mxu0 0
  %2958 = vmatpush1.bf16.msra.mxu0 0
  %2959 = vmatprep.subr.bf16.mxu0 0
  %2960 = vmatpush1.bf16.msra.mxu0 0
  %2961 = vmatprep.subr.bf16.mxu0 0
  %2962 = vmatpush1.bf16.msra.mxu0 0
  %2963 = vmatprep.mubr.bf16.mxu0 0
  %2964 = vmatmul.mubr.bf16.gmra.mrb[0].mxu0 %v2815
  %v2965 = vpop.f32.mrb[0].mxu0
  %v2966 = vadd.f32 %v2844, %v2965
  %v2967 = vpop.f32.mrb[0].mxu0
  %v2968 = vadd.f32 %v2848, %v2967
  %v2969 = vpop.f32.mrb[0].mxu0
  %v2970 = vadd.f32 %v2844, %v2969
  %v2971 = vpop.f32.mrb[0].mxu0
  %v2972 = vadd.f32 %v2848, %v2971
  %2973 = vmatprep.mubr.bf16.mxu0 0
  %2974 = vmatmul.mubr.bf16.gmra.mrb[0].mxu0 %v2816
  %v2975 = vpop.f32.mrb[0].mxu0
  %v2976 = vadd.f32 %v2844, %v2975
  %v2977 = vpop.f32.mrb[0].mxu0
  %v2978 = vadd.f32 %v2848, %v2977
  %v2979 = vpop.f32.mrb[0].mxu0
  %v2980 = vadd.f32 %v2844, %v2979
  %v2981 = vpop.f32.mrb[0].mxu0
  %v2982 = vadd.f32 %v2848, %v2981
  %2983 = vmatprep.mubr.bf16.mxu0 0
  %2984 = vmatmul.mubr.bf16.gmra.mrb[0].mxu0 %v2817
  %v2985 = vpop.f32.mrb[0].mxu0
  %v2986 = vadd.f32 %v2844, %v2985
  %v2987 = vpop.f32.mrb[0].mxu0
  %v2988 = vadd.f32 %v2848, %v2987
  %v2989 = vpop.f32.mrb[0].mxu0
  %v2990 = vadd.f32 %v2844, %v2989
  %v2991 = vpop.f32.mrb[0].mxu0
  %v2992 = vadd.f32 %v2848, %v2991
  %2993 = vmatprep.mubr.bf16.mxu0 0
  %2994 = vmatmul.mubr.bf16.gmra.mrb[0].mxu0 %v2818
  %v2995 = vpop.f32.mrb[0].mxu0
  %v2996 = vadd.f32 %v2844, %v2995
  %v2997 = vpop.f32.mrb[0].mxu0
  %v2998 = vadd.f32 %v2848, %v2997
  %v2999 = vpop.f32.mrb[0].mxu0
  %v3000 = vadd.f32 %v2844, %v2999
  %v3001 = vpop.f32.mrb[0].mxu0
  %v3002 = vadd.f32 %v2848, %v3001
  %3003 = vmatprep.mubr.bf16.mxu0 0
  %3004 = vmatmul.mubr.bf16.gmra.mrb[0].mxu0 %v2819
  %v3005 = vpop.f32.mrb[0].mxu0
  %v3006 = vadd.f32 %v2844, %v3005
  %v3007 = vpop.f32.mrb[0].mxu0
  %v3008 = vadd.f32 %v2848, %v3007
  %v3009 = vpop.f32.mrb[0].mxu0
  %v3010 = vadd.f32 %v2844, %v3009
  %v3011 = vpop.f32.mrb[0].mxu0
  %v3012 = vadd.f32 %v2848, %v3011
  %3013 = vmatprep.mubr.bf16.mxu0 0
  %3014 = vmatmul.mubr.bf16.gmra.mrb[0].mxu0 %v2820
  %v3015 = vpop.f32.mrb[0].mxu0
  %v3016 = vadd.f32 %v2844, %v3015
  %v3017 = vpop.f32.mrb[0].mxu0
  %v3018 = vadd.f32 %v2848, %v3017
  %v3019 = vpop.f32.mrb[0].mxu0
  %v3020 = vadd.f32 %v2844, %v3019
  %v3021 = vpop.f32.mrb[0].mxu0
  %v3022 = vadd.f32 %v2848, %v3021
  %3023 = vmatprep.mubr.bf16.mxu0 0
  %3024 = vmatmul.mubr.bf16.gmra.mrb[0].mxu0 %v2821
  %v3025 = vpop.f32.mrb[0].mxu0
  %v3026 = vadd.f32 %v2844, %v3025
  %v3027 = vpop.f32.mrb[0].mxu0
  %v3028 = vadd.f32 %v2848, %v3027
  %v3029 = vpop.f32.mrb[0].mxu0
  %v3030 = vadd.f32 %v2844, %v3029
  %v3031 = vpop.f32.mrb[0].mxu0
  %v3032 = vadd.f32 %v2848, %v3031
  %3033 = vmatprep.mubr.bf16.mxu0 0
  %3034 = vmatmul.mubr.bf16.gmra.mrb[0].mxu0 %v2822
  %v3035 = vpop.f32.mrb[0].mxu0
  %v3036 = vadd.f32 %v2844, %v3035
  %v3037 = vpop.f32.mrb[0].mxu0
  %v3038 = vadd.f32 %v2848, %v3037
  %v3039 = vpop.f32.mrb[0].mxu0
  %v3040 = vadd.f32 %v2844, %v3039
  %v3041 = vpop.f32.mrb[0].mxu0
  %v3042 = vadd.f32 %v2848, %v3041
  %3043 = vdwg.mxu0
  %v3044 = vld [vmem:[%s21] sm:$0x3]
  %v3045 = vld [vmem:[%s22] sm:$0x3]
  %v3046 = vadd.f32 %v2966, %v2970
  %v3047 = vadd.f32 %v3046, %v2976
  %v3048 = vadd.f32 %v3047, %v2980
  %v3049 = vadd.f32 %v3048, %v2986
  %v3050 = vadd.f32 %v3049, %v2990
  %v3051 = vadd.f32 %v3050, %v2996
  %v3052 = vadd.f32 %v3051, %v3000
  %v3053 = vadd.f32 %v3052, %v3006
  %v3054 = vadd.f32 %v3053, %v3010
  %v3055 = vadd.f32 %v3054, %v3016
  %v3056 = vadd.f32 %v3055, %v3020
  %v3057 = vadd.f32 %v3056, %v3026
  %v3058 = vadd.f32 %v3057, %v3030
  %v3059 = vadd.f32 %v3058, %v3036
  %v3060 = vadd.f32 %v3059, %v3040
  %v3061 = vrot.slane %v3060, 4
  %v3062 = vadd.f32 %v3060, %v3061
  %v3063 = vrot.slane %v3062, 2
  %v3064 = vadd.f32 %v3062, %v3063
  %v3065 = vrot.slane %v3064, 1
  %v3066 = vadd.f32 %v3064, %v3065
  %v3067 = vadd.f32 %v2968, %v2972
  %v3068 = vadd.f32 %v3067, %v2978
  %v3069 = vadd.f32 %v3068, %v2982
  %v3070 = vadd.f32 %v3069, %v2988
  %v3071 = vadd.f32 %v3070, %v2992
  %v3072 = vadd.f32 %v3071, %v2998
  %v3073 = vadd.f32 %v3072, %v3002
  %v3074 = vadd.f32 %v3073, %v3008
  %v3075 = vadd.f32 %v3074, %v3012
  %v3076 = vadd.f32 %v3075, %v3018
  %v3077 = vadd.f32 %v3076, %v3022
  %v3078 = vadd.f32 %v3077, %v3028
  %v3079 = vadd.f32 %v3078, %v3032
  %v3080 = vadd.f32 %v3079, %v3038
  %v3081 = vadd.f32 %v3080, %v3042
  %v3082 = vrot.slane %v3081, 4
  %v3083 = vadd.f32 %v3081, %v3082
  %v3084 = vrot.slane %v3083, 2
  %v3085 = vadd.f32 %v3083, %v3084
  %v3086 = vrot.slane %v3085, 1
  %v3087 = vadd.f32 %v3085, %v3086
  %v3088 = vmul.f32 %v3066, 0.0078125
  %v3089 = vmul.f32 %v3087, 0.0078125
  %v3090 = vmul.f32 %v2966, %v2966
  %v3091 = vmul.f32 %v2968, %v2968
  %v3092 = vmul.f32 %v2970, %v2970
  %v3093 = vmul.f32 %v2972, %v2972
  %v3094 = vmul.f32 %v2976, %v2976
  %v3095 = vmul.f32 %v2978, %v2978
  %v3096 = vmul.f32 %v2980, %v2980
  %v3097 = vmul.f32 %v2982, %v2982
  %v3098 = vmul.f32 %v2986, %v2986
  %v3099 = vmul.f32 %v2988, %v2988
  %v3100 = vmul.f32 %v2990, %v2990
  %v3101 = vmul.f32 %v2992, %v2992
  %v3102 = vmul.f32 %v2996, %v2996
  %v3103 = vmul.f32 %v2998, %v2998
  %v3104 = vmul.f32 %v3000, %v3000
  %v3105 = vmul.f32 %v3002, %v3002
  %v3106 = vmul.f32 %v3006, %v3006
  %v3107 = vmul.f32 %v3008, %v3008
  %v3108 = vmul.f32 %v3010, %v3010
  %v3109 = vmul.f32 %v3012, %v3012
  %v3110 = vmul.f32 %v3016, %v3016
  %v3111 = vmul.f32 %v3018, %v3018
  %v3112 = vmul.f32 %v3020, %v3020
  %v3113 = vmul.f32 %v3022, %v3022
  %v3114 = vmul.f32 %v3026, %v3026
  %v3115 = vmul.f32 %v3028, %v3028
  %v3116 = vmul.f32 %v3030, %v3030
  %v3117 = vmul.f32 %v3032, %v3032
  %v3118 = vmul.f32 %v3036, %v3036
  %v3119 = vmul.f32 %v3038, %v3038
  %v3120 = vmul.f32 %v3040, %v3040
  %v3121 = vmul.f32 %v3042, %v3042
  %v3122 = vadd.f32 %v3090, %v3092
  %v3123 = vadd.f32 %v3122, %v3094
  %v3124 = vadd.f32 %v3123, %v3096
  %v3125 = vadd.f32 %v3124, %v3098
  %v3126 = vadd.f32 %v3125, %v3100
  %v3127 = vadd.f32 %v3126, %v3102
  %v3128 = vadd.f32 %v3127, %v3104
  %v3129 = vadd.f32 %v3128, %v3106
  %v3130 = vadd.f32 %v3129, %v3108
  %v3131 = vadd.f32 %v3130, %v3110
  %v3132 = vadd.f32 %v3131, %v3112
  %v3133 = vadd.f32 %v3132, %v3114
  %v3134 = vadd.f32 %v3133, %v3116
  %v3135 = vadd.f32 %v3134, %v3118
  %v3136 = vadd.f32 %v3135, %v3120
  %v3137 = vrot.slane %v3136, 4
  %v3138 = vadd.f32 %v3136, %v3137
  %v3139 = vrot.slane %v3138, 2
  %v3140 = vadd.f32 %v3138, %v3139
  %v3141 = vrot.slane %v3140, 1
  %v3142 = vadd.f32 %v3140, %v3141
  %v3143 = vadd.f32 %v3091, %v3093
  %v3144 = vadd.f32 %v3143, %v3095
  %v3145 = vadd.f32 %v3144, %v3097
  %v3146 = vadd.f32 %v3145, %v3099
  %v3147 = vadd.f32 %v3146, %v3101
  %v3148 = vadd.f32 %v3147, %v3103
  %v3149 = vadd.f32 %v3148, %v3105
  %v3150 = vadd.f32 %v3149, %v3107
  %v3151 = vadd.f32 %v3150, %v3109
  %v3152 = vadd.f32 %v3151, %v3111
  %v3153 = vadd.f32 %v3152, %v3113
  %v3154 = vadd.f32 %v3153, %v3115
  %v3155 = vadd.f32 %v3154, %v3117
  %v3156 = vadd.f32 %v3155, %v3119
  %v3157 = vadd.f32 %v3156, %v3121
  %v3158 = vrot.slane %v3157, 4
  %v3159 = vadd.f32 %v3157, %v3158
  %v3160 = vrot.slane %v3159, 2
  %v3161 = vadd.f32 %v3159, %v3160
  %v3162 = vrot.slane %v3161, 1
  %v3163 = vadd.f32 %v3161, %v3162
  %v3164 = vmul.f32 %v3142, 0.0078125
  %v3165 = vmul.f32 %v3163, 0.0078125
  %v3166 = vmul.f32 %v3088, %v3088
  %v3167 = vmul.f32 %v3089, %v3089
  %v3168 = vsub.f32 %v3164, %v3166
  %v3169 = vsub.f32 %v3165, %v3167
  %v3170 = vmax.f32 %v3168, 0.0
  %v3171 = vmax.f32 %v3169, 0.0
  %v3172 = vsub.f32 %v2966, %v3088
  %v3173 = vsub.f32 %v2968, %v3089
  %v3174 = vsub.f32 %v2970, %v3088
  %v3175 = vsub.f32 %v2972, %v3089
  %v3176 = vsub.f32 %v2976, %v3088
  %v3177 = vsub.f32 %v2978, %v3089
  %v3178 = vsub.f32 %v2980, %v3088
  %v3179 = vsub.f32 %v2982, %v3089
  %v3180 = vsub.f32 %v2986, %v3088
  %v3181 = vsub.f32 %v2988, %v3089
  %v3182 = vsub.f32 %v2990, %v3088
  %v3183 = vsub.f32 %v2992, %v3089
  %v3184 = vsub.f32 %v2996, %v3088
  %v3185 = vsub.f32 %v2998, %v3089
  %v3186 = vsub.f32 %v3000, %v3088
  %v3187 = vsub.f32 %v3002, %v3089
  %v3188 = vsub.f32 %v3006, %v3088
  %v3189 = vsub.f32 %v3008, %v3089
  %v3190 = vsub.f32 %v3010, %v3088
  %v3191 = vsub.f32 %v3012, %v3089
  %v3192 = vsub.f32 %v3016, %v3088
  %v3193 = vsub.f32 %v3018, %v3089
  %v3194 = vsub.f32 %v3020, %v3088
  %v3195 = vsub.f32 %v3022, %v3089
  %v3196 = vsub.f32 %v3026, %v3088
  %v3197 = vsub.f32 %v3028, %v3089
  %v3198 = vsub.f32 %v3030, %v3088
  %v3199 = vsub.f32 %v3032, %v3089
  %v3200 = vsub.f32 %v3036, %v3088
  %v3201 = vsub.f32 %v3038, %v3089
  %v3202 = vsub.f32 %v3040, %v3088
  %v3203 = vsub.f32 %v3042, %v3089
  %v3204 = vadd.f32 %v3170, 0.001
  %v3205 = vadd.f32 %v3171, 0.001
  %v3206 = vrsqrt.pop %v3204
  %v3207 = vrsqrt.pop %v3205
  %v3208 = vmul.f32 %v3172, %v3206
  %v3209 = vmul.f32 %v3173, %v3207
  %v3210 = vmul.f32 %v3174, %v3206
  %v3211 = vmul.f32 %v3175, %v3207
  %v3212 = vmul.f32 %v3176, %v3206
  %v3213 = vmul.f32 %v3177, %v3207
  %v3214 = vmul.f32 %v3178, %v3206
  %v3215 = vmul.f32 %v3179, %v3207
  %v3216 = vmul.f32 %v3180, %v3206
  %v3217 = vmul.f32 %v3181, %v3207
  %v3218 = vmul.f32 %v3182, %v3206
  %v3219 = vmul.f32 %v3183, %v3207
  %v3220 = vmul.f32 %v3184, %v3206
  %v3221 = vmul.f32 %v3185, %v3207
  %v3222 = vmul.f32 %v3186, %v3206
  %v3223 = vmul.f32 %v3187, %v3207
  %v3224 = vmul.f32 %v3188, %v3206
  %v3225 = vmul.f32 %v3189, %v3207
  %v3226 = vmul.f32 %v3190, %v3206
  %v3227 = vmul.f32 %v3191, %v3207
  %v3228 = vmul.f32 %v3192, %v3206
  %v3229 = vmul.f32 %v3193, %v3207
  %v3230 = vmul.f32 %v3194, %v3206
  %v3231 = vmul.f32 %v3195, %v3207
  %v3232 = vmul.f32 %v3196, %v3206
  %v3233 = vmul.f32 %v3197, %v3207
  %v3234 = vmul.f32 %v3198, %v3206
  %v3235 = vmul.f32 %v3199, %v3207
  %v3236 = vmul.f32 %v3200, %v3206
  %v3237 = vmul.f32 %v3201, %v3207
  %v3238 = vmul.f32 %v3202, %v3206
  %v3239 = vmul.f32 %v3203, %v3207
  %v3241 = vlaneseq
  %v3242 = vshrl.u32 %v3241, 7
  %v3243 = vsub.s32 0, %v3242
  %v3244 = vrot.slane %v3044, %v3243
  %v3245 = vlaneseq
  %v3246 = vshrl.u32 %v3245, 7
  %v3247 = vsub.s32 1, %v3246
  %v3248 = vrot.slane %v3044, %v3247
  %v3251 = vmul.f32 %v3208, %v3244
  %v3252 = vmul.f32 %v3209, %v3248
  %v3253 = vmul.f32 %v3210, %v3244
  %v3254 = vmul.f32 %v3211, %v3248
  %v3255 = vmul.f32 %v3212, %v3244
  %v3256 = vmul.f32 %v3213, %v3248
  %v3257 = vmul.f32 %v3214, %v3244
  %v3258 = vmul.f32 %v3215, %v3248
  %v3259 = vmul.f32 %v3216, %v3244
  %v3260 = vmul.f32 %v3217, %v3248
  %v3261 = vmul.f32 %v3218, %v3244
  %v3262 = vmul.f32 %v3219, %v3248
  %v3263 = vmul.f32 %v3220, %v3244
  %v3264 = vmul.f32 %v3221, %v3248
  %v3265 = vmul.f32 %v3222, %v3244
  %v3266 = vmul.f32 %v3223, %v3248
  %v3267 = vmul.f32 %v3224, %v3244
  %v3268 = vmul.f32 %v3225, %v3248
  %v3269 = vmul.f32 %v3226, %v3244
  %v3270 = vmul.f32 %v3227, %v3248
  %v3271 = vmul.f32 %v3228, %v3244
  %v3272 = vmul.f32 %v3229, %v3248
  %v3273 = vmul.f32 %v3230, %v3244
  %v3274 = vmul.f32 %v3231, %v3248
  %v3275 = vmul.f32 %v3232, %v3244
  %v3276 = vmul.f32 %v3233, %v3248
  %v3277 = vmul.f32 %v3234, %v3244
  %v3278 = vmul.f32 %v3235, %v3248
  %v3279 = vmul.f32 %v3236, %v3244
  %v3280 = vmul.f32 %v3237, %v3248
  %v3281 = vmul.f32 %v3238, %v3244
  %v3282 = vmul.f32 %v3239, %v3248
  %v3284 = vlaneseq
  %v3285 = vshrl.u32 %v3284, 7
  %v3286 = vsub.s32 0, %v3285
  %v3287 = vrot.slane %v3045, %v3286
  %v3288 = vlaneseq
  %v3289 = vshrl.u32 %v3288, 7
  %v3290 = vsub.s32 1, %v3289
  %v3291 = vrot.slane %v3045, %v3290
  %v3294 = vadd.f32 %v3251, %v3287
  %v3295 = vadd.f32 %v3252, %v3291
  %v3296 = vadd.f32 %v3253, %v3287
  %v3297 = vadd.f32 %v3254, %v3291
  %v3298 = vadd.f32 %v3255, %v3287
  %v3299 = vadd.f32 %v3256, %v3291
  %v3300 = vadd.f32 %v3257, %v3287
  %v3301 = vadd.f32 %v3258, %v3291
  %v3302 = vadd.f32 %v3259, %v3287
  %v3303 = vadd.f32 %v3260, %v3291
  %v3304 = vadd.f32 %v3261, %v3287
  %v3305 = vadd.f32 %v3262, %v3291
  %v3306 = vadd.f32 %v3263, %v3287
  %v3307 = vadd.f32 %v3264, %v3291
  %v3308 = vadd.f32 %v3265, %v3287
  %v3309 = vadd.f32 %v3266, %v3291
  %v3310 = vadd.f32 %v3267, %v3287
  %v3311 = vadd.f32 %v3268, %v3291
  %v3312 = vadd.f32 %v3269, %v3287
  %v3313 = vadd.f32 %v3270, %v3291
  %v3314 = vadd.f32 %v3271, %v3287
  %v3315 = vadd.f32 %v3272, %v3291
  %v3316 = vadd.f32 %v3273, %v3287
  %v3317 = vadd.f32 %v3274, %v3291
  %v3318 = vadd.f32 %v3275, %v3287
  %v3319 = vadd.f32 %v3276, %v3291
  %v3320 = vadd.f32 %v3277, %v3287
  %v3321 = vadd.f32 %v3278, %v3291
  %v3322 = vadd.f32 %v3279, %v3287
  %v3323 = vadd.f32 %v3280, %v3291
  %v3324 = vadd.f32 %v3281, %v3287
  %v3325 = vadd.f32 %v3282, %v3291
  %vm3326 = vcmp.gt.f32.partialorder %v3294, 0.0
  %vm3327 = vcmp.gt.f32.partialorder %v3295, 0.0
  %vm3328 = vcmp.gt.f32.partialorder %v3296, 0.0
  %vm3329 = vcmp.gt.f32.partialorder %v3297, 0.0
  %vm3330 = vcmp.gt.f32.partialorder %v3298, 0.0
  %vm3331 = vcmp.gt.f32.partialorder %v3299, 0.0
  %vm3332 = vcmp.gt.f32.partialorder %v3300, 0.0
  %vm3333 = vcmp.gt.f32.partialorder %v3301, 0.0
  %vm3334 = vcmp.gt.f32.partialorder %v3302, 0.0
  %vm3335 = vcmp.gt.f32.partialorder %v3303, 0.0
  %vm3336 = vcmp.gt.f32.partialorder %v3304, 0.0
  %vm3337 = vcmp.gt.f32.partialorder %v3305, 0.0
  %vm3338 = vcmp.gt.f32.partialorder %v3306, 0.0
  %vm3339 = vcmp.gt.f32.partialorder %v3307, 0.0
  %vm3340 = vcmp.gt.f32.partialorder %v3308, 0.0
  %vm3341 = vcmp.gt.f32.partialorder %v3309, 0.0
  %vm3342 = vcmp.gt.f32.partialorder %v3310, 0.0
  %vm3343 = vcmp.gt.f32.partialorder %v3311, 0.0
  %vm3344 = vcmp.gt.f32.partialorder %v3312, 0.0
  %vm3345 = vcmp.gt.f32.partialorder %v3313, 0.0
  %vm3346 = vcmp.gt.f32.partialorder %v3314, 0.0
  %vm3347 = vcmp.gt.f32.partialorder %v3315, 0.0
  %vm3348 = vcmp.gt.f32.partialorder %v3316, 0.0
  %vm3349 = vcmp.gt.f32.partialorder %v3317, 0.0
  %vm3350 = vcmp.gt.f32.partialorder %v3318, 0.0
  %vm3351 = vcmp.gt.f32.partialorder %v3319, 0.0
  %vm3352 = vcmp.gt.f32.partialorder %v3320, 0.0
  %vm3353 = vcmp.gt.f32.partialorder %v3321, 0.0
  %vm3354 = vcmp.gt.f32.partialorder %v3322, 0.0
  %vm3355 = vcmp.gt.f32.partialorder %v3323, 0.0
  %vm3356 = vcmp.gt.f32.partialorder %v3324, 0.0
  %vm3357 = vcmp.gt.f32.partialorder %v3325, 0.0
  %v3358 = vmul.f32 %v3294, 1.442695
  %v3359 = vpow.pop %v3358
  %v3360 = vmul.f32 %v3295, 1.442695
  %v3361 = vpow.pop %v3360
  %v3362 = vmul.f32 %v3296, 1.442695
  %v3363 = vpow.pop %v3362
  %v3364 = vmul.f32 %v3297, 1.442695
  %v3365 = vpow.pop %v3364
  %v3366 = vmul.f32 %v3298, 1.442695
  %v3367 = vpow.pop %v3366
  %v3368 = vmul.f32 %v3299, 1.442695
  %v3369 = vpow.pop %v3368
  %v3370 = vmul.f32 %v3300, 1.442695
  %v3371 = vpow.pop %v3370
  %v3372 = vmul.f32 %v3301, 1.442695
  %v3373 = vpow.pop %v3372
  %v3374 = vmul.f32 %v3302, 1.442695
  %v3375 = vpow.pop %v3374
  %v3376 = vmul.f32 %v3303, 1.442695
  %v3377 = vpow.pop %v3376
  %v3378 = vmul.f32 %v3304, 1.442695
  %v3379 = vpow.pop %v3378
  %v3380 = vmul.f32 %v3305, 1.442695
  %v3381 = vpow.pop %v3380
  %v3382 = vmul.f32 %v3306, 1.442695
  %v3383 = vpow.pop %v3382
  %v3384 = vmul.f32 %v3307, 1.442695
  %v3385 = vpow.pop %v3384
  %v3386 = vmul.f32 %v3308, 1.442695
  %v3387 = vpow.pop %v3386
  %v3388 = vmul.f32 %v3309, 1.442695
  %v3389 = vpow.pop %v3388
  %v3390 = vmul.f32 %v3310, 1.442695
  %v3391 = vpow.pop %v3390
  %v3392 = vmul.f32 %v3311, 1.442695
  %v3393 = vpow.pop %v3392
  %v3394 = vmul.f32 %v3312, 1.442695
  %v3395 = vpow.pop %v3394
  %v3396 = vmul.f32 %v3313, 1.442695
  %v3397 = vpow.pop %v3396
  %v3398 = vmul.f32 %v3314, 1.442695
  %v3399 = vpow.pop %v3398
  %v3400 = vmul.f32 %v3315, 1.442695
  %v3401 = vpow.pop %v3400
  %v3402 = vmul.f32 %v3316, 1.442695
  %v3403 = vpow.pop %v3402
  %v3404 = vmul.f32 %v3317, 1.442695
  %v3405 = vpow.pop %v3404
  %v3406 = vmul.f32 %v3318, 1.442695
  %v3407 = vpow.pop %v3406
  %v3408 = vmul.f32 %v3319, 1.442695
  %v3409 = vpow.pop %v3408
  %v3410 = vmul.f32 %v3320, 1.442695
  %v3411 = vpow.pop %v3410
  %v3412 = vmul.f32 %v3321, 1.442695
  %v3413 = vpow.pop %v3412
  %v3414 = vmul.f32 %v3322, 1.442695
  %v3415 = vpow.pop %v3414
  %v3416 = vmul.f32 %v3323, 1.442695
  %v3417 = vpow.pop %v3416
  %v3418 = vmul.f32 %v3324, 1.442695
  %v3419 = vpow.pop %v3418
  %v3420 = vmul.f32 %v3325, 1.442695
  %v3421 = vpow.pop %v3420
  %v3422 = vsub.f32 %v3359, 1.0
  %v3423 = vsub.f32 %v3361, 1.0
  %v3424 = vsub.f32 %v3363, 1.0
  %v3425 = vsub.f32 %v3365, 1.0
  %v3426 = vsub.f32 %v3367, 1.0
  %v3427 = vsub.f32 %v3369, 1.0
  %v3428 = vsub.f32 %v3371, 1.0
  %v3429 = vsub.f32 %v3373, 1.0
  %v3430 = vsub.f32 %v3375, 1.0
  %v3431 = vsub.f32 %v3377, 1.0
  %v3432 = vsub.f32 %v3379, 1.0
  %v3433 = vsub.f32 %v3381, 1.0
  %v3434 = vsub.f32 %v3383, 1.0
  %v3435 = vsub.f32 %v3385, 1.0
  %v3436 = vsub.f32 %v3387, 1.0
  %v3437 = vsub.f32 %v3389, 1.0
  %v3438 = vsub.f32 %v3391, 1.0
  %v3439 = vsub.f32 %v3393, 1.0
  %v3440 = vsub.f32 %v3395, 1.0
  %v3441 = vsub.f32 %v3397, 1.0
  %v3442 = vsub.f32 %v3399, 1.0
  %v3443 = vsub.f32 %v3401, 1.0
  %v3444 = vsub.f32 %v3403, 1.0
  %v3445 = vsub.f32 %v3405, 1.0
  %v3446 = vsub.f32 %v3407, 1.0
  %v3447 = vsub.f32 %v3409, 1.0
  %v3448 = vsub.f32 %v3411, 1.0
  %v3449 = vsub.f32 %v3413, 1.0
  %v3450 = vsub.f32 %v3415, 1.0
  %v3451 = vsub.f32 %v3417, 1.0
  %v3452 = vsub.f32 %v3419, 1.0
  %v3453 = vsub.f32 %v3421, 1.0
  %v3454 = vmul.f32 %v3422, 1.6732632
  %v3455 = vmul.f32 %v3423, 1.6732632
  %v3456 = vmul.f32 %v3424, 1.6732632
  %v3457 = vmul.f32 %v3425, 1.6732632
  %v3458 = vmul.f32 %v3426, 1.6732632
  %v3459 = vmul.f32 %v3427, 1.6732632
  %v3460 = vmul.f32 %v3428, 1.6732632
  %v3461 = vmul.f32 %v3429, 1.6732632
  %v3462 = vmul.f32 %v3430, 1.6732632
  %v3463 = vmul.f32 %v3431, 1.6732632
  %v3464 = vmul.f32 %v3432, 1.6732632
  %v3465 = vmul.f32 %v3433, 1.6732632
  %v3466 = vmul.f32 %v3434, 1.6732632
  %v3467 = vmul.f32 %v3435, 1.6732632
  %v3468 = vmul.f32 %v3436, 1.6732632
  %v3469 = vmul.f32 %v3437, 1.6732632
  %v3470 = vmul.f32 %v3438, 1.6732632
  %v3471 = vmul.f32 %v3439, 1.6732632
  %v3472 = vmul.f32 %v3440, 1.6732632
  %v3473 = vmul.f32 %v3441, 1.6732632
  %v3474 = vmul.f32 %v3442, 1.6732632
  %v3475 = vmul.f32 %v3443, 1.6732632
  %v3476 = vmul.f32 %v3444, 1.6732632
  %v3477 = vmul.f32 %v3445, 1.6732632
  %v3478 = vmul.f32 %v3446, 1.6732632
  %v3479 = vmul.f32 %v3447, 1.6732632
  %v3480 = vmul.f32 %v3448, 1.6732632
  %v3481 = vmul.f32 %v3449, 1.6732632
  %v3482 = vmul.f32 %v3450, 1.6732632
  %v3483 = vmul.f32 %v3451, 1.6732632
  %v3484 = vmul.f32 %v3452, 1.6732632
  %v3485 = vmul.f32 %v3453, 1.6732632
  %v3486 = vsel %vm3326, %v3294, %v3454
  %v3487 = vsel %vm3327, %v3295, %v3455
  %v3488 = vsel %vm3328, %v3296, %v3456
  %v3489 = vsel %vm3329, %v3297, %v3457
  %v3490 = vsel %vm3330, %v3298, %v3458
  %v3491 = vsel %vm3331, %v3299, %v3459
  %v3492 = vsel %vm3332, %v3300, %v3460
  %v3493 = vsel %vm3333, %v3301, %v3461
  %v3494 = vsel %vm3334, %v3302, %v3462
  %v3495 = vsel %vm3335, %v3303, %v3463
  %v3496 = vsel %vm3336, %v3304, %v3464
  %v3497 = vsel %vm3337, %v3305, %v3465
  %v3498 = vsel %vm3338, %v3306, %v3466
  %v3499 = vsel %vm3339, %v3307, %v3467
  %v3500 = vsel %vm3340, %v3308, %v3468
  %v3501 = vsel %vm3341, %v3309, %v3469
  %v3502 = vsel %vm3342, %v3310, %v3470
  %v3503 = vsel %vm3343, %v3311, %v3471
  %v3504 = vsel %vm3344, %v3312, %v3472
  %v3505 = vsel %vm3345, %v3313, %v3473
  %v3506 = vsel %vm3346, %v3314, %v3474
  %v3507 = vsel %vm3347, %v3315, %v3475
  %v3508 = vsel %vm3348, %v3316, %v3476
  %v3509 = vsel %vm3349, %v3317, %v3477
  %v3510 = vsel %vm3350, %v3318, %v3478
  %v3511 = vsel %vm3351, %v3319, %v3479
  %v3512 = vsel %vm3352, %v3320, %v3480
  %v3513 = vsel %vm3353, %v3321, %v3481
  %v3514 = vsel %vm3354, %v3322, %v3482
  %v3515 = vsel %vm3355, %v3323, %v3483
  %v3516 = vsel %vm3356, %v3324, %v3484
  %v3517 = vsel %vm3357, %v3325, %v3485
  %v3518 = vmul.f32 %v3486, 1.050701
  %v3519 = vmul.f32 %v3487, 1.050701
  %v3520 = vmul.f32 %v3488, 1.050701
  %v3521 = vmul.f32 %v3489, 1.050701
  %v3522 = vmul.f32 %v3490, 1.050701
  %v3523 = vmul.f32 %v3491, 1.050701
  %v3524 = vmul.f32 %v3492, 1.050701
  %v3525 = vmul.f32 %v3493, 1.050701
  %v3526 = vmul.f32 %v3494, 1.050701
  %v3527 = vmul.f32 %v3495, 1.050701
  %v3528 = vmul.f32 %v3496, 1.050701
  %v3529 = vmul.f32 %v3497, 1.050701
  %v3530 = vmul.f32 %v3498, 1.050701
  %v3531 = vmul.f32 %v3499, 1.050701
  %v3532 = vmul.f32 %v3500, 1.050701
  %v3533 = vmul.f32 %v3501, 1.050701
  %v3534 = vmul.f32 %v3502, 1.050701
  %v3535 = vmul.f32 %v3503, 1.050701
  %v3536 = vmul.f32 %v3504, 1.050701
  %v3537 = vmul.f32 %v3505, 1.050701
  %v3538 = vmul.f32 %v3506, 1.050701
  %v3539 = vmul.f32 %v3507, 1.050701
  %v3540 = vmul.f32 %v3508, 1.050701
  %v3541 = vmul.f32 %v3509, 1.050701
  %v3542 = vmul.f32 %v3510, 1.050701
  %v3543 = vmul.f32 %v3511, 1.050701
  %v3544 = vmul.f32 %v3512, 1.050701
  %v3545 = vmul.f32 %v3513, 1.050701
  %v3546 = vmul.f32 %v3514, 1.050701
  %v3547 = vmul.f32 %v3515, 1.050701
  %v3548 = vmul.f32 %v3516, 1.050701
  %v3549 = vmul.f32 %v3517, 1.050701
  %v3550 = vmin.f32 %v3518, 10000000.0
  %v3551 = vmin.f32 %v3519, 10000000.0
  %v3552 = vmin.f32 %v3520, 10000000.0
  %v3553 = vmin.f32 %v3521, 10000000.0
  %v3554 = vmin.f32 %v3522, 10000000.0
  %v3555 = vmin.f32 %v3523, 10000000.0
  %v3556 = vmin.f32 %v3524, 10000000.0
  %v3557 = vmin.f32 %v3525, 10000000.0
  %v3558 = vmin.f32 %v3526, 10000000.0
  %v3559 = vmin.f32 %v3527, 10000000.0
  %v3560 = vmin.f32 %v3528, 10000000.0
  %v3561 = vmin.f32 %v3529, 10000000.0
  %v3562 = vmin.f32 %v3530, 10000000.0
  %v3563 = vmin.f32 %v3531, 10000000.0
  %v3564 = vmin.f32 %v3532, 10000000.0
  %v3565 = vmin.f32 %v3533, 10000000.0
  %v3566 = vmin.f32 %v3534, 10000000.0
  %v3567 = vmin.f32 %v3535, 10000000.0
  %v3568 = vmin.f32 %v3536, 10000000.0
  %v3569 = vmin.f32 %v3537, 10000000.0
  %v3570 = vmin.f32 %v3538, 10000000.0
  %v3571 = vmin.f32 %v3539, 10000000.0
  %v3572 = vmin.f32 %v3540, 10000000.0
  %v3573 = vmin.f32 %v3541, 10000000.0
  %v3574 = vmin.f32 %v3542, 10000000.0
  %v3575 = vmin.f32 %v3543, 10000000.0
  %v3576 = vmin.f32 %v3544, 10000000.0
  %v3577 = vmin.f32 %v3545, 10000000.0
  %v3578 = vmin.f32 %v3546, 10000000.0
  %v3579 = vmin.f32 %v3547, 10000000.0
  %v3580 = vmin.f32 %v3548, 10000000.0
  %v3581 = vmin.f32 %v3549, 10000000.0
  %v3582 = vpack.c.bf16 %v3552, %v3550
  %v3583 = vpack.c.bf16 %v3553, %v3551
  %v3584 = vpack.c.bf16 %v3556, %v3554
  %v3585 = vpack.c.bf16 %v3557, %v3555
  %v3586 = vpack.c.bf16 %v3560, %v3558
  %v3587 = vpack.c.bf16 %v3561, %v3559
  %v3588 = vpack.c.bf16 %v3564, %v3562
  %v3589 = vpack.c.bf16 %v3565, %v3563
  %v3590 = vpack.c.bf16 %v3568, %v3566
  %v3591 = vpack.c.bf16 %v3569, %v3567
  %v3592 = vpack.c.bf16 %v3572, %v3570
  %v3593 = vpack.c.bf16 %v3573, %v3571
  %v3594 = vpack.c.bf16 %v3576, %v3574
  %v3595 = vpack.c.bf16 %v3577, %v3575
  %v3596 = vpack.c.bf16 %v3580, %v3578
  %v3597 = vpack.c.bf16 %v3581, %v3579
  %v3598 = vld [vmem:[%s23] sm:$0xff]
  %v3599 = vld [vmem:[%s23 + $0x8] sm:$0xff]
  %v3600 = vld [vmem:[%s23 + $0x10] sm:$0xff]
  %v3601 = vld [vmem:[%s23 + $0x18] sm:$0xff]
  %v3602 = vld [vmem:[%s23 + $0x20] sm:$0xff]
  %v3603 = vld [vmem:[%s23 + $0x28] sm:$0xff]
  %v3604 = vld [vmem:[%s23 + $0x30] sm:$0xff]
  %v3605 = vld [vmem:[%s23 + $0x38] sm:$0xff]
  %v3606 = vld [vmem:[%s23 + $0x40] sm:$0xff]
  %v3607 = vld [vmem:[%s23 + $0x48] sm:$0xff]
  %v3608 = vld [vmem:[%s23 + $0x50] sm:$0xff]
  %v3609 = vld [vmem:[%s23 + $0x58] sm:$0xff]
  %v3610 = vld [vmem:[%s23 + $0x60] sm:$0xff]
  %v3611 = vld [vmem:[%s23 + $0x68] sm:$0xff]
  %v3612 = vld [vmem:[%s23 + $0x70] sm:$0xff]
  %v3613 = vld [vmem:[%s23 + $0x78] sm:$0xff]
  %v3614 = vld [vmem:[%s23 + $0x80] sm:$0xff]
  %v3615 = vld [vmem:[%s23 + $0x88] sm:$0xff]
  %v3616 = vld [vmem:[%s23 + $0x90] sm:$0xff]
  %v3617 = vld [vmem:[%s23 + $0x98] sm:$0xff]
  %v3618 = vld [vmem:[%s23 + $0xa0] sm:$0xff]
  %v3619 = vld [vmem:[%s23 + $0xa8] sm:$0xff]
  %v3620 = vld [vmem:[%s23 + $0xb0] sm:$0xff]
  %v3621 = vld [vmem:[%s23 + $0xb8] sm:$0xff]
  %v3622 = vld [vmem:[%s23 + $0xc0] sm:$0xff]
  %v3623 = vld [vmem:[%s23 + $0xc8] sm:$0xff]
  %v3624 = vld [vmem:[%s23 + $0xd0] sm:$0xff]
  %v3625 = vld [vmem:[%s23 + $0xd8] sm:$0xff]
  %v3626 = vld [vmem:[%s23 + $0xe0] sm:$0xff]
  %v3627 = vld [vmem:[%s23 + $0xe8] sm:$0xff]
  %v3628 = vld [vmem:[%s23 + $0xf0] sm:$0xff]
  %v3629 = vld [vmem:[%s23 + $0xf8] sm:$0xff]
  %v3630 = vld [vmem:[%s24] sm:$0x3]
  %v3632 = vlaneseq
  %v3633 = vshrl.u32 %v3632, 7
  %v3634 = vsub.s32 0, %v3633
  %v3635 = vrot.slane %v3630, %v3634
  %v3636 = vlaneseq
  %v3637 = vshrl.u32 %v3636, 7
  %v3638 = vsub.s32 1, %v3637
  %v3639 = vrot.slane %v3630, %v3638
  %v3674 = vunpack.c.l.b16 %v3598
  %v3675 = vunpack.c.h.b16 %v3598
  %v3676 = vunpack.c.l.b16 %v3599
  %v3677 = vunpack.c.h.b16 %v3599
  %v3678 = vunpack.c.l.b16 %v3600
  %v3679 = vunpack.c.h.b16 %v3600
  %v3680 = vunpack.c.l.b16 %v3601
  %v3681 = vunpack.c.h.b16 %v3601
  %v3682 = vunpack.c.l.b16 %v3602
  %v3683 = vunpack.c.h.b16 %v3602
  %v3684 = vunpack.c.l.b16 %v3603
  %v3685 = vunpack.c.h.b16 %v3603
  %v3686 = vunpack.c.l.b16 %v3604
  %v3687 = vunpack.c.h.b16 %v3604
  %v3688 = vunpack.c.l.b16 %v3605
  %v3689 = vunpack.c.h.b16 %v3605
  %v3690 = vunpack.c.l.b16 %v3606
  %v3691 = vunpack.c.h.b16 %v3606
  %v3692 = vunpack.c.l.b16 %v3607
  %v3693 = vunpack.c.h.b16 %v3607
  %v3694 = vunpack.c.l.b16 %v3608
  %v3695 = vunpack.c.h.b16 %v3608
  %v3696 = vunpack.c.l.b16 %v3609
  %v3697 = vunpack.c.h.b16 %v3609
  %v3698 = vunpack.c.l.b16 %v3610
  %v3699 = vunpack.c.h.b16 %v3610
  %v3700 = vunpack.c.l.b16 %v3611
  %v3701 = vunpack.c.h.b16 %v3611
  %v3702 = vunpack.c.l.b16 %v3612
  %v3703 = vunpack.c.h.b16 %v3612
  %v3704 = vunpack.c.l.b16 %v3613
  %v3705 = vunpack.c.h.b16 %v3613
  %v3706 = vunpack.c.l.b16 %v3614
  %v3707 = vunpack.c.h.b16 %v3614
  %v3708 = vunpack.c.l.b16 %v3615
  %v3709 = vunpack.c.h.b16 %v3615
  %v3710 = vunpack.c.l.b16 %v3616
  %v3711 = vunpack.c.h.b16 %v3616
  %v3712 = vunpack.c.l.b16 %v3617
  %v3713 = vunpack.c.h.b16 %v3617
  %v3714 = vunpack.c.l.b16 %v3618
  %v3715 = vunpack.c.h.b16 %v3618
  %v3716 = vunpack.c.l.b16 %v3619
  %v3717 = vunpack.c.h.b16 %v3619
  %v3718 = vunpack.c.l.b16 %v3620
  %v3719 = vunpack.c.h.b16 %v3620
  %v3720 = vunpack.c.l.b16 %v3621
  %v3721 = vunpack.c.h.b16 %v3621
  %v3722 = vunpack.c.l.b16 %v3622
  %v3723 = vunpack.c.h.b16 %v3622
  %v3724 = vunpack.c.l.b16 %v3623
  %v3725 = vunpack.c.h.b16 %v3623
  %v3726 = vunpack.c.l.b16 %v3624
  %v3727 = vunpack.c.h.b16 %v3624
  %v3728 = vunpack.c.l.b16 %v3625
  %v3729 = vunpack.c.h.b16 %v3625
  %v3730 = vunpack.c.l.b16 %v3626
  %v3731 = vunpack.c.h.b16 %v3626
  %v3732 = vunpack.c.l.b16 %v3627
  %v3733 = vunpack.c.h.b16 %v3627
  %v3734 = vunpack.c.l.b16 %v3628
  %v3735 = vunpack.c.h.b16 %v3628
  %v3736 = vunpack.c.l.b16 %v3629
  %v3737 = vunpack.c.h.b16 %v3629
  %v3738 = vpack.c.b16 %v3676, %v3674
  %v3739 = vpack.c.b16 %v3677, %v3675
  %v3740 = vpack.c.b16 %v3680, %v3678
  %v3741 = vpack.c.b16 %v3681, %v3679
  %v3742 = vpack.c.b16 %v3684, %v3682
  %v3743 = vpack.c.b16 %v3685, %v3683
  %v3744 = vpack.c.b16 %v3688, %v3686
  %v3745 = vpack.c.b16 %v3689, %v3687
  %v3746 = vpack.c.b16 %v3692, %v3690
  %v3747 = vpack.c.b16 %v3693, %v3691
  %v3748 = vpack.c.b16 %v3696, %v3694
  %v3749 = vpack.c.b16 %v3697, %v3695
  %v3750 = vpack.c.b16 %v3700, %v3698
  %v3751 = vpack.c.b16 %v3701, %v3699
  %v3752 = vpack.c.b16 %v3704, %v3702
  %v3753 = vpack.c.b16 %v3705, %v3703
  %v3754 = vpack.c.b16 %v3708, %v3706
  %v3755 = vpack.c.b16 %v3709, %v3707
  %v3756 = vpack.c.b16 %v3712, %v3710
  %v3757 = vpack.c.b16 %v3713, %v3711
  %v3758 = vpack.c.b16 %v3716, %v3714
  %v3759 = vpack.c.b16 %v3717, %v3715
  %v3760 = vpack.c.b16 %v3720, %v3718
  %v3761 = vpack.c.b16 %v3721, %v3719
  %v3762 = vpack.c.b16 %v3724, %v3722
  %v3763 = vpack.c.b16 %v3725, %v3723
  %v3764 = vpack.c.b16 %v3728, %v3726
  %v3765 = vpack.c.b16 %v3729, %v3727
  %v3766 = vpack.c.b16 %v3732, %v3730
  %v3767 = vpack.c.b16 %v3733, %v3731
  %v3768 = vpack.c.b16 %v3736, %v3734
  %v3769 = vpack.c.b16 %v3737, %v3735
  %3802 = vmatprep.subr.bf16.mxu0 %v3739
  %3803 = vmatpush1.bf16.msra.mxu0 %v3738
  %3804 = vmatprep.subr.bf16.mxu0 %v3741
  %3805 = vmatpush1.bf16.msra.mxu0 %v3740
  %3806 = vmatprep.subr.bf16.mxu0 %v3743
  %3807 = vmatpush1.bf16.msra.mxu0 %v3742
  %3808 = vmatprep.subr.bf16.mxu0 %v3745
  %3809 = vmatpush1.bf16.msra.mxu0 %v3744
  %3810 = vmatprep.subr.bf16.mxu0 %v3747
  %3811 = vmatpush1.bf16.msra.mxu0 %v3746
  %3812 = vmatprep.subr.bf16.mxu0 %v3749
  %3813 = vmatpush1.bf16.msra.mxu0 %v3748
  %3814 = vmatprep.subr.bf16.mxu0 %v3751
  %3815 = vmatpush1.bf16.msra.mxu0 %v3750
  %3816 = vmatprep.subr.bf16.mxu0 %v3753
  %3817 = vmatpush1.bf16.msra.mxu0 %v3752
  %3818 = vmatprep.subr.bf16.mxu0 %v3755
  %3819 = vmatpush1.bf16.msra.mxu0 %v3754
  %3820 = vmatprep.subr.bf16.mxu0 %v3757
  %3821 = vmatpush1.bf16.msra.mxu0 %v3756
  %3822 = vmatprep.subr.bf16.mxu0 %v3759
  %3823 = vmatpush1.bf16.msra.mxu0 %v3758
  %3824 = vmatprep.subr.bf16.mxu0 %v3761
  %3825 = vmatpush1.bf16.msra.mxu0 %v3760
  %3826 = vmatprep.subr.bf16.mxu0 %v3763
  %3827 = vmatpush1.bf16.msra.mxu0 %v3762
  %3828 = vmatprep.subr.bf16.mxu0 %v3765
  %3829 = vmatpush1.bf16.msra.mxu0 %v3764
  %3830 = vmatprep.subr.bf16.mxu0 %v3767
  %3831 = vmatpush1.bf16.msra.mxu0 %v3766
  %3832 = vmatprep.subr.bf16.mxu0 %v3769
  %3833 = vmatpush1.bf16.msra.mxu0 %v3768
  %3834 = vmatprep.mubr.bf16.mxu0 %v3583
  %3835 = vmatmul.mubr.bf16.gmra.mrb[0].mxu0 %v3582
  %v3836 = vpop.f32.mrb[0].mxu0
  %v3837 = vadd.f32 %v3635, %v3836
  %v3838 = vpop.f32.mrb[0].mxu0
  %v3839 = vadd.f32 %v3639, %v3838
  %v3840 = vpop.f32.mrb[0].mxu0
  %v3841 = vadd.f32 %v3635, %v3840
  %v3842 = vpop.f32.mrb[0].mxu0
  %v3843 = vadd.f32 %v3639, %v3842
  %3844 = vmatprep.mubr.bf16.mxu0 %v3585
  %3845 = vmatmul.mubr.bf16.gmra.mrb[0].mxu0 %v3584
  %v3846 = vpop.f32.mrb[0].mxu0
  %v3847 = vadd.f32 %v3635, %v3846
  %v3848 = vpop.f32.mrb[0].mxu0
  %v3849 = vadd.f32 %v3639, %v3848
  %v3850 = vpop.f32.mrb[0].mxu0
  %v3851 = vadd.f32 %v3635, %v3850
  %v3852 = vpop.f32.mrb[0].mxu0
  %v3853 = vadd.f32 %v3639, %v3852
  %3854 = vmatprep.mubr.bf16.mxu0 %v3587
  %3855 = vmatmul.mubr.bf16.gmra.mrb[0].mxu0 %v3586
  %v3856 = vpop.f32.mrb[0].mxu0
  %v3857 = vadd.f32 %v3635, %v3856
  %v3858 = vpop.f32.mrb[0].mxu0
  %v3859 = vadd.f32 %v3639, %v3858
  %v3860 = vpop.f32.mrb[0].mxu0
  %v3861 = vadd.f32 %v3635, %v3860
  %v3862 = vpop.f32.mrb[0].mxu0
  %v3863 = vadd.f32 %v3639, %v3862
  %3864 = vmatprep.mubr.bf16.mxu0 %v3589
  %3865 = vmatmul.mubr.bf16.gmra.mrb[0].mxu0 %v3588
  %v3866 = vpop.f32.mrb[0].mxu0
  %v3867 = vadd.f32 %v3635, %v3866
  %v3868 = vpop.f32.mrb[0].mxu0
  %v3869 = vadd.f32 %v3639, %v3868
  %v3870 = vpop.f32.mrb[0].mxu0
  %v3871 = vadd.f32 %v3635, %v3870
  %v3872 = vpop.f32.mrb[0].mxu0
  %v3873 = vadd.f32 %v3639, %v3872
  %3874 = vmatprep.mubr.bf16.mxu0 %v3591
  %3875 = vmatmul.mubr.bf16.gmra.mrb[0].mxu0 %v3590
  %v3876 = vpop.f32.mrb[0].mxu0
  %v3877 = vadd.f32 %v3635, %v3876
  %v3878 = vpop.f32.mrb[0].mxu0
  %v3879 = vadd.f32 %v3639, %v3878
  %v3880 = vpop.f32.mrb[0].mxu0
  %v3881 = vadd.f32 %v3635, %v3880
  %v3882 = vpop.f32.mrb[0].mxu0
  %v3883 = vadd.f32 %v3639, %v3882
  %3884 = vmatprep.mubr.bf16.mxu0 %v3593
  %3885 = vmatmul.mubr.bf16.gmra.mrb[0].mxu0 %v3592
  %v3886 = vpop.f32.mrb[0].mxu0
  %v3887 = vadd.f32 %v3635, %v3886
  %v3888 = vpop.f32.mrb[0].mxu0
  %v3889 = vadd.f32 %v3639, %v3888
  %v3890 = vpop.f32.mrb[0].mxu0
  %v3891 = vadd.f32 %v3635, %v3890
  %v3892 = vpop.f32.mrb[0].mxu0
  %v3893 = vadd.f32 %v3639, %v3892
  %3894 = vmatprep.mubr.bf16.mxu0 %v3595
  %3895 = vmatmul.mubr.bf16.gmra.mrb[0].mxu0 %v3594
  %v3896 = vpop.f32.mrb[0].mxu0
  %v3897 = vadd.f32 %v3635, %v3896
  %v3898 = vpop.f32.mrb[0].mxu0
  %v3899 = vadd.f32 %v3639, %v3898
  %v3900 = vpop.f32.mrb[0].mxu0
  %v3901 = vadd.f32 %v3635, %v3900
  %v3902 = vpop.f32.mrb[0].mxu0
  %v3903 = vadd.f32 %v3639, %v3902
  %3904 = vmatprep.mubr.bf16.mxu0 %v3597
  %3905 = vmatmul.mubr.bf16.gmra.mrb[0].mxu0 %v3596
  %v3906 = vpop.f32.mrb[0].mxu0
  %v3907 = vadd.f32 %v3635, %v3906
  %v3908 = vpop.f32.mrb[0].mxu0
  %v3909 = vadd.f32 %v3639, %v3908
  %v3910 = vpop.f32.mrb[0].mxu0
  %v3911 = vadd.f32 %v3635, %v3910
  %v3912 = vpop.f32.mrb[0].mxu0
  %v3913 = vadd.f32 %v3639, %v3912
  %3914 = vdwg.mxu0
  %v3915 = vadd.s32 %v2156, 128
  %vm3916 = vcmp.lt.s32.totalorder %v2156, 200
  %vm3917 = vcmp.lt.s32.totalorder %v3915, 200
  %vm3918 = vcmp.gt.f32.partialorder %v3837, 0.0
  %vm3919 = vcmp.gt.f32.partialorder %v3839, 0.0
  %vm3920 = vcmp.gt.f32.partialorder %v3841, 0.0
  %vm3921 = vcmp.gt.f32.partialorder %v3843, 0.0
  %vm3922 = vcmp.gt.f32.partialorder %v3847, 0.0
  %vm3923 = vcmp.gt.f32.partialorder %v3849, 0.0
  %vm3924 = vcmp.gt.f32.partialorder %v3851, 0.0
  %vm3925 = vcmp.gt.f32.partialorder %v3853, 0.0
  %vm3926 = vcmp.gt.f32.partialorder %v3857, 0.0
  %vm3927 = vcmp.gt.f32.partialorder %v3859, 0.0
  %vm3928 = vcmp.gt.f32.partialorder %v3861, 0.0
  %vm3929 = vcmp.gt.f32.partialorder %v3863, 0.0
  %vm3930 = vcmp.gt.f32.partialorder %v3867, 0.0
  %vm3931 = vcmp.gt.f32.partialorder %v3869, 0.0
  %vm3932 = vcmp.gt.f32.partialorder %v3871, 0.0
  %vm3933 = vcmp.gt.f32.partialorder %v3873, 0.0
  %vm3934 = vcmp.gt.f32.partialorder %v3877, 0.0
  %vm3935 = vcmp.gt.f32.partialorder %v3879, 0.0
  %vm3936 = vcmp.gt.f32.partialorder %v3881, 0.0
  %vm3937 = vcmp.gt.f32.partialorder %v3883, 0.0
  %vm3938 = vcmp.gt.f32.partialorder %v3887, 0.0
  %vm3939 = vcmp.gt.f32.partialorder %v3889, 0.0
  %vm3940 = vcmp.gt.f32.partialorder %v3891, 0.0
  %vm3941 = vcmp.gt.f32.partialorder %v3893, 0.0
  %vm3942 = vcmp.gt.f32.partialorder %v3897, 0.0
  %vm3943 = vcmp.gt.f32.partialorder %v3899, 0.0
  %vm3944 = vcmp.gt.f32.partialorder %v3901, 0.0
  %vm3945 = vcmp.gt.f32.partialorder %v3903, 0.0
  %vm3946 = vcmp.gt.f32.partialorder %v3907, 0.0
  %vm3947 = vcmp.gt.f32.partialorder %v3909, 0.0
  %vm3948 = vcmp.gt.f32.partialorder %v3911, 0.0
  %vm3949 = vcmp.gt.f32.partialorder %v3913, 0.0
  %v3950 = vsub.f32 0.0, %v3837
  %v3951 = vsub.f32 0.0, %v3839
  %v3952 = vsub.f32 0.0, %v3841
  %v3953 = vsub.f32 0.0, %v3843
  %v3954 = vsub.f32 0.0, %v3847
  %v3955 = vsub.f32 0.0, %v3849
  %v3956 = vsub.f32 0.0, %v3851
  %v3957 = vsub.f32 0.0, %v3853
  %v3958 = vsub.f32 0.0, %v3857
  %v3959 = vsub.f32 0.0, %v3859
  %v3960 = vsub.f32 0.0, %v3861
  %v3961 = vsub.f32 0.0, %v3863
  %v3962 = vsub.f32 0.0, %v3867
  %v3963 = vsub.f32 0.0, %v3869
  %v3964 = vsub.f32 0.0, %v3871
  %v3965 = vsub.f32 0.0, %v3873
  %v3966 = vsub.f32 0.0, %v3877
  %v3967 = vsub.f32 0.0, %v3879
  %v3968 = vsub.f32 0.0, %v3881
  %v3969 = vsub.f32 0.0, %v3883
  %v3970 = vsub.f32 0.0, %v3887
  %v3971 = vsub.f32 0.0, %v3889
  %v3972 = vsub.f32 0.0, %v3891
  %v3973 = vsub.f32 0.0, %v3893
  %v3974 = vsub.f32 0.0, %v3897
  %v3975 = vsub.f32 0.0, %v3899
  %v3976 = vsub.f32 0.0, %v3901
  %v3977 = vsub.f32 0.0, %v3903
  %v3978 = vsub.f32 0.0, %v3907
  %v3979 = vsub.f32 0.0, %v3909
  %v3980 = vsub.f32 0.0, %v3911
  %v3981 = vsub.f32 0.0, %v3913
  %v3982 = vmul.f32 %v3950, 1.442695
  %v3983 = vpow.pop %v3982
  %v3984 = vmul.f32 %v3951, 1.442695
  %v3985 = vpow.pop %v3984
  %v3986 = vmul.f32 %v3952, 1.442695
  %v3987 = vpow.pop %v3986
  %v3988 = vmul.f32 %v3953, 1.442695
  %v3989 = vpow.pop %v3988
  %v3990 = vmul.f32 %v3954, 1.442695
  %v3991 = vpow.pop %v3990
  %v3992 = vmul.f32 %v3955, 1.442695
  %v3993 = vpow.pop %v3992
  %v3994 = vmul.f32 %v3956, 1.442695
  %v3995 = vpow.pop %v3994
  %v3996 = vmul.f32 %v3957, 1.442695
  %v3997 = vpow.pop %v3996
  %v3998 = vmul.f32 %v3958, 1.442695
  %v3999 = vpow.pop %v3998
  %v4000 = vmul.f32 %v3959, 1.442695
  %v4001 = vpow.pop %v4000
  %v4002 = vmul.f32 %v3960, 1.442695
  %v4003 = vpow.pop %v4002
  %v4004 = vmul.f32 %v3961, 1.442695
  %v4005 = vpow.pop %v4004
  %v4006 = vmul.f32 %v3962, 1.442695
  %v4007 = vpow.pop %v4006
  %v4008 = vmul.f32 %v3963, 1.442695
  %v4009 = vpow.pop %v4008
  %v4010 = vmul.f32 %v3964, 1.442695
  %v4011 = vpow.pop %v4010
  %v4012 = vmul.f32 %v3965, 1.442695
  %v4013 = vpow.pop %v4012
  %v4014 = vmul.f32 %v3966, 1.442695
  %v4015 = vpow.pop %v4014
  %v4016 = vmul.f32 %v3967, 1.442695
  %v4017 = vpow.pop %v4016
  %v4018 = vmul.f32 %v3968, 1.442695
  %v4019 = vpow.pop %v4018
  %v4020 = vmul.f32 %v3969, 1.442695
  %v4021 = vpow.pop %v4020
  %v4022 = vmul.f32 %v3970, 1.442695
  %v4023 = vpow.pop %v4022
  %v4024 = vmul.f32 %v3971, 1.442695
  %v4025 = vpow.pop %v4024
  %v4026 = vmul.f32 %v3972, 1.442695
  %v4027 = vpow.pop %v4026
  %v4028 = vmul.f32 %v3973, 1.442695
  %v4029 = vpow.pop %v4028
  %v4030 = vmul.f32 %v3974, 1.442695
  %v4031 = vpow.pop %v4030
  %v4032 = vmul.f32 %v3975, 1.442695
  %v4033 = vpow.pop %v4032
  %v4034 = vmul.f32 %v3976, 1.442695
  %v4035 = vpow.pop %v4034
  %v4036 = vmul.f32 %v3977, 1.442695
  %v4037 = vpow.pop %v4036
  %v4038 = vmul.f32 %v3978, 1.442695
  %v4039 = vpow.pop %v4038
  %v4040 = vmul.f32 %v3979, 1.442695
  %v4041 = vpow.pop %v4040
  %v4042 = vmul.f32 %v3980, 1.442695
  %v4043 = vpow.pop %v4042
  %v4044 = vmul.f32 %v3981, 1.442695
  %v4045 = vpow.pop %v4044
  %v4046 = vadd.f32 %v3983, 1.0
  %v4047 = vlog2.pop %v4046
  %v4048 = vmul.f32 %v4047, 0.6931472
  %v4049 = vmul.f32 -0.5, %v3983
  %v4050 = vadd.f32 %v4049, 1.0
  %v4051 = vmul.f32 %v4050, %v3983
  %v4052 = vand.u32 2147483647, %v3983
  %vm4053 = vcmp.lt.f32.partialorder %v4052, 0.0004427343
  %v4054 = vsel %vm4053, %v4051, %v4048
  %v4055 = vadd.f32 %v3985, 1.0
  %v4056 = vlog2.pop %v4055
  %v4057 = vmul.f32 %v4056, 0.6931472
  %v4058 = vmul.f32 -0.5, %v3985
  %v4059 = vadd.f32 %v4058, 1.0
  %v4060 = vmul.f32 %v4059, %v3985
  %v4061 = vand.u32 2147483647, %v3985
  %vm4062 = vcmp.lt.f32.partialorder %v4061, 0.0004427343
  %v4063 = vsel %vm4062, %v4060, %v4057
  %v4064 = vadd.f32 %v3987, 1.0
  %v4065 = vlog2.pop %v4064
  %v4066 = vmul.f32 %v4065, 0.6931472
  %v4067 = vmul.f32 -0.5, %v3987
  %v4068 = vadd.f32 %v4067, 1.0
  %v4069 = vmul.f32 %v4068, %v3987
  %v4070 = vand.u32 2147483647, %v3987
  %vm4071 = vcmp.lt.f32.partialorder %v4070, 0.0004427343
  %v4072 = vsel %vm4071, %v4069, %v4066
  %v4073 = vadd.f32 %v3989, 1.0
  %v4074 = vlog2.pop %v4073
  %v4075 = vmul.f32 %v4074, 0.6931472
  %v4076 = vmul.f32 -0.5, %v3989
  %v4077 = vadd.f32 %v4076, 1.0
  %v4078 = vmul.f32 %v4077, %v3989
  %v4079 = vand.u32 2147483647, %v3989
  %vm4080 = vcmp.lt.f32.partialorder %v4079, 0.0004427343
  %v4081 = vsel %vm4080, %v4078, %v4075
  %v4082 = vadd.f32 %v3991, 1.0
  %v4083 = vlog2.pop %v4082
  %v4084 = vmul.f32 %v4083, 0.6931472
  %v4085 = vmul.f32 -0.5, %v3991
  %v4086 = vadd.f32 %v4085, 1.0
  %v4087 = vmul.f32 %v4086, %v3991
  %v4088 = vand.u32 2147483647, %v3991
  %vm4089 = vcmp.lt.f32.partialorder %v4088, 0.0004427343
  %v4090 = vsel %vm4089, %v4087, %v4084
  %v4091 = vadd.f32 %v3993, 1.0
  %v4092 = vlog2.pop %v4091
  %v4093 = vmul.f32 %v4092, 0.6931472
  %v4094 = vmul.f32 -0.5, %v3993
  %v4095 = vadd.f32 %v4094, 1.0
  %v4096 = vmul.f32 %v4095, %v3993
  %v4097 = vand.u32 2147483647, %v3993
  %vm4098 = vcmp.lt.f32.partialorder %v4097, 0.0004427343
  %v4099 = vsel %vm4098, %v4096, %v4093
  %v4100 = vadd.f32 %v3995, 1.0
  %v4101 = vlog2.pop %v4100
  %v4102 = vmul.f32 %v4101, 0.6931472
  %v4103 = vmul.f32 -0.5, %v3995
  %v4104 = vadd.f32 %v4103, 1.0
  %v4105 = vmul.f32 %v4104, %v3995
  %v4106 = vand.u32 2147483647, %v3995
  %vm4107 = vcmp.lt.f32.partialorder %v4106, 0.0004427343
  %v4108 = vsel %vm4107, %v4105, %v4102
  %v4109 = vadd.f32 %v3997, 1.0
  %v4110 = vlog2.pop %v4109
  %v4111 = vmul.f32 %v4110, 0.6931472
  %v4112 = vmul.f32 -0.5, %v3997
  %v4113 = vadd.f32 %v4112, 1.0
  %v4114 = vmul.f32 %v4113, %v3997
  %v4115 = vand.u32 2147483647, %v3997
  %vm4116 = vcmp.lt.f32.partialorder %v4115, 0.0004427343
  %v4117 = vsel %vm4116, %v4114, %v4111
  %v4118 = vadd.f32 %v3999, 1.0
  %v4119 = vlog2.pop %v4118
  %v4120 = vmul.f32 %v4119, 0.6931472
  %v4121 = vmul.f32 -0.5, %v3999
  %v4122 = vadd.f32 %v4121, 1.0
  %v4123 = vmul.f32 %v4122, %v3999
  %v4124 = vand.u32 2147483647, %v3999
  %vm4125 = vcmp.lt.f32.partialorder %v4124, 0.0004427343
  %v4126 = vsel %vm4125, %v4123, %v4120
  %v4127 = vadd.f32 %v4001, 1.0
  %v4128 = vlog2.pop %v4127
  %v4129 = vmul.f32 %v4128, 0.6931472
  %v4130 = vmul.f32 -0.5, %v4001
  %v4131 = vadd.f32 %v4130, 1.0
  %v4132 = vmul.f32 %v4131, %v4001
  %v4133 = vand.u32 2147483647, %v4001
  %vm4134 = vcmp.lt.f32.partialorder %v4133, 0.0004427343
  %v4135 = vsel %vm4134, %v4132, %v4129
  %v4136 = vadd.f32 %v4003, 1.0
  %v4137 = vlog2.pop %v4136
  %v4138 = vmul.f32 %v4137, 0.6931472
  %v4139 = vmul.f32 -0.5, %v4003
  %v4140 = vadd.f32 %v4139, 1.0
  %v4141 = vmul.f32 %v4140, %v4003
  %v4142 = vand.u32 2147483647, %v4003
  %vm4143 = vcmp.lt.f32.partialorder %v4142, 0.0004427343
  %v4144 = vsel %vm4143, %v4141, %v4138
  %v4145 = vadd.f32 %v4005, 1.0
  %v4146 = vlog2.pop %v4145
  %v4147 = vmul.f32 %v4146, 0.6931472
  %v4148 = vmul.f32 -0.5, %v4005
  %v4149 = vadd.f32 %v4148, 1.0
  %v4150 = vmul.f32 %v4149, %v4005
  %v4151 = vand.u32 2147483647, %v4005
  %vm4152 = vcmp.lt.f32.partialorder %v4151, 0.0004427343
  %v4153 = vsel %vm4152, %v4150, %v4147
  %v4154 = vadd.f32 %v4007, 1.0
  %v4155 = vlog2.pop %v4154
  %v4156 = vmul.f32 %v4155, 0.6931472
  %v4157 = vmul.f32 -0.5, %v4007
  %v4158 = vadd.f32 %v4157, 1.0
  %v4159 = vmul.f32 %v4158, %v4007
  %v4160 = vand.u32 2147483647, %v4007
  %vm4161 = vcmp.lt.f32.partialorder %v4160, 0.0004427343
  %v4162 = vsel %vm4161, %v4159, %v4156
  %v4163 = vadd.f32 %v4009, 1.0
  %v4164 = vlog2.pop %v4163
  %v4165 = vmul.f32 %v4164, 0.6931472
  %v4166 = vmul.f32 -0.5, %v4009
  %v4167 = vadd.f32 %v4166, 1.0
  %v4168 = vmul.f32 %v4167, %v4009
  %v4169 = vand.u32 2147483647, %v4009
  %vm4170 = vcmp.lt.f32.partialorder %v4169, 0.0004427343
  %v4171 = vsel %vm4170, %v4168, %v4165
  %v4172 = vadd.f32 %v4011, 1.0
  %v4173 = vlog2.pop %v4172
  %v4174 = vmul.f32 %v4173, 0.6931472
  %v4175 = vmul.f32 -0.5, %v4011
  %v4176 = vadd.f32 %v4175, 1.0
  %v4177 = vmul.f32 %v4176, %v4011
  %v4178 = vand.u32 2147483647, %v4011
  %vm4179 = vcmp.lt.f32.partialorder %v4178, 0.0004427343
  %v4180 = vsel %vm4179, %v4177, %v4174
  %v4181 = vadd.f32 %v4013, 1.0
  %v4182 = vlog2.pop %v4181
  %v4183 = vmul.f32 %v4182, 0.6931472
  %v4184 = vmul.f32 -0.5, %v4013
  %v4185 = vadd.f32 %v4184, 1.0
  %v4186 = vmul.f32 %v4185, %v4013
  %v4187 = vand.u32 2147483647, %v4013
  %vm4188 = vcmp.lt.f32.partialorder %v4187, 0.0004427343
  %v4189 = vsel %vm4188, %v4186, %v4183
  %v4190 = vadd.f32 %v4015, 1.0
  %v4191 = vlog2.pop %v4190
  %v4192 = vmul.f32 %v4191, 0.6931472
  %v4193 = vmul.f32 -0.5, %v4015
  %v4194 = vadd.f32 %v4193, 1.0
  %v4195 = vmul.f32 %v4194, %v4015
  %v4196 = vand.u32 2147483647, %v4015
  %vm4197 = vcmp.lt.f32.partialorder %v4196, 0.0004427343
  %v4198 = vsel %vm4197, %v4195, %v4192
  %v4199 = vadd.f32 %v4017, 1.0
  %v4200 = vlog2.pop %v4199
  %v4201 = vmul.f32 %v4200, 0.6931472
  %v4202 = vmul.f32 -0.5, %v4017
  %v4203 = vadd.f32 %v4202, 1.0
  %v4204 = vmul.f32 %v4203, %v4017
  %v4205 = vand.u32 2147483647, %v4017
  %vm4206 = vcmp.lt.f32.partialorder %v4205, 0.0004427343
  %v4207 = vsel %vm4206, %v4204, %v4201
  %v4208 = vadd.f32 %v4019, 1.0
  %v4209 = vlog2.pop %v4208
  %v4210 = vmul.f32 %v4209, 0.6931472
  %v4211 = vmul.f32 -0.5, %v4019
  %v4212 = vadd.f32 %v4211, 1.0
  %v4213 = vmul.f32 %v4212, %v4019
  %v4214 = vand.u32 2147483647, %v4019
  %vm4215 = vcmp.lt.f32.partialorder %v4214, 0.0004427343
  %v4216 = vsel %vm4215, %v4213, %v4210
  %v4217 = vadd.f32 %v4021, 1.0
  %v4218 = vlog2.pop %v4217
  %v4219 = vmul.f32 %v4218, 0.6931472
  %v4220 = vmul.f32 -0.5, %v4021
  %v4221 = vadd.f32 %v4220, 1.0
  %v4222 = vmul.f32 %v4221, %v4021
  %v4223 = vand.u32 2147483647, %v4021
  %vm4224 = vcmp.lt.f32.partialorder %v4223, 0.0004427343
  %v4225 = vsel %vm4224, %v4222, %v4219
  %v4226 = vadd.f32 %v4023, 1.0
  %v4227 = vlog2.pop %v4226
  %v4228 = vmul.f32 %v4227, 0.6931472
  %v4229 = vmul.f32 -0.5, %v4023
  %v4230 = vadd.f32 %v4229, 1.0
  %v4231 = vmul.f32 %v4230, %v4023
  %v4232 = vand.u32 2147483647, %v4023
  %vm4233 = vcmp.lt.f32.partialorder %v4232, 0.0004427343
  %v4234 = vsel %vm4233, %v4231, %v4228
  %v4235 = vadd.f32 %v4025, 1.0
  %v4236 = vlog2.pop %v4235
  %v4237 = vmul.f32 %v4236, 0.6931472
  %v4238 = vmul.f32 -0.5, %v4025
  %v4239 = vadd.f32 %v4238, 1.0
  %v4240 = vmul.f32 %v4239, %v4025
  %v4241 = vand.u32 2147483647, %v4025
  %vm4242 = vcmp.lt.f32.partialorder %v4241, 0.0004427343
  %v4243 = vsel %vm4242, %v4240, %v4237
  %v4244 = vadd.f32 %v4027, 1.0
  %v4245 = vlog2.pop %v4244
  %v4246 = vmul.f32 %v4245, 0.6931472
  %v4247 = vmul.f32 -0.5, %v4027
  %v4248 = vadd.f32 %v4247, 1.0
  %v4249 = vmul.f32 %v4248, %v4027
  %v4250 = vand.u32 2147483647, %v4027
  %vm4251 = vcmp.lt.f32.partialorder %v4250, 0.0004427343
  %v4252 = vsel %vm4251, %v4249, %v4246
  %v4253 = vadd.f32 %v4029, 1.0
  %v4254 = vlog2.pop %v4253
  %v4255 = vmul.f32 %v4254, 0.6931472
  %v4256 = vmul.f32 -0.5, %v4029
  %v4257 = vadd.f32 %v4256, 1.0
  %v4258 = vmul.f32 %v4257, %v4029
  %v4259 = vand.u32 2147483647, %v4029
  %vm4260 = vcmp.lt.f32.partialorder %v4259, 0.0004427343
  %v4261 = vsel %vm4260, %v4258, %v4255
  %v4262 = vadd.f32 %v4031, 1.0
  %v4263 = vlog2.pop %v4262
  %v4264 = vmul.f32 %v4263, 0.6931472
  %v4265 = vmul.f32 -0.5, %v4031
  %v4266 = vadd.f32 %v4265, 1.0
  %v4267 = vmul.f32 %v4266, %v4031
  %v4268 = vand.u32 2147483647, %v4031
  %vm4269 = vcmp.lt.f32.partialorder %v4268, 0.0004427343
  %v4270 = vsel %vm4269, %v4267, %v4264
  %v4271 = vadd.f32 %v4033, 1.0
  %v4272 = vlog2.pop %v4271
  %v4273 = vmul.f32 %v4272, 0.6931472
  %v4274 = vmul.f32 -0.5, %v4033
  %v4275 = vadd.f32 %v4274, 1.0
  %v4276 = vmul.f32 %v4275, %v4033
  %v4277 = vand.u32 2147483647, %v4033
  %vm4278 = vcmp.lt.f32.partialorder %v4277, 0.0004427343
  %v4279 = vsel %vm4278, %v4276, %v4273
  %v4280 = vadd.f32 %v4035, 1.0
  %v4281 = vlog2.pop %v4280
  %v4282 = vmul.f32 %v4281, 0.6931472
  %v4283 = vmul.f32 -0.5, %v4035
  %v4284 = vadd.f32 %v4283, 1.0
  %v4285 = vmul.f32 %v4284, %v4035
  %v4286 = vand.u32 2147483647, %v4035
  %vm4287 = vcmp.lt.f32.partialorder %v4286, 0.0004427343
  %v4288 = vsel %vm4287, %v4285, %v4282
  %v4289 = vadd.f32 %v4037, 1.0
  %v4290 = vlog2.pop %v4289
  %v4291 = vmul.f32 %v4290, 0.6931472
  %v4292 = vmul.f32 -0.5, %v4037
  %v4293 = vadd.f32 %v4292, 1.0
  %v4294 = vmul.f32 %v4293, %v4037
  %v4295 = vand.u32 2147483647, %v4037
  %vm4296 = vcmp.lt.f32.partialorder %v4295, 0.0004427343
  %v4297 = vsel %vm4296, %v4294, %v4291
  %v4298 = vadd.f32 %v4039, 1.0
  %v4299 = vlog2.pop %v4298
  %v4300 = vmul.f32 %v4299, 0.6931472
  %v4301 = vmul.f32 -0.5, %v4039
  %v4302 = vadd.f32 %v4301, 1.0
  %v4303 = vmul.f32 %v4302, %v4039
  %v4304 = vand.u32 2147483647, %v4039
  %vm4305 = vcmp.lt.f32.partialorder %v4304, 0.0004427343
  %v4306 = vsel %vm4305, %v4303, %v4300
  %v4307 = vadd.f32 %v4041, 1.0
  %v4308 = vlog2.pop %v4307
  %v4309 = vmul.f32 %v4308, 0.6931472
  %v4310 = vmul.f32 -0.5, %v4041
  %v4311 = vadd.f32 %v4310, 1.0
  %v4312 = vmul.f32 %v4311, %v4041
  %v4313 = vand.u32 2147483647, %v4041
  %vm4314 = vcmp.lt.f32.partialorder %v4313, 0.0004427343
  %v4315 = vsel %vm4314, %v4312, %v4309
  %v4316 = vadd.f32 %v4043, 1.0
  %v4317 = vlog2.pop %v4316
  %v4318 = vmul.f32 %v4317, 0.6931472
  %v4319 = vmul.f32 -0.5, %v4043
  %v4320 = vadd.f32 %v4319, 1.0
  %v4321 = vmul.f32 %v4320, %v4043
  %v4322 = vand.u32 2147483647, %v4043
  %vm4323 = vcmp.lt.f32.partialorder %v4322, 0.0004427343
  %v4324 = vsel %vm4323, %v4321, %v4318
  %v4325 = vadd.f32 %v4045, 1.0
  %v4326 = vlog2.pop %v4325
  %v4327 = vmul.f32 %v4326, 0.6931472
  %v4328 = vmul.f32 -0.5, %v4045
  %v4329 = vadd.f32 %v4328, 1.0
  %v4330 = vmul.f32 %v4329, %v4045
  %v4331 = vand.u32 2147483647, %v4045
  %vm4332 = vcmp.lt.f32.partialorder %v4331, 0.0004427343
  %v4333 = vsel %vm4332, %v4330, %v4327
  %v4334 = vadd.f32 %v3837, %v4054
  %v4335 = vadd.f32 %v3839, %v4063
  %v4336 = vadd.f32 %v3841, %v4072
  %v4337 = vadd.f32 %v3843, %v4081
  %v4338 = vadd.f32 %v3847, %v4090
  %v4339 = vadd.f32 %v3849, %v4099
  %v4340 = vadd.f32 %v3851, %v4108
  %v4341 = vadd.f32 %v3853, %v4117
  %v4342 = vadd.f32 %v3857, %v4126
  %v4343 = vadd.f32 %v3859, %v4135
  %v4344 = vadd.f32 %v3861, %v4144
  %v4345 = vadd.f32 %v3863, %v4153
  %v4346 = vadd.f32 %v3867, %v4162
  %v4347 = vadd.f32 %v3869, %v4171
  %v4348 = vadd.f32 %v3871, %v4180
  %v4349 = vadd.f32 %v3873, %v4189
  %v4350 = vadd.f32 %v3877, %v4198
  %v4351 = vadd.f32 %v3879, %v4207
  %v4352 = vadd.f32 %v3881, %v4216
  %v4353 = vadd.f32 %v3883, %v4225
  %v4354 = vadd.f32 %v3887, %v4234
  %v4355 = vadd.f32 %v3889, %v4243
  %v4356 = vadd.f32 %v3891, %v4252
  %v4357 = vadd.f32 %v3893, %v4261
  %v4358 = vadd.f32 %v3897, %v4270
  %v4359 = vadd.f32 %v3899, %v4279
  %v4360 = vadd.f32 %v3901, %v4288
  %v4361 = vadd.f32 %v3903, %v4297
  %v4362 = vadd.f32 %v3907, %v4306
  %v4363 = vadd.f32 %v3909, %v4315
  %v4364 = vadd.f32 %v3911, %v4324
  %v4365 = vadd.f32 %v3913, %v4333
  %v4366 = vmul.f32 %v3837, 1.442695
  %v4367 = vpow.pop %v4366
  %v4368 = vmul.f32 %v3839, 1.442695
  %v4369 = vpow.pop %v4368
  %v4370 = vmul.f32 %v3841, 1.442695
  %v4371 = vpow.pop %v4370
  %v4372 = vmul.f32 %v3843, 1.442695
  %v4373 = vpow.pop %v4372
  %v4374 = vmul.f32 %v3847, 1.442695
  %v4375 = vpow.pop %v4374
  %v4376 = vmul.f32 %v3849, 1.442695
  %v4377 = vpow.pop %v4376
  %v4378 = vmul.f32 %v3851, 1.442695
  %v4379 = vpow.pop %v4378
  %v4380 = vmul.f32 %v3853, 1.442695
  %v4381 = vpow.pop %v4380
  %v4382 = vmul.f32 %v3857, 1.442695
  %v4383 = vpow.pop %v4382
  %v4384 = vmul.f32 %v3859, 1.442695
  %v4385 = vpow.pop %v4384
  %v4386 = vmul.f32 %v3861, 1.442695
  %v4387 = vpow.pop %v4386
  %v4388 = vmul.f32 %v3863, 1.442695
  %v4389 = vpow.pop %v4388
  %v4390 = vmul.f32 %v3867, 1.442695
  %v4391 = vpow.pop %v4390
  %v4392 = vmul.f32 %v3869, 1.442695
  %v4393 = vpow.pop %v4392
  %v4394 = vmul.f32 %v3871, 1.442695
  %v4395 = vpow.pop %v4394
  %v4396 = vmul.f32 %v3873, 1.442695
  %v4397 = vpow.pop %v4396
  %v4398 = vmul.f32 %v3877, 1.442695
  %v4399 = vpow.pop %v4398
  %v4400 = vmul.f32 %v3879, 1.442695
  %v4401 = vpow.pop %v4400
  %v4402 = vmul.f32 %v3881, 1.442695
  %v4403 = vpow.pop %v4402
  %v4404 = vmul.f32 %v3883, 1.442695
  %v4405 = vpow.pop %v4404
  %v4406 = vmul.f32 %v3887, 1.442695
  %v4407 = vpow.pop %v4406
  %v4408 = vmul.f32 %v3889, 1.442695
  %v4409 = vpow.pop %v4408
  %v4410 = vmul.f32 %v3891, 1.442695
  %v4411 = vpow.pop %v4410
  %v4412 = vmul.f32 %v3893, 1.442695
  %v4413 = vpow.pop %v4412
  %v4414 = vmul.f32 %v3897, 1.442695
  %v4415 = vpow.pop %v4414
  %v4416 = vmul.f32 %v3899, 1.442695
  %v4417 = vpow.pop %v4416
  %v4418 = vmul.f32 %v3901, 1.442695
  %v4419 = vpow.pop %v4418
  %v4420 = vmul.f32 %v3903, 1.442695
  %v4421 = vpow.pop %v4420
  %v4422 = vmul.f32 %v3907, 1.442695
  %v4423 = vpow.pop %v4422
  %v4424 = vmul.f32 %v3909, 1.442695
  %v4425 = vpow.pop %v4424
  %v4426 = vmul.f32 %v3911, 1.442695
  %v4427 = vpow.pop %v4426
  %v4428 = vmul.f32 %v3913, 1.442695
  %v4429 = vpow.pop %v4428
  %v4430 = vadd.f32 %v4367, 1.0
  %v4431 = vlog2.pop %v4430
  %v4432 = vmul.f32 %v4431, 0.6931472
  %v4433 = vmul.f32 -0.5, %v4367
  %v4434 = vadd.f32 %v4433, 1.0
  %v4435 = vmul.f32 %v4434, %v4367
  %v4436 = vand.u32 2147483647, %v4367
  %vm4437 = vcmp.lt.f32.partialorder %v4436, 0.0004427343
  %v4438 = vsel %vm4437, %v4435, %v4432
  %v4439 = vadd.f32 %v4369, 1.0
  %v4440 = vlog2.pop %v4439
  %v4441 = vmul.f32 %v4440, 0.6931472
  %v4442 = vmul.f32 -0.5, %v4369
  %v4443 = vadd.f32 %v4442, 1.0
  %v4444 = vmul.f32 %v4443, %v4369
  %v4445 = vand.u32 2147483647, %v4369
  %vm4446 = vcmp.lt.f32.partialorder %v4445, 0.0004427343
  %v4447 = vsel %vm4446, %v4444, %v4441
  %v4448 = vadd.f32 %v4371, 1.0
  %v4449 = vlog2.pop %v4448
  %v4450 = vmul.f32 %v4449, 0.6931472
  %v4451 = vmul.f32 -0.5, %v4371
  %v4452 = vadd.f32 %v4451, 1.0
  %v4453 = vmul.f32 %v4452, %v4371
  %v4454 = vand.u32 2147483647, %v4371
  %vm4455 = vcmp.lt.f32.partialorder %v4454, 0.0004427343
  %v4456 = vsel %vm4455, %v4453, %v4450
  %v4457 = vadd.f32 %v4373, 1.0
  %v4458 = vlog2.pop %v4457
  %v4459 = vmul.f32 %v4458, 0.6931472
  %v4460 = vmul.f32 -0.5, %v4373
  %v4461 = vadd.f32 %v4460, 1.0
  %v4462 = vmul.f32 %v4461, %v4373
  %v4463 = vand.u32 2147483647, %v4373
  %vm4464 = vcmp.lt.f32.partialorder %v4463, 0.0004427343
  %v4465 = vsel %vm4464, %v4462, %v4459
  %v4466 = vadd.f32 %v4375, 1.0
  %v4467 = vlog2.pop %v4466
  %v4468 = vmul.f32 %v4467, 0.6931472
  %v4469 = vmul.f32 -0.5, %v4375
  %v4470 = vadd.f32 %v4469, 1.0
  %v4471 = vmul.f32 %v4470, %v4375
  %v4472 = vand.u32 2147483647, %v4375
  %vm4473 = vcmp.lt.f32.partialorder %v4472, 0.0004427343
  %v4474 = vsel %vm4473, %v4471, %v4468
  %v4475 = vadd.f32 %v4377, 1.0
  %v4476 = vlog2.pop %v4475
  %v4477 = vmul.f32 %v4476, 0.6931472
  %v4478 = vmul.f32 -0.5, %v4377
  %v4479 = vadd.f32 %v4478, 1.0
  %v4480 = vmul.f32 %v4479, %v4377
  %v4481 = vand.u32 2147483647, %v4377
  %vm4482 = vcmp.lt.f32.partialorder %v4481, 0.0004427343
  %v4483 = vsel %vm4482, %v4480, %v4477
  %v4484 = vadd.f32 %v4379, 1.0
  %v4485 = vlog2.pop %v4484
  %v4486 = vmul.f32 %v4485, 0.6931472
  %v4487 = vmul.f32 -0.5, %v4379
  %v4488 = vadd.f32 %v4487, 1.0
  %v4489 = vmul.f32 %v4488, %v4379
  %v4490 = vand.u32 2147483647, %v4379
  %vm4491 = vcmp.lt.f32.partialorder %v4490, 0.0004427343
  %v4492 = vsel %vm4491, %v4489, %v4486
  %v4493 = vadd.f32 %v4381, 1.0
  %v4494 = vlog2.pop %v4493
  %v4495 = vmul.f32 %v4494, 0.6931472
  %v4496 = vmul.f32 -0.5, %v4381
  %v4497 = vadd.f32 %v4496, 1.0
  %v4498 = vmul.f32 %v4497, %v4381
  %v4499 = vand.u32 2147483647, %v4381
  %vm4500 = vcmp.lt.f32.partialorder %v4499, 0.0004427343
  %v4501 = vsel %vm4500, %v4498, %v4495
  %v4502 = vadd.f32 %v4383, 1.0
  %v4503 = vlog2.pop %v4502
  %v4504 = vmul.f32 %v4503, 0.6931472
  %v4505 = vmul.f32 -0.5, %v4383
  %v4506 = vadd.f32 %v4505, 1.0
  %v4507 = vmul.f32 %v4506, %v4383
  %v4508 = vand.u32 2147483647, %v4383
  %vm4509 = vcmp.lt.f32.partialorder %v4508, 0.0004427343
  %v4510 = vsel %vm4509, %v4507, %v4504
  %v4511 = vadd.f32 %v4385, 1.0
  %v4512 = vlog2.pop %v4511
  %v4513 = vmul.f32 %v4512, 0.6931472
  %v4514 = vmul.f32 -0.5, %v4385
  %v4515 = vadd.f32 %v4514, 1.0
  %v4516 = vmul.f32 %v4515, %v4385
  %v4517 = vand.u32 2147483647, %v4385
  %vm4518 = vcmp.lt.f32.partialorder %v4517, 0.0004427343
  %v4519 = vsel %vm4518, %v4516, %v4513
  %v4520 = vadd.f32 %v4387, 1.0
  %v4521 = vlog2.pop %v4520
  %v4522 = vmul.f32 %v4521, 0.6931472
  %v4523 = vmul.f32 -0.5, %v4387
  %v4524 = vadd.f32 %v4523, 1.0
  %v4525 = vmul.f32 %v4524, %v4387
  %v4526 = vand.u32 2147483647, %v4387
  %vm4527 = vcmp.lt.f32.partialorder %v4526, 0.0004427343
  %v4528 = vsel %vm4527, %v4525, %v4522
  %v4529 = vadd.f32 %v4389, 1.0
  %v4530 = vlog2.pop %v4529
  %v4531 = vmul.f32 %v4530, 0.6931472
  %v4532 = vmul.f32 -0.5, %v4389
  %v4533 = vadd.f32 %v4532, 1.0
  %v4534 = vmul.f32 %v4533, %v4389
  %v4535 = vand.u32 2147483647, %v4389
  %vm4536 = vcmp.lt.f32.partialorder %v4535, 0.0004427343
  %v4537 = vsel %vm4536, %v4534, %v4531
  %v4538 = vadd.f32 %v4391, 1.0
  %v4539 = vlog2.pop %v4538
  %v4540 = vmul.f32 %v4539, 0.6931472
  %v4541 = vmul.f32 -0.5, %v4391
  %v4542 = vadd.f32 %v4541, 1.0
  %v4543 = vmul.f32 %v4542, %v4391
  %v4544 = vand.u32 2147483647, %v4391
  %vm4545 = vcmp.lt.f32.partialorder %v4544, 0.0004427343
  %v4546 = vsel %vm4545, %v4543, %v4540
  %v4547 = vadd.f32 %v4393, 1.0
  %v4548 = vlog2.pop %v4547
  %v4549 = vmul.f32 %v4548, 0.6931472
  %v4550 = vmul.f32 -0.5, %v4393
  %v4551 = vadd.f32 %v4550, 1.0
  %v4552 = vmul.f32 %v4551, %v4393
  %v4553 = vand.u32 2147483647, %v4393
  %vm4554 = vcmp.lt.f32.partialorder %v4553, 0.0004427343
  %v4555 = vsel %vm4554, %v4552, %v4549
  %v4556 = vadd.f32 %v4395, 1.0
  %v4557 = vlog2.pop %v4556
  %v4558 = vmul.f32 %v4557, 0.6931472
  %v4559 = vmul.f32 -0.5, %v4395
  %v4560 = vadd.f32 %v4559, 1.0
  %v4561 = vmul.f32 %v4560, %v4395
  %v4562 = vand.u32 2147483647, %v4395
  %vm4563 = vcmp.lt.f32.partialorder %v4562, 0.0004427343
  %v4564 = vsel %vm4563, %v4561, %v4558
  %v4565 = vadd.f32 %v4397, 1.0
  %v4566 = vlog2.pop %v4565
  %v4567 = vmul.f32 %v4566, 0.6931472
  %v4568 = vmul.f32 -0.5, %v4397
  %v4569 = vadd.f32 %v4568, 1.0
  %v4570 = vmul.f32 %v4569, %v4397
  %v4571 = vand.u32 2147483647, %v4397
  %vm4572 = vcmp.lt.f32.partialorder %v4571, 0.0004427343
  %v4573 = vsel %vm4572, %v4570, %v4567
  %v4574 = vadd.f32 %v4399, 1.0
  %v4575 = vlog2.pop %v4574
  %v4576 = vmul.f32 %v4575, 0.6931472
  %v4577 = vmul.f32 -0.5, %v4399
  %v4578 = vadd.f32 %v4577, 1.0
  %v4579 = vmul.f32 %v4578, %v4399
  %v4580 = vand.u32 2147483647, %v4399
  %vm4581 = vcmp.lt.f32.partialorder %v4580, 0.0004427343
  %v4582 = vsel %vm4581, %v4579, %v4576
  %v4583 = vadd.f32 %v4401, 1.0
  %v4584 = vlog2.pop %v4583
  %v4585 = vmul.f32 %v4584, 0.6931472
  %v4586 = vmul.f32 -0.5, %v4401
  %v4587 = vadd.f32 %v4586, 1.0
  %v4588 = vmul.f32 %v4587, %v4401
  %v4589 = vand.u32 2147483647, %v4401
  %vm4590 = vcmp.lt.f32.partialorder %v4589, 0.0004427343
  %v4591 = vsel %vm4590, %v4588, %v4585
  %v4592 = vadd.f32 %v4403, 1.0
  %v4593 = vlog2.pop %v4592
  %v4594 = vmul.f32 %v4593, 0.6931472
  %v4595 = vmul.f32 -0.5, %v4403
  %v4596 = vadd.f32 %v4595, 1.0
  %v4597 = vmul.f32 %v4596, %v4403
  %v4598 = vand.u32 2147483647, %v4403
  %vm4599 = vcmp.lt.f32.partialorder %v4598, 0.0004427343
  %v4600 = vsel %vm4599, %v4597, %v4594
  %v4601 = vadd.f32 %v4405, 1.0
  %v4602 = vlog2.pop %v4601
  %v4603 = vmul.f32 %v4602, 0.6931472
  %v4604 = vmul.f32 -0.5, %v4405
  %v4605 = vadd.f32 %v4604, 1.0
  %v4606 = vmul.f32 %v4605, %v4405
  %v4607 = vand.u32 2147483647, %v4405
  %vm4608 = vcmp.lt.f32.partialorder %v4607, 0.0004427343
  %v4609 = vsel %vm4608, %v4606, %v4603
  %v4610 = vadd.f32 %v4407, 1.0
  %v4611 = vlog2.pop %v4610
  %v4612 = vmul.f32 %v4611, 0.6931472
  %v4613 = vmul.f32 -0.5, %v4407
  %v4614 = vadd.f32 %v4613, 1.0
  %v4615 = vmul.f32 %v4614, %v4407
  %v4616 = vand.u32 2147483647, %v4407
  %vm4617 = vcmp.lt.f32.partialorder %v4616, 0.0004427343
  %v4618 = vsel %vm4617, %v4615, %v4612
  %v4619 = vadd.f32 %v4409, 1.0
  %v4620 = vlog2.pop %v4619
  %v4621 = vmul.f32 %v4620, 0.6931472
  %v4622 = vmul.f32 -0.5, %v4409
  %v4623 = vadd.f32 %v4622, 1.0
  %v4624 = vmul.f32 %v4623, %v4409
  %v4625 = vand.u32 2147483647, %v4409
  %vm4626 = vcmp.lt.f32.partialorder %v4625, 0.0004427343
  %v4627 = vsel %vm4626, %v4624, %v4621
  %v4628 = vadd.f32 %v4411, 1.0
  %v4629 = vlog2.pop %v4628
  %v4630 = vmul.f32 %v4629, 0.6931472
  %v4631 = vmul.f32 -0.5, %v4411
  %v4632 = vadd.f32 %v4631, 1.0
  %v4633 = vmul.f32 %v4632, %v4411
  %v4634 = vand.u32 2147483647, %v4411
  %vm4635 = vcmp.lt.f32.partialorder %v4634, 0.0004427343
  %v4636 = vsel %vm4635, %v4633, %v4630
  %v4637 = vadd.f32 %v4413, 1.0
  %v4638 = vlog2.pop %v4637
  %v4639 = vmul.f32 %v4638, 0.6931472
  %v4640 = vmul.f32 -0.5, %v4413
  %v4641 = vadd.f32 %v4640, 1.0
  %v4642 = vmul.f32 %v4641, %v4413
  %v4643 = vand.u32 2147483647, %v4413
  %vm4644 = vcmp.lt.f32.partialorder %v4643, 0.0004427343
  %v4645 = vsel %vm4644, %v4642, %v4639
  %v4646 = vadd.f32 %v4415, 1.0
  %v4647 = vlog2.pop %v4646
  %v4648 = vmul.f32 %v4647, 0.6931472
  %v4649 = vmul.f32 -0.5, %v4415
  %v4650 = vadd.f32 %v4649, 1.0
  %v4651 = vmul.f32 %v4650, %v4415
  %v4652 = vand.u32 2147483647, %v4415
  %vm4653 = vcmp.lt.f32.partialorder %v4652, 0.0004427343
  %v4654 = vsel %vm4653, %v4651, %v4648
  %v4655 = vadd.f32 %v4417, 1.0
  %v4656 = vlog2.pop %v4655
  %v4657 = vmul.f32 %v4656, 0.6931472
  %v4658 = vmul.f32 -0.5, %v4417
  %v4659 = vadd.f32 %v4658, 1.0
  %v4660 = vmul.f32 %v4659, %v4417
  %v4661 = vand.u32 2147483647, %v4417
  %vm4662 = vcmp.lt.f32.partialorder %v4661, 0.0004427343
  %v4663 = vsel %vm4662, %v4660, %v4657
  %v4664 = vadd.f32 %v4419, 1.0
  %v4665 = vlog2.pop %v4664
  %v4666 = vmul.f32 %v4665, 0.6931472
  %v4667 = vmul.f32 -0.5, %v4419
  %v4668 = vadd.f32 %v4667, 1.0
  %v4669 = vmul.f32 %v4668, %v4419
  %v4670 = vand.u32 2147483647, %v4419
  %vm4671 = vcmp.lt.f32.partialorder %v4670, 0.0004427343
  %v4672 = vsel %vm4671, %v4669, %v4666
  %v4673 = vadd.f32 %v4421, 1.0
  %v4674 = vlog2.pop %v4673
  %v4675 = vmul.f32 %v4674, 0.6931472
  %v4676 = vmul.f32 -0.5, %v4421
  %v4677 = vadd.f32 %v4676, 1.0
  %v4678 = vmul.f32 %v4677, %v4421
  %v4679 = vand.u32 2147483647, %v4421
  %vm4680 = vcmp.lt.f32.partialorder %v4679, 0.0004427343
  %v4681 = vsel %vm4680, %v4678, %v4675
  %v4682 = vadd.f32 %v4423, 1.0
  %v4683 = vlog2.pop %v4682
  %v4684 = vmul.f32 %v4683, 0.6931472
  %v4685 = vmul.f32 -0.5, %v4423
  %v4686 = vadd.f32 %v4685, 1.0
  %v4687 = vmul.f32 %v4686, %v4423
  %v4688 = vand.u32 2147483647, %v4423
  %vm4689 = vcmp.lt.f32.partialorder %v4688, 0.0004427343
  %v4690 = vsel %vm4689, %v4687, %v4684
  %v4691 = vadd.f32 %v4425, 1.0
  %v4692 = vlog2.pop %v4691
  %v4693 = vmul.f32 %v4692, 0.6931472
  %v4694 = vmul.f32 -0.5, %v4425
  %v4695 = vadd.f32 %v4694, 1.0
  %v4696 = vmul.f32 %v4695, %v4425
  %v4697 = vand.u32 2147483647, %v4425
  %vm4698 = vcmp.lt.f32.partialorder %v4697, 0.0004427343
  %v4699 = vsel %vm4698, %v4696, %v4693
  %v4700 = vadd.f32 %v4427, 1.0
  %v4701 = vlog2.pop %v4700
  %v4702 = vmul.f32 %v4701, 0.6931472
  %v4703 = vmul.f32 -0.5, %v4427
  %v4704 = vadd.f32 %v4703, 1.0
  %v4705 = vmul.f32 %v4704, %v4427
  %v4706 = vand.u32 2147483647, %v4427
  %vm4707 = vcmp.lt.f32.partialorder %v4706, 0.0004427343
  %v4708 = vsel %vm4707, %v4705, %v4702
  %v4709 = vadd.f32 %v4429, 1.0
  %v4710 = vlog2.pop %v4709
  %v4711 = vmul.f32 %v4710, 0.6931472
  %v4712 = vmul.f32 -0.5, %v4429
  %v4713 = vadd.f32 %v4712, 1.0
  %v4714 = vmul.f32 %v4713, %v4429
  %v4715 = vand.u32 2147483647, %v4429
  %vm4716 = vcmp.lt.f32.partialorder %v4715, 0.0004427343
  %v4717 = vsel %vm4716, %v4714, %v4711
  %v4718 = vsel %vm3918, %v4334, %v4438
  %v4719 = vsel %vm3919, %v4335, %v4447
  %v4720 = vsel %vm3920, %v4336, %v4456
  %v4721 = vsel %vm3921, %v4337, %v4465
  %v4722 = vsel %vm3922, %v4338, %v4474
  %v4723 = vsel %vm3923, %v4339, %v4483
  %v4724 = vsel %vm3924, %v4340, %v4492
  %v4725 = vsel %vm3925, %v4341, %v4501
  %v4726 = vsel %vm3926, %v4342, %v4510
  %v4727 = vsel %vm3927, %v4343, %v4519
  %v4728 = vsel %vm3928, %v4344, %v4528
  %v4729 = vsel %vm3929, %v4345, %v4537
  %v4730 = vsel %vm3930, %v4346, %v4546
  %v4731 = vsel %vm3931, %v4347, %v4555
  %v4732 = vsel %vm3932, %v4348, %v4564
  %v4733 = vsel %vm3933, %v4349, %v4573
  %v4734 = vsel %vm3934, %v4350, %v4582
  %v4735 = vsel %vm3935, %v4351, %v4591
  %v4736 = vsel %vm3936, %v4352, %v4600
  %v4737 = vsel %vm3937, %v4353, %v4609
  %v4738 = vsel %vm3938, %v4354, %v4618
  %v4739 = vsel %vm3939, %v4355, %v4627
  %v4740 = vsel %vm3940, %v4356, %v4636
  %v4741 = vsel %vm3941, %v4357, %v4645
  %v4742 = vsel %vm3942, %v4358, %v4654
  %v4743 = vsel %vm3943, %v4359, %v4663
  %v4744 = vsel %vm3944, %v4360, %v4672
  %v4745 = vsel %vm3945, %v4361, %v4681
  %v4746 = vsel %vm3946, %v4362, %v4690
  %v4747 = vsel %vm3947, %v4363, %v4699
  %v4748 = vsel %vm3948, %v4364, %v4708
  %v4749 = vsel %vm3949, %v4365, %v4717
  %v4750 = vsub.f32 %v4718, 0.3132617
  %v4751 = vsub.f32 %v4719, 0.3132617
  %v4752 = vsub.f32 %v4720, 0.3132617
  %v4753 = vsub.f32 %v4721, 0.3132617
  %v4754 = vsub.f32 %v4722, 0.3132617
  %v4755 = vsub.f32 %v4723, 0.3132617
  %v4756 = vsub.f32 %v4724, 0.3132617
  %v4757 = vsub.f32 %v4725, 0.3132617
  %v4758 = vsub.f32 %v4726, 0.3132617
  %v4759 = vsub.f32 %v4727, 0.3132617
  %v4760 = vsub.f32 %v4728, 0.3132617
  %v4761 = vsub.f32 %v4729, 0.3132617
  %v4762 = vsub.f32 %v4730, 0.3132617
  %v4763 = vsub.f32 %v4731, 0.3132617
  %v4764 = vsub.f32 %v4732, 0.3132617
  %v4765 = vsub.f32 %v4733, 0.3132617
  %v4766 = vsub.f32 %v4734, 0.3132617
  %v4767 = vsub.f32 %v4735, 0.3132617
  %v4768 = vsub.f32 %v4736, 0.3132617
  %v4769 = vsub.f32 %v4737, 0.3132617
  %v4770 = vsub.f32 %v4738, 0.3132617
  %v4771 = vsub.f32 %v4739, 0.3132617
  %v4772 = vsub.f32 %v4740, 0.3132617
  %v4773 = vsub.f32 %v4741, 0.3132617
  %v4774 = vsub.f32 %v4742, 0.3132617
  %v4775 = vsub.f32 %v4743, 0.3132617
  %v4776 = vsub.f32 %v4744, 0.3132617
  %v4777 = vsub.f32 %v4745, 0.3132617
  %v4778 = vsub.f32 %v4746, 0.3132617
  %v4779 = vsub.f32 %v4747, 0.3132617
  %v4780 = vsub.f32 %v4748, 0.3132617
  %v4781 = vsub.f32 %v4749, 0.3132617
  %vm4782 = vcmp.le.f32.partialorder %v4750, 0.0
  %vm4783 = vcmp.le.f32.partialorder %v4751, 0.0
  %vm4784 = vcmp.le.f32.partialorder %v4752, 0.0
  %vm4785 = vcmp.le.f32.partialorder %v4753, 0.0
  %vm4786 = vcmp.le.f32.partialorder %v4754, 0.0
  %vm4787 = vcmp.le.f32.partialorder %v4755, 0.0
  %vm4788 = vcmp.le.f32.partialorder %v4756, 0.0
  %vm4789 = vcmp.le.f32.partialorder %v4757, 0.0
  %vm4790 = vcmp.le.f32.partialorder %v4758, 0.0
  %vm4791 = vcmp.le.f32.partialorder %v4759, 0.0
  %vm4792 = vcmp.le.f32.partialorder %v4760, 0.0
  %vm4793 = vcmp.le.f32.partialorder %v4761, 0.0
  %vm4794 = vcmp.le.f32.partialorder %v4762, 0.0
  %vm4795 = vcmp.le.f32.partialorder %v4763, 0.0
  %vm4796 = vcmp.le.f32.partialorder %v4764, 0.0
  %vm4797 = vcmp.le.f32.partialorder %v4765, 0.0
  %vm4798 = vcmp.le.f32.partialorder %v4766, 0.0
  %vm4799 = vcmp.le.f32.partialorder %v4767, 0.0
  %vm4800 = vcmp.le.f32.partialorder %v4768, 0.0
  %vm4801 = vcmp.le.f32.partialorder %v4769, 0.0
  %vm4802 = vcmp.le.f32.partialorder %v4770, 0.0
  %vm4803 = vcmp.le.f32.partialorder %v4771, 0.0
  %vm4804 = vcmp.le.f32.partialorder %v4772, 0.0
  %vm4805 = vcmp.le.f32.partialorder %v4773, 0.0
  %vm4806 = vcmp.le.f32.partialorder %v4774, 0.0
  %vm4807 = vcmp.le.f32.partialorder %v4775, 0.0
  %vm4808 = vcmp.le.f32.partialorder %v4776, 0.0
  %vm4809 = vcmp.le.f32.partialorder %v4777, 0.0
  %vm4810 = vcmp.le.f32.partialorder %v4778, 0.0
  %vm4811 = vcmp.le.f32.partialorder %v4779, 0.0
  %vm4812 = vcmp.le.f32.partialorder %v4780, 0.0
  %vm4813 = vcmp.le.f32.partialorder %v4781, 0.0
  %v4814 = vsel %vm4782, 0.0, %v4750
  %v4815 = vsel %vm4783, 0.0, %v4751
  %v4816 = vsel %vm4784, 0.0, %v4752
  %v4817 = vsel %vm4785, 0.0, %v4753
  %v4818 = vsel %vm4786, 0.0, %v4754
  %v4819 = vsel %vm4787, 0.0, %v4755
  %v4820 = vsel %vm4788, 0.0, %v4756
  %v4821 = vsel %vm4789, 0.0, %v4757
  %v4822 = vsel %vm4790, 0.0, %v4758
  %v4823 = vsel %vm4791, 0.0, %v4759
  %v4824 = vsel %vm4792, 0.0, %v4760
  %v4825 = vsel %vm4793, 0.0, %v4761
  %v4826 = vsel %vm4794, 0.0, %v4762
  %v4827 = vsel %vm4795, 0.0, %v4763
  %v4828 = vsel %vm4796, 0.0, %v4764
  %v4829 = vsel %vm4797, 0.0, %v4765
  %v4830 = vsel %vm4798, 0.0, %v4766
  %v4831 = vsel %vm4799, 0.0, %v4767
  %v4832 = vsel %vm4800, 0.0, %v4768
  %v4833 = vsel %vm4801, 0.0, %v4769
  %v4834 = vsel %vm4802, 0.0, %v4770
  %v4835 = vsel %vm4803, 0.0, %v4771
  %v4836 = vsel %vm4804, 0.0, %v4772
  %v4837 = vsel %vm4805, 0.0, %v4773
  %v4838 = vsel %vm4806, 0.0, %v4774
  %v4839 = vsel %vm4807, 0.0, %v4775
  %v4840 = vsel %vm4808, 0.0, %v4776
  %v4841 = vsel %vm4809, 0.0, %v4777
  %v4842 = vsel %vm4810, 0.0, %v4778
  %v4843 = vsel %vm4811, 0.0, %v4779
  %v4844 = vsel %vm4812, 0.0, %v4780
  %v4845 = vsel %vm4813, 0.0, %v4781
  %v4846 = vsel %vm3916, 1, 0
  %v4847 = vsel %vm3917, 1, 0
  %vm4848 = vcmp.eq.s32.totalorder %v4846, 1
  %vm4849 = vcmp.eq.s32.totalorder %v4847, 1
  %v4850 = vsel %vm4848, %v4814, 0.0
  %v4851 = vsel %vm4849, %v4815, 0.0
  %v4852 = vsel %vm4848, %v4816, 0.0
  %v4853 = vsel %vm4849, %v4817, 0.0
  %v4854 = vsel %vm4848, %v4818, 0.0
  %v4855 = vsel %vm4849, %v4819, 0.0
  %v4856 = vsel %vm4848, %v4820, 0.0
  %v4857 = vsel %vm4849, %v4821, 0.0
  %v4858 = vsel %vm4848, %v4822, 0.0
  %v4859 = vsel %vm4849, %v4823, 0.0
  %v4860 = vsel %vm4848, %v4824, 0.0
  %v4861 = vsel %vm4849, %v4825, 0.0
  %v4862 = vsel %vm4848, %v4826, 0.0
  %v4863 = vsel %vm4849, %v4827, 0.0
  %v4864 = vsel %vm4848, %v4828, 0.0
  %v4865 = vsel %vm4849, %v4829, 0.0
  %v4866 = vsel %vm4848, %v4830, 0.0
  %v4867 = vsel %vm4849, %v4831, 0.0
  %v4868 = vsel %vm4848, %v4832, 0.0
  %v4869 = vsel %vm4849, %v4833, 0.0
  %v4870 = vsel %vm4848, %v4834, 0.0
  %v4871 = vsel %vm4849, %v4835, 0.0
  %v4872 = vsel %vm4848, %v4836, 0.0
  %v4873 = vsel %vm4849, %v4837, 0.0
  %v4874 = vsel %vm4848, %v4838, 0.0
  %v4875 = vsel %vm4849, %v4839, 0.0
  %v4876 = vsel %vm4848, %v4840, 0.0
  %v4877 = vsel %vm4849, %v4841, 0.0
  %v4878 = vsel %vm4848, %v4842, 0.0
  %v4879 = vsel %vm4849, %v4843, 0.0
  %v4880 = vsel %vm4848, %v4844, 0.0
  %v4881 = vsel %vm4849, %v4845, 0.0
  %v4882 = vadd.f32 %v4850, %v4851
  %4883 = vadd.xlane.f32.xlu0 %v4882
  %v4884 = vpop.xlane.xlu0 %4883
  %v4885 = vadd.f32 %v4852, %v4853
  %4886 = vadd.xlane.f32.xlu0 %v4885
  %v4887 = vpop.xlane.xlu0 %4886
  %v4888 = vadd.f32 %v4854, %v4855
  %4889 = vadd.xlane.f32.xlu0 %v4888
  %v4890 = vpop.xlane.xlu0 %4889
  %v4891 = vadd.f32 %v4856, %v4857
  %4892 = vadd.xlane.f32.xlu0 %v4891
  %v4893 = vpop.xlane.xlu0 %4892
  %v4894 = vadd.f32 %v4858, %v4859
  %4895 = vadd.xlane.f32.xlu0 %v4894
  %v4896 = vpop.xlane.xlu0 %4895
  %v4897 = vadd.f32 %v4860, %v4861
  %4898 = vadd.xlane.f32.xlu0 %v4897
  %v4899 = vpop.xlane.xlu0 %4898
  %v4900 = vadd.f32 %v4862, %v4863
  %4901 = vadd.xlane.f32.xlu0 %v4900
  %v4902 = vpop.xlane.xlu0 %4901
  %v4903 = vadd.f32 %v4864, %v4865
  %4904 = vadd.xlane.f32.xlu0 %v4903
  %v4905 = vpop.xlane.xlu0 %4904
  %v4906 = vadd.f32 %v4866, %v4867
  %4907 = vadd.xlane.f32.xlu0 %v4906
  %v4908 = vpop.xlane.xlu0 %4907
  %v4909 = vadd.f32 %v4868, %v4869
  %4910 = vadd.xlane.f32.xlu0 %v4909
  %v4911 = vpop.xlane.xlu0 %4910
  %v4912 = vadd.f32 %v4870, %v4871
  %4913 = vadd.xlane.f32.xlu0 %v4912
  %v4914 = vpop.xlane.xlu0 %4913
  %v4915 = vadd.f32 %v4872, %v4873
  %4916 = vadd.xlane.f32.xlu0 %v4915
  %v4917 = vpop.xlane.xlu0 %4916
  %v4918 = vadd.f32 %v4874, %v4875
  %4919 = vadd.xlane.f32.xlu0 %v4918
  %v4920 = vpop.xlane.xlu0 %4919
  %v4921 = vadd.f32 %v4876, %v4877
  %4922 = vadd.xlane.f32.xlu0 %v4921
  %v4923 = vpop.xlane.xlu0 %4922
  %v4924 = vadd.f32 %v4878, %v4879
  %4925 = vadd.xlane.f32.xlu0 %v4924
  %v4926 = vpop.xlane.xlu0 %4925
  %v4927 = vadd.f32 %v4880, %v4881
  %4928 = vadd.xlane.f32.xlu0 %v4927
  %v4929 = vpop.xlane.xlu0 %4928
  %v4930 = vadd.f32 %v4884, 1e-05
  %v4931 = vadd.f32 %v4887, 1e-05
  %v4932 = vadd.f32 %v4890, 1e-05
  %v4933 = vadd.f32 %v4893, 1e-05
  %v4934 = vadd.f32 %v4896, 1e-05
  %v4935 = vadd.f32 %v4899, 1e-05
  %v4936 = vadd.f32 %v4902, 1e-05
  %v4937 = vadd.f32 %v4905, 1e-05
  %v4938 = vadd.f32 %v4908, 1e-05
  %v4939 = vadd.f32 %v4911, 1e-05
  %v4940 = vadd.f32 %v4914, 1e-05
  %v4941 = vadd.f32 %v4917, 1e-05
  %v4942 = vadd.f32 %v4920, 1e-05
  %v4943 = vadd.f32 %v4923, 1e-05
  %v4944 = vadd.f32 %v4926, 1e-05
  %v4945 = vadd.f32 %v4929, 1e-05
  %v4946 = vrcp.pop %v4930
  %v4947 = vrcp.pop %v4931
  %v4948 = vrcp.pop %v4932
  %v4949 = vrcp.pop %v4933
  %v4950 = vrcp.pop %v4934
  %v4951 = vrcp.pop %v4935
  %v4952 = vrcp.pop %v4936
  %v4953 = vrcp.pop %v4937
  %v4954 = vrcp.pop %v4938
  %v4955 = vrcp.pop %v4939
  %v4956 = vrcp.pop %v4940
  %v4957 = vrcp.pop %v4941
  %v4958 = vrcp.pop %v4942
  %v4959 = vrcp.pop %v4943
  %v4960 = vrcp.pop %v4944
  %v4961 = vrcp.pop %v4945
  %v4962 = vmul.f32 %v4850, %v4946
  %v4963 = vmul.f32 %v4851, %v4946
  %v4964 = vmul.f32 %v4852, %v4947
  %v4965 = vmul.f32 %v4853, %v4947
  %v4966 = vmul.f32 %v4854, %v4948
  %v4967 = vmul.f32 %v4855, %v4948
  %v4968 = vmul.f32 %v4856, %v4949
  %v4969 = vmul.f32 %v4857, %v4949
  %v4970 = vmul.f32 %v4858, %v4950
  %v4971 = vmul.f32 %v4859, %v4950
  %v4972 = vmul.f32 %v4860, %v4951
  %v4973 = vmul.f32 %v4861, %v4951
  %v4974 = vmul.f32 %v4862, %v4952
  %v4975 = vmul.f32 %v4863, %v4952
  %v4976 = vmul.f32 %v4864, %v4953
  %v4977 = vmul.f32 %v4865, %v4953
  %v4978 = vmul.f32 %v4866, %v4954
  %v4979 = vmul.f32 %v4867, %v4954
  %v4980 = vmul.f32 %v4868, %v4955
  %v4981 = vmul.f32 %v4869, %v4955
  %v4982 = vmul.f32 %v4870, %v4956
  %v4983 = vmul.f32 %v4871, %v4956
  %v4984 = vmul.f32 %v4872, %v4957
  %v4985 = vmul.f32 %v4873, %v4957
  %v4986 = vmul.f32 %v4874, %v4958
  %v4987 = vmul.f32 %v4875, %v4958
  %v4988 = vmul.f32 %v4876, %v4959
  %v4989 = vmul.f32 %v4877, %v4959
  %v4990 = vmul.f32 %v4878, %v4960
  %v4991 = vmul.f32 %v4879, %v4960
  %v4992 = vmul.f32 %v4880, %v4961
  %v4993 = vmul.f32 %v4881, %v4961
  %v4994 = vtanh.pop %v3837
  %v4995 = vtanh.pop %v3839
  %v4996 = vtanh.pop %v3841
  %v4997 = vtanh.pop %v3843
  %v4998 = vtanh.pop %v3847
  %v4999 = vtanh.pop %v3849
  %v5000 = vtanh.pop %v3851
  %v5001 = vtanh.pop %v3853
  %v5002 = vtanh.pop %v3857
  %v5003 = vtanh.pop %v3859
  %v5004 = vtanh.pop %v3861
  %v5005 = vtanh.pop %v3863
  %v5006 = vtanh.pop %v3867
  %v5007 = vtanh.pop %v3869
  %v5008 = vtanh.pop %v3871
  %v5009 = vtanh.pop %v3873
  %v5010 = vtanh.pop %v3877
  %v5011 = vtanh.pop %v3879
  %v5012 = vtanh.pop %v3881
  %v5013 = vtanh.pop %v3883
  %v5014 = vtanh.pop %v3887
  %v5015 = vtanh.pop %v3889
  %v5016 = vtanh.pop %v3891
  %v5017 = vtanh.pop %v3893
  %v5018 = vtanh.pop %v3897
  %v5019 = vtanh.pop %v3899
  %v5020 = vtanh.pop %v3901
  %v5021 = vtanh.pop %v3903
  %v5022 = vtanh.pop %v3907
  %v5023 = vtanh.pop %v3909
  %v5024 = vtanh.pop %v3911
  %v5025 = vtanh.pop %v3913
  %v5026 = vadd.f32 %v4994, 1.0
  %v5027 = vadd.f32 %v4995, 1.0
  %v5028 = vadd.f32 %v4996, 1.0
  %v5029 = vadd.f32 %v4997, 1.0
  %v5030 = vadd.f32 %v4998, 1.0
  %v5031 = vadd.f32 %v4999, 1.0
  %v5032 = vadd.f32 %v5000, 1.0
  %v5033 = vadd.f32 %v5001, 1.0
  %v5034 = vadd.f32 %v5002, 1.0
  %v5035 = vadd.f32 %v5003, 1.0
  %v5036 = vadd.f32 %v5004, 1.0
  %v5037 = vadd.f32 %v5005, 1.0
  %v5038 = vadd.f32 %v5006, 1.0
  %v5039 = vadd.f32 %v5007, 1.0
  %v5040 = vadd.f32 %v5008, 1.0
  %v5041 = vadd.f32 %v5009, 1.0
  %v5042 = vadd.f32 %v5010, 1.0
  %v5043 = vadd.f32 %v5011, 1.0
  %v5044 = vadd.f32 %v5012, 1.0
  %v5045 = vadd.f32 %v5013, 1.0
  %v5046 = vadd.f32 %v5014, 1.0
  %v5047 = vadd.f32 %v5015, 1.0
  %v5048 = vadd.f32 %v5016, 1.0
  %v5049 = vadd.f32 %v5017, 1.0
  %v5050 = vadd.f32 %v5018, 1.0
  %v5051 = vadd.f32 %v5019, 1.0
  %v5052 = vadd.f32 %v5020, 1.0
  %v5053 = vadd.f32 %v5021, 1.0
  %v5054 = vadd.f32 %v5022, 1.0
  %v5055 = vadd.f32 %v5023, 1.0
  %v5056 = vadd.f32 %v5024, 1.0
  %v5057 = vadd.f32 %v5025, 1.0
  %v5058 = vmul.f32 %v5026, 0.5
  %v5059 = vmul.f32 %v5027, 0.5
  %v5060 = vmul.f32 %v5028, 0.5
  %v5061 = vmul.f32 %v5029, 0.5
  %v5062 = vmul.f32 %v5030, 0.5
  %v5063 = vmul.f32 %v5031, 0.5
  %v5064 = vmul.f32 %v5032, 0.5
  %v5065 = vmul.f32 %v5033, 0.5
  %v5066 = vmul.f32 %v5034, 0.5
  %v5067 = vmul.f32 %v5035, 0.5
  %v5068 = vmul.f32 %v5036, 0.5
  %v5069 = vmul.f32 %v5037, 0.5
  %v5070 = vmul.f32 %v5038, 0.5
  %v5071 = vmul.f32 %v5039, 0.5
  %v5072 = vmul.f32 %v5040, 0.5
  %v5073 = vmul.f32 %v5041, 0.5
  %v5074 = vmul.f32 %v5042, 0.5
  %v5075 = vmul.f32 %v5043, 0.5
  %v5076 = vmul.f32 %v5044, 0.5
  %v5077 = vmul.f32 %v5045, 0.5
  %v5078 = vmul.f32 %v5046, 0.5
  %v5079 = vmul.f32 %v5047, 0.5
  %v5080 = vmul.f32 %v5048, 0.5
  %v5081 = vmul.f32 %v5049, 0.5
  %v5082 = vmul.f32 %v5050, 0.5
  %v5083 = vmul.f32 %v5051, 0.5
  %v5084 = vmul.f32 %v5052, 0.5
  %v5085 = vmul.f32 %v5053, 0.5
  %v5086 = vmul.f32 %v5054, 0.5
  %v5087 = vmul.f32 %v5055, 0.5
  %v5088 = vmul.f32 %v5056, 0.5
  %v5089 = vmul.f32 %v5057, 0.5
  %vm5090 = vcmp.eq.s32.totalorder %v2156, 200
  %vm5091 = vcmp.eq.s32.totalorder %v3915, 200
  %v5092 = vsel %vm5090, 1, 0
  %v5093 = vsel %vm5091, 1, 0
  %vm5094 = vcmp.eq.s32.totalorder %v5092, 1
  %vm5095 = vcmp.eq.s32.totalorder %v5093, 1
  %v5096 = vsel %vm5094, %v5058, 0.0
  %v5097 = vsel %vm5095, %v5059, 0.0
  %v5098 = vsel %vm5094, %v5060, 0.0
  %v5099 = vsel %vm5095, %v5061, 0.0
  %v5100 = vsel %vm5094, %v5062, 0.0
  %v5101 = vsel %vm5095, %v5063, 0.0
  %v5102 = vsel %vm5094, %v5064, 0.0
  %v5103 = vsel %vm5095, %v5065, 0.0
  %v5104 = vsel %vm5094, %v5066, 0.0
  %v5105 = vsel %vm5095, %v5067, 0.0
  %v5106 = vsel %vm5094, %v5068, 0.0
  %v5107 = vsel %vm5095, %v5069, 0.0
  %v5108 = vsel %vm5094, %v5070, 0.0
  %v5109 = vsel %vm5095, %v5071, 0.0
  %v5110 = vsel %vm5094, %v5072, 0.0
  %v5111 = vsel %vm5095, %v5073, 0.0
  %v5112 = vsel %vm5094, %v5074, 0.0
  %v5113 = vsel %vm5095, %v5075, 0.0
  %v5114 = vsel %vm5094, %v5076, 0.0
  %v5115 = vsel %vm5095, %v5077, 0.0
  %v5116 = vsel %vm5094, %v5078, 0.0
  %v5117 = vsel %vm5095, %v5079, 0.0
  %v5118 = vsel %vm5094, %v5080, 0.0
  %v5119 = vsel %vm5095, %v5081, 0.0
  %v5120 = vsel %vm5094, %v5082, 0.0
  %v5121 = vsel %vm5095, %v5083, 0.0
  %v5122 = vsel %vm5094, %v5084, 0.0
  %v5123 = vsel %vm5095, %v5085, 0.0
  %v5124 = vsel %vm5094, %v5086, 0.0
  %v5125 = vsel %vm5095, %v5087, 0.0
  %v5126 = vsel %vm5094, %v5088, 0.0
  %v5127 = vsel %vm5095, %v5089, 0.0
  %v5128 = vsel %vm4848, %v4962, %v5096
  %v5129 = vsel %vm4849, %v4963, %v5097
  %v5130 = vsel %vm4848, %v4964, %v5098
  %v5131 = vsel %vm4849, %v4965, %v5099
  %v5132 = vsel %vm4848, %v4966, %v5100
  %v5133 = vsel %vm4849, %v4967, %v5101
  %v5134 = vsel %vm4848, %v4968, %v5102
  %v5135 = vsel %vm4849, %v4969, %v5103
  %v5136 = vsel %vm4848, %v4970, %v5104
  %v5137 = vsel %vm4849, %v4971, %v5105
  %v5138 = vsel %vm4848, %v4972, %v5106
  %v5139 = vsel %vm4849, %v4973, %v5107
  %v5140 = vsel %vm4848, %v4974, %v5108
  %v5141 = vsel %vm4849, %v4975, %v5109
  %v5142 = vsel %vm4848, %v4976, %v5110
  %v5143 = vsel %vm4849, %v4977, %v5111
  %v5144 = vsel %vm4848, %v4978, %v5112
  %v5145 = vsel %vm4849, %v4979, %v5113
  %v5146 = vsel %vm4848, %v4980, %v5114
  %v5147 = vsel %vm4849, %v4981, %v5115
  %v5148 = vsel %vm4848, %v4982, %v5116
  %v5149 = vsel %vm4849, %v4983, %v5117
  %v5150 = vsel %vm4848, %v4984, %v5118
  %v5151 = vsel %vm4849, %v4985, %v5119
  %v5152 = vsel %vm4848, %v4986, %v5120
  %v5153 = vsel %vm4849, %v4987, %v5121
  %v5154 = vsel %vm4848, %v4988, %v5122
  %v5155 = vsel %vm4849, %v4989, %v5123
  %v5156 = vsel %vm4848, %v4990, %v5124
  %v5157 = vsel %vm4849, %v4991, %v5125
  %v5158 = vsel %vm4848, %v4992, %v5126
  %v5159 = vsel %vm4849, %v4993, %v5127
  %5160 = vst [vmem:[%s25] sm:$0xff] %v5128
  %5161 = vst [vmem:[%s25 + $0x8] sm:$0xff] %v5129
  %5162 = vst [vmem:[%s25 + $0x10] sm:$0xff] %v5130
  %5163 = vst [vmem:[%s25 + $0x18] sm:$0xff] %v5131
  %5164 = vst [vmem:[%s25 + $0x20] sm:$0xff] %v5132
  %5165 = vst [vmem:[%s25 + $0x28] sm:$0xff] %v5133
  %5166 = vst [vmem:[%s25 + $0x30] sm:$0xff] %v5134
  %5167 = vst [vmem:[%s25 + $0x38] sm:$0xff] %v5135
  %5168 = vst [vmem:[%s25 + $0x40] sm:$0xff] %v5136
  %5169 = vst [vmem:[%s25 + $0x48] sm:$0xff] %v5137
  %5170 = vst [vmem:[%s25 + $0x50] sm:$0xff] %v5138
  %5171 = vst [vmem:[%s25 + $0x58] sm:$0xff] %v5139
  %5172 = vst [vmem:[%s25 + $0x60] sm:$0xff] %v5140
  %5173 = vst [vmem:[%s25 + $0x68] sm:$0xff] %v5141
  %5174 = vst [vmem:[%s25 + $0x70] sm:$0xff] %v5142
  %5175 = vst [vmem:[%s25 + $0x78] sm:$0xff] %v5143
  %5176 = vst [vmem:[%s25 + $0x80] sm:$0xff] %v5144
  %5177 = vst [vmem:[%s25 + $0x88] sm:$0xff] %v5145
  %5178 = vst [vmem:[%s25 + $0x90] sm:$0xff] %v5146
  %5179 = vst [vmem:[%s25 + $0x98] sm:$0xff] %v5147
  %5180 = vst [vmem:[%s25 + $0xa0] sm:$0xff] %v5148
  %5181 = vst [vmem:[%s25 + $0xa8] sm:$0xff] %v5149
  %5182 = vst [vmem:[%s25 + $0xb0] sm:$0xff] %v5150
  %5183 = vst [vmem:[%s25 + $0xb8] sm:$0xff] %v5151
  %5184 = vst [vmem:[%s25 + $0xc0] sm:$0xff] %v5152
  %5185 = vst [vmem:[%s25 + $0xc8] sm:$0xff] %v5153
  %5186 = vst [vmem:[%s25 + $0xd0] sm:$0xff] %v5154
  %5187 = vst [vmem:[%s25 + $0xd8] sm:$0xff] %v5155
  %5188 = vst [vmem:[%s25 + $0xe0] sm:$0xff] %v5156
  %5189 = vst [vmem:[%s25 + $0xe8] sm:$0xff] %v5157
  %5190 = vst [vmem:[%s25 + $0xf0] sm:$0xff] %v5158
  %5191 = vst [vmem:[%s25 + $0xf8] sm:$0xff] %v5159
  // Predicated region
  $region102: #{vae_forward.1} parent=0 // pred_check
    _
  $region103: #{vae_forward.1} parent=0 // pred_check_branch
    %5193 = sbr.rel (0) target = $region105
  $region104: #{vae_forward.1} parent=0 // pred_region
    _
  $region105: #{vae_forward.1} parent=0 // pred_fallthru
    _
  // Predicated region
  $region106: #{vae_forward.1} parent=0 // pred_check
    _
  $region107: #{vae_forward.1} parent=0 // pred_check_branch
    %5195 = sbr.rel (0) target = $region109
  $region108: #{vae_forward.1} parent=0 // pred_region
    _
  $region109: #{vae_forward.1} parent=0 // pred_fallthru
    _
  // Predicated region
  $region110: #{vae_forward.1} parent=0 // pred_check
    _
  $region111: #{vae_forward.1} parent=0 // pred_check_branch
    %5197 = sbr.rel (0) target = $region113
  $region112: #{vae_forward.1} parent=0 // pred_region
    _
  $region113: #{vae_forward.1} parent=0 // pred_fallthru
    _
  // Predicated region
  $region114: #{vae_forward.1} parent=0 // pred_check
    _
  $region115: #{vae_forward.1} parent=0 // pred_check_branch
    %5199 = sbr.rel (0) target = $region117
  $region116: #{vae_forward.1} parent=0 // pred_region
    _
  $region117: #{vae_forward.1} parent=0 // pred_fallthru
    _
  // Predicated region
  $region118: #{vae_forward.1} parent=0 // pred_check
    _
  $region119: #{vae_forward.1} parent=0 // pred_check_branch
    %5201 = sbr.rel (0) target = $region121
  $region120: #{vae_forward.1} parent=0 // pred_region
    _
  $region121: #{vae_forward.1} parent=0 // pred_fallthru
    _
  // Predicated region
  $region122: #{vae_forward.1} parent=0 // pred_check
    _
  $region123: #{vae_forward.1} parent=0 // pred_check_branch
    %5203 = sbr.rel (0) target = $region125
  $region124: #{vae_forward.1} parent=0 // pred_region
    _
  $region125: #{vae_forward.1} parent=0 // pred_fallthru
    _

</llo_original>
